<compile_context>
chip_gen: v5e
topology: v5e:2x2
jax: 0.10.0
libtpu: 0.0.40
codegen_flags: <defaults>
</compile_context>

<pallas_src>
import functools

import jax
import jax.numpy as jnp
from jax.experimental import pallas as pl
from jax.experimental.pallas import tpu as pltpu


# --------------------------- fused forward kernel ----------------------------

def _fused_net(kp, x, mask3):
    """x: (B,S,E) bf16 token+pos embeddings, mask3: (B,1,S) f32.
    Returns (B, 8, HP) f32; real logits live in [:, 0, :numy]."""
    B, S, E = x.shape
    N, D = kp["latents"].shape
    n_self = kp["selfs"]["wqkv"].shape[0]
    HP = kp["head_b"].shape[-1]
    dk = kp["cross"]["wq"].shape[-1]
    f32, bf16 = jnp.float32, jnp.bfloat16

    Bt = 1                                   # batch tile -> "parallel" grid axis
    assert B % Bt == 0 and n_self >= 1

    fixed = {k: kp[k] for k in ("latents", "cross", "dec", "head_w", "head_b")}
    fixed_flat, fixed_tree = jax.tree_util.tree_flatten(fixed)
    selfs_flat, selfs_tree = jax.tree_util.tree_flatten(kp["selfs"])
    nf, ns = len(fixed_flat), len(selfs_flat)

    def kernel(x_ref, m_ref, *refs):
        fx = jax.tree_util.tree_unflatten(fixed_tree, refs[:nf])
        sf = jax.tree_util.tree_unflatten(selfs_tree, refs[nf:nf + ns])
        o_ref, lat_sc = refs[nf + ns], refs[nf + ns + 1]

        Bk = x_ref.shape[0]
        stage = pl.program_id(1)
        last = pl.num_programs(1) - 1
        scale = 1.0 / float(dk) ** 0.5

        def ln(x2, g, b):                     # f32 LayerNorm on the VPU
            mu = jnp.mean(x2, axis=-1, keepdims=True)
            var = jnp.mean(jnp.square(x2 - mu), axis=-1, keepdims=True)
            return (x2 - mu) * jax.lax.rsqrt(var + 1e-5) * g + b

        def dense(x2, w, b):                  # bf16 MXU operands, f32 accumulate
            return jnp.dot(x2.astype(bf16), w, preferred_element_type=f32) + b

        def attend(q3, k3, v3, key_mask):
            # q3 is already scaled by 1/sqrt(dk).
            s = jnp.einsum("bqd,bkd->bqk", q3.astype(bf16), k3.astype(bf16),
                           preferred_element_type=f32)
            if key_mask is not None:
                # fully-masked rows degenerate to uniform attention (matches ref)
                s = jnp.where(key_mask, s, -1e30)
            s = s - jnp.max(s, axis=-1, keepdims=True)
            e = jnp.exp(s)
            pr = e * pl.reciprocal(jnp.sum(e, axis=-1, keepdims=True), approx=True)
            return jnp.einsum("bqk,bkd->bqd", pr.astype(bf16), v3.astype(bf16),
                              preferred_element_type=f32)

        def mlp_residual(x2, p):
            h = ln(x2, p["ln_m_g"], p["ln_m_b"])
            return x2 + dense(jax.nn.gelu(dense(h, p["w1"], p["b1"])),
                              p["w2"], p["b2"])

        # ----- stage 0: cross-attention block (latents attend to tokens) -----
        @pl.when(stage == 0)
        def _():
            cw = jax.tree.map(lambda r: r[...], fx["cross"])
            x2 = x_ref[...].astype(f32).reshape(Bk * S, E)   # promote before LN
            key_mask = m_ref[...] > 0.0                      # (Bk, 1, S)
            lat2 = jnp.broadcast_to(fx["latents"][...],
                                    (Bk, N, D)).reshape(Bk * N, D)
            qn = ln(lat2, cw["ln_q_g"], cw["ln_q_b"])
            kn = ln(x2, cw["ln_kv_g"], cw["ln_kv_b"])
            q3 = (dense(qn, cw["wq"], cw["bq"]) * scale).reshape(Bk, N, dk)
            kv2 = dense(kn, cw["wkv"], cw["bkv"])            # fused K|V
            k3 = kv2[:, :dk].reshape(Bk, S, dk)
            v3 = kv2[:, dk:].reshape(Bk, S, D)
            a2 = attend(q3, k3, v3, key_mask).reshape(Bk * N, D)
            lat2 = lat2 + dense(a2, cw["wo"], cw["bo"])
            lat_sc[...] = mlp_residual(lat2, cw)

        # ----- stages 1..n_self: latent self-attention (weights streamed) ----
        @pl.when(jnp.logical_and(stage > 0, stage < last))
        def _():
            bp = jax.tree.map(lambda r: r[0], sf)            # this block's weights
            lat2 = lat_sc[...]
            xn = ln(lat2, bp["ln_g"], bp["ln_b"])
            qkv = dense(xn, bp["wqkv"], bp["bqkv"])          # fused Q|K|V
            q3 = (qkv[:, :dk] * scale).reshape(Bk, N, dk)
            k3 = qkv[:, dk:2 * dk].reshape(Bk, N, dk)
            v3 = qkv[:, 2 * dk:].reshape(Bk, N, D)
            a2 = attend(q3, k3, v3, None).reshape(Bk * N, D)
            lat2 = lat2 + dense(a2, bp["wo"], bp["bo"])
            lat_sc[...] = mlp_residual(lat2, bp)

        # ----- last stage: per-token decoder + masked mean pool + head -------
        @pl.when(stage == last)
        def _():
            dw = jax.tree.map(lambda r: r[...], fx["dec"])
            x2 = x_ref[...].astype(f32).reshape(Bk * S, E)
            lat2 = lat_sc[...]
            qn = ln(x2, dw["ln_q_g"], dw["ln_q_b"])
            kn = ln(lat2, dw["ln_kv_g"], dw["ln_kv_b"])
            q3 = (dense(qn, dw["wq"], dw["bq"]) * scale).reshape(Bk, S, dk)
            kv2 = dense(kn, dw["wkv"], dw["bkv"])            # fused K|V
            k3 = kv2[:, :dk].reshape(Bk, N, dk)
            v3 = kv2[:, dk:].reshape(Bk, N, E)
            a2 = attend(q3, k3, v3, None).reshape(Bk * S, E)
            embs3 = dense(a2, dw["wo"], dw["bo"]).reshape(Bk, S, E)
            mask_row = m_ref[...].reshape(Bk, S)
            msum = jnp.maximum(jnp.sum(mask_row, axis=-1, keepdims=True), 1.0)
            pooled = jnp.sum(embs3 * mask_row.reshape(Bk, S, 1), axis=1) / msum
            logits = jnp.dot(pooled.astype(bf16), fx["head_w"][...],
                             preferred_element_type=f32) + fx["head_b"][...]
            o_ref[...] = jnp.broadcast_to(logits[:, None, :], (Bk, 8, HP))

    # ------------------------------ specs / grid ------------------------------
    def full_spec(a):      # resident weight: constant block index, DMA'd once
        return pl.BlockSpec(a.shape, lambda b, s, n=a.ndim: (0,) * n)

    def self_spec(a):      # one self-block slice per stage, auto double-buffered
        def imap(b, s, n=a.ndim):
            return (jnp.clip(s - 1, 0, n_self - 1),) + (0,) * (n - 1)
        return pl.BlockSpec((1,) + a.shape[1:], imap)

    grid = (B // Bt, n_self + 2)            # (parallel batch, arbitrary stage)

    in_specs = ([pl.BlockSpec((Bt, S, E), lambda b, s: (b, 0, 0)),
                 pl.BlockSpec((Bt, 1, S), lambda b, s: (b, 0, 0))]
                + [full_spec(a) for a in fixed_flat]
                + [self_spec(a) for a in selfs_flat])
    out_specs = pl.BlockSpec((Bt, 8, HP), lambda b, s: (b, 0, 0))

    # Advisory cost estimate (lets XLA overlap the embedding gather).
    def mm(m, k, n):
        return 2 * m * k * n
    BN, BS = Bt * N, Bt * S
    fl_cross = (mm(BN, D, dk) + mm(BS, E, dk + D) + mm(BN, dk, S) + mm(BN, S, D)
                + mm(BN, D, D) + mm(BN, D, 2 * D) + mm(BN, 2 * D, D))
    fl_self = (mm(BN, D, 2 * dk + D) + mm(BN, dk, N) + mm(BN, N, D)
               + mm(BN, D, D) + mm(BN, D, 2 * D) + mm(BN, 2 * D, D))
    fl_dec = (mm(BS, E, dk) + mm(BN, D, dk + E) + mm(BS, dk, N) + mm(BS, N, E)
              + mm(BS, E, E) + mm(Bt, E, HP))
    flops = (B // Bt) * (fl_cross + n_self * fl_self + fl_dec)
    trans = (B // Bt) * (BN * S + n_self * BN * N + BS * N
                         + (1 + n_self) * BN * 2 * D)
    bytes_acc = int(x.nbytes + mask3.nbytes + B * 8 * HP * 4
                    + sum(int(a.nbytes) for a in fixed_flat)
                    + sum(int(a.nbytes) for a in selfs_flat))

    # Per-step VMEM working set (x2 for double-buffering) + margin, clamped so
    # the same code compiles on v5e/v6e (128 MiB) and v7x (64 MiB physical).
    step_bytes = (sum(int(a.nbytes) for a in fixed_flat)
                  + sum(int(a.nbytes) // n_self for a in selfs_flat)
                  + int(x.nbytes) // (B // Bt) + int(mask3.nbytes) // (B // Bt)
                  + Bt * 8 * HP * 4 + Bt * N * D * 4)
    vmem_limit = int(min(max(4 * step_bytes + (8 << 20), 16 << 20), 48 << 20))

    return pl.pallas_call(
        kernel,
        grid=grid,
        in_specs=in_specs,
        out_specs=out_specs,
        out_shape=jax.ShapeDtypeStruct((B, 8, HP), jnp.float32),
        scratch_shapes=[pltpu.VMEM((Bt * N, D), jnp.float32)],
        compiler_params=pltpu.CompilerParams(
            dimension_semantics=("parallel", "arbitrary"),
            vmem_limit_bytes=vmem_limit),
        cost_estimate=pl.CostEstimate(flops=int(flops),
                                      transcendentals=int(trans),
                                      bytes_accessed=bytes_acc),
    )(x, mask3, *fixed_flat, *selfs_flat)


def net_forward(params, inputs, mask, *, numy):
    B, S = inputs.shape
    # Embedding gather + positional add kept in XLA; everything else is fused.
    # TODO(synk): for realistic vocab sizes keep tok_emb in HBM (pl.ANY) and
    # DMA-gather rows inside the kernel instead of an XLA gather.
    x = jnp.take(params["tok_emb"], inputs, axis=0) + params["pos_emb"][:S]
    x = x.astype(jnp.bfloat16)        # halve the dominant streamed input bytes
    mask3 = mask.astype(jnp.float32).reshape(B, 1, S)
    kp = {k: params[k] for k in ("latents", "cross", "selfs", "dec",
                                 "head_w", "head_b")}
    out = _fused_net(kp, x, mask3)
    return jnp.squeeze(out[:, 0, :numy])        # matches `out.squeeze()`


# ------------------------------ parameter prep --------------------------------

def init_params(key, *, vocab, max_seq, E, N_lat, D_lat, qk, n_self, numy):
    keys = iter(jax.random.split(key, 256))

    def dense(din, dout):
        w = jax.random.normal(next(keys), (din, dout), jnp.float32) * 0.02
        return w, jnp.zeros((dout,), jnp.float32)

    def lnp(d):
        return jnp.ones((d,), jnp.float32), jnp.zeros((d,), jnp.float32)

    def cross_block(q_dim, kv_dim, v_dim, hidden):
        p = {}
        p["ln_q_g"], p["ln_q_b"] = lnp(q_dim)
        p["ln_kv_g"], p["ln_kv_b"] = lnp(kv_dim)
        p["wq"], p["bq"] = dense(q_dim, qk)
        p["wk"], p["bk"] = dense(kv_dim, qk)
        p["wv"], p["bv"] = dense(kv_dim, v_dim)
        p["wo"], p["bo"] = dense(v_dim, q_dim)
        p["ln_m_g"], p["ln_m_b"] = lnp(q_dim)
        p["w1"], p["b1"] = dense(q_dim, hidden)
        p["w2"], p["b2"] = dense(hidden, q_dim)
        return p

    def self_block(d, hidden):
        p = {}
        p["ln_g"], p["ln_b"] = lnp(d)            # single qkv LayerNorm
        p["wq"], p["bq"] = dense(d, qk)
        p["wk"], p["bk"] = dense(d, qk)
        p["wv"], p["bv"] = dense(d, d)
        p["wo"], p["bo"] = dense(d, d)
        p["ln_m_g"], p["ln_m_b"] = lnp(d)
        p["w1"], p["b1"] = dense(d, hidden)
        p["w2"], p["b2"] = dense(hidden, d)
        return p

    params = {
        "tok_emb": jax.random.normal(next(keys), (vocab, E), jnp.float32) * 0.02,
        "pos_emb": jax.random.normal(next(keys), (max_seq, E), jnp.float32) * 0.02,
        "latents": jax.random.normal(next(keys), (N_lat, D_lat), jnp.float32) * 0.02,
        "cross": cross_block(D_lat, E, D_lat, 2 * D_lat),
        "self_blocks": [self_block(D_lat, 2 * D_lat) for _ in range(n_self)],
    }
    dec = {}
    dec["ln_q_g"], dec["ln_q_b"] = lnp(E)
    dec["ln_kv_g"], dec["ln_kv_b"] = lnp(D_lat)
    dec["wq"], dec["bq"] = dense(E, qk)
    dec["wk"], dec["bk"] = dense(D_lat, qk)
    dec["wv"], dec["bv"] = dense(D_lat, E)
    dec["wo"], dec["bo"] = dense(E, E)
    params["dec"] = dec
    params["head_w"], params["head_b"] = dense(E, numy)
    return params


def pack_params(raw, *, head_pad=128):
    """Kernel-ready layout: dense weights -> bf16 (MXU operands); K|V (and
    self-block Q|K|V) projections fused; biases/LN vectors -> (1,N) f32; self
    blocks stacked along a leading axis (streamed one-per-grid-step); head
    weight zero-padded to a lane-dense 128-wide output."""
    bf16, f32 = jnp.bfloat16, jnp.float32

    def w(a):
        return a.astype(bf16)

    def vrow(a):
        return a.reshape(1, -1).astype(f32)

    def pack_crossish(p, with_mlp):
        out = {
            "ln_q_g": vrow(p["ln_q_g"]), "ln_q_b": vrow(p["ln_q_b"]),
            "ln_kv_g": vrow(p["ln_kv_g"]), "ln_kv_b": vrow(p["ln_kv_b"]),
            "wq": w(p["wq"]), "bq": vrow(p["bq"]),
            "wkv": w(jnp.concatenate([p["wk"], p["wv"]], axis=1)),
            "bkv": vrow(jnp.concatenate([p["bk"], p["bv"]], axis=0)),
            "wo": w(p["wo"]), "bo": vrow(p["bo"]),
        }
        if with_mlp:
            out.update({"ln_m_g": vrow(p["ln_m_g"]), "ln_m_b": vrow(p["ln_m_b"]),
                        "w1": w(p["w1"]), "b1": vrow(p["b1"]),
                        "w2": w(p["w2"]), "b2": vrow(p["b2"])})
        return out

    def pack_self(p):
        return {
            "ln_g": vrow(p["ln_g"]), "ln_b": vrow(p["ln_b"]),
            "wqkv": w(jnp.concatenate([p["wq"], p["wk"], p["wv"]], axis=1)),
            "bqkv": vrow(jnp.concatenate([p["bq"], p["bk"], p["bv"]], axis=0)),
            "wo": w(p["wo"]), "bo": vrow(p["bo"]),
            "ln_m_g": vrow(p["ln_m_g"]), "ln_m_b": vrow(p["ln_m_b"]),
            "w1": w(p["w1"]), "b1": vrow(p["b1"]),
            "w2": w(p["w2"]), "b2": vrow(p["b2"]),
        }

    selfs = jax.tree.map(lambda *xs: jnp.stack(xs, axis=0),
                         *[pack_self(b) for b in raw["self_blocks"]])

    E, numy = raw["head_w"].shape
    hp = max(head_pad, numy)
    head_w = (jnp.zeros((E, hp), f32).at[:, :numy].set(raw["head_w"])
              .astype(bf16))
    head_b = jnp.zeros((1, hp), f32).at[:, :numy].set(raw["head_b"])

    return {
        "tok_emb": raw["tok_emb"].astype(f32),
        "pos_emb": raw["pos_emb"].astype(f32),
        "latents": raw["latents"].astype(f32),
        "cross": pack_crossish(raw["cross"], with_mlp=True),
        "selfs": selfs,
        "dec": pack_crossish(raw["dec"], with_mlp=False),
        "head_w": head_w,
        "head_b": head_b,
    }


# --------------------------- pure-JAX reference -------------------------------

def _ref_forward(raw, inputs, mask):
    S = inputs.shape[1]
    x = jnp.take(raw["tok_emb"], inputs, axis=0) + raw["pos_emb"][:S]
    B = x.shape[0]

    def ln(a, g, b):
        mu = a.mean(-1, keepdims=True)
        v = jnp.square(a - mu).mean(-1, keepdims=True)
        return (a - mu) * jax.lax.rsqrt(v + 1e-5) * g + b

    def attn(q, k, v, m):
        s = jnp.einsum("bqd,bkd->bqk", q, k) / jnp.sqrt(q.shape[-1] * 1.0)
        if m is not None:
            s = jnp.where(m > 0, s, -1e30)
        return jnp.einsum("bqk,bkd->bqd", jax.nn.softmax(s, axis=-1), v)

    def mlp(x2, p):
        h = ln(x2, p["ln_m_g"], p["ln_m_b"])
        return x2 + jax.nn.gelu(h @ p["w1"] + p["b1"]) @ p["w2"] + p["b2"]

    lat = jnp.broadcast_to(raw["latents"], (B,) + raw["latents"].shape)
    c = raw["cross"]
    qn = ln(lat, c["ln_q_g"], c["ln_q_b"])
    kn = ln(x, c["ln_kv_g"], c["ln_kv_b"])
    q = qn @ c["wq"] + c["bq"]
    k = kn @ c["wk"] + c["bk"]
    v = kn @ c["wv"] + c["bv"]
    lat = lat + attn(q, k, v, mask[:, None, :]) @ c["wo"] + c["bo"]
    lat = mlp(lat, c)

    for p in raw["self_blocks"]:
        xn = ln(lat, p["ln_g"], p["ln_b"])
        q = xn @ p["wq"] + p["bq"]
        k = xn @ p["wk"] + p["bk"]
        v = xn @ p["wv"] + p["bv"]
        lat = lat + attn(q, k, v, None) @ p["wo"] + p["bo"]
        lat = mlp(lat, p)

    d = raw["dec"]
    qn = ln(x, d["ln_q_g"], d["ln_q_b"])
    kn = ln(lat, d["ln_kv_g"], d["ln_kv_b"])
    q = qn @ d["wq"] + d["bq"]
    k = kn @ d["wk"] + d["bk"]
    v = kn @ d["wv"] + d["bv"]
    embs = attn(q, k, v, None) @ d["wo"] + d["bo"]
    msum = jnp.maximum(mask.sum(-1, keepdims=True), 1.0)
    pooled = (embs * mask[:, :, None]).sum(1) / msum
    return jnp.squeeze(pooled @ raw["head_w"] + raw["head_b"])


# ---------------------------------- main --------------------------------------

if __name__ == "__main__":
    B, S = 2, 8
    VOCAB, MAX_SEQ = 100, 16
    E, N_LAT, D_LAT, QK = 32, 8, 64, 16
    N_SELF, NUMY = 2, 2

    key = jax.random.PRNGKey(0)
    k_par, k_tok = jax.random.split(key)

    raw = init_params(k_par, vocab=VOCAB, max_seq=MAX_SEQ, E=E, N_lat=N_LAT,
                      D_lat=D_LAT, qk=QK, n_self=N_SELF, numy=NUMY)
    params = pack_params(raw)

    inputs = jax.random.randint(k_tok, (B, S), 0, VOCAB, dtype=jnp.int32)
    lengths = jnp.array([S, 5], dtype=jnp.int32)
    mask = (jnp.arange(S)[None, :] < lengths[:, None]).astype(jnp.float32)

    fwd = jax.jit(functools.partial(net_forward, params, numy=NUMY))
    out = fwd(inputs, mask)
    jax.block_until_ready(out)

    ref = _ref_forward(raw, inputs, mask)
    assert out.shape == (B, NUMY), out.shape
    assert bool(jnp.all(jnp.isfinite(out)))
    err = float(jnp.max(jnp.abs(out - ref)))
    assert err < 5e-2, err
    print("KERNEL_OK")
</pallas_src>

<mosaic_0001>
module attributes {stable_mosaic.version = 11 : i64} {
  func.func @kernel(%arg0: i32, %arg1: i32, %arg2: memref<1x8x32xbf16, #tpu.memory_space<vmem>>, %arg3: memref<1x1x8xf32, #tpu.memory_space<vmem>>, %arg4: memref<1x128xf32, #tpu.memory_space<vmem>>, %arg5: memref<1x64xf32, #tpu.memory_space<vmem>>, %arg6: memref<1x80xf32, #tpu.memory_space<vmem>>, %arg7: memref<1x64xf32, #tpu.memory_space<vmem>>, %arg8: memref<1x16xf32, #tpu.memory_space<vmem>>, %arg9: memref<1x32xf32, #tpu.memory_space<vmem>>, %arg10: memref<1x32xf32, #tpu.memory_space<vmem>>, %arg11: memref<1x64xf32, #tpu.memory_space<vmem>>, %arg12: memref<1x64xf32, #tpu.memory_space<vmem>>, %arg13: memref<1x64xf32, #tpu.memory_space<vmem>>, %arg14: memref<1x64xf32, #tpu.memory_space<vmem>>, %arg15: memref<64x128xbf16, #tpu.memory_space<vmem>>, %arg16: memref<128x64xbf16, #tpu.memory_space<vmem>>, %arg17: memref<32x80xbf16, #tpu.memory_space<vmem>>, %arg18: memref<64x64xbf16, #tpu.memory_space<vmem>>, %arg19: memref<64x16xbf16, #tpu.memory_space<vmem>>, %arg20: memref<1x48xf32, #tpu.memory_space<vmem>>, %arg21: memref<1x32xf32, #tpu.memory_space<vmem>>, %arg22: memref<1x16xf32, #tpu.memory_space<vmem>>, %arg23: memref<1x64xf32, #tpu.memory_space<vmem>>, %arg24: memref<1x64xf32, #tpu.memory_space<vmem>>, %arg25: memref<1x32xf32, #tpu.memory_space<vmem>>, %arg26: memref<1x32xf32, #tpu.memory_space<vmem>>, %arg27: memref<64x48xbf16, #tpu.memory_space<vmem>>, %arg28: memref<32x32xbf16, #tpu.memory_space<vmem>>, %arg29: memref<32x16xbf16, #tpu.memory_space<vmem>>, %arg30: memref<1x128xf32, #tpu.memory_space<vmem>>, %arg31: memref<32x128xbf16, #tpu.memory_space<vmem>>, %arg32: memref<8x64xf32, #tpu.memory_space<vmem>>, %arg33: memref<1x1x128xf32, #tpu.memory_space<vmem>>, %arg34: memref<1x1x64xf32, #tpu.memory_space<vmem>>, %arg35: memref<1x1x64xf32, #tpu.memory_space<vmem>>, %arg36: memref<1x1x96xf32, #tpu.memory_space<vmem>>, %arg37: memref<1x1x64xf32, #tpu.memory_space<vmem>>, %arg38: memref<1x1x64xf32, #tpu.memory_space<vmem>>, %arg39: memref<1x1x64xf32, #tpu.memory_space<vmem>>, %arg40: memref<1x1x64xf32, #tpu.memory_space<vmem>>, %arg41: memref<1x64x128xbf16, #tpu.memory_space<vmem>>, %arg42: memref<1x128x64xbf16, #tpu.memory_space<vmem>>, %arg43: memref<1x64x64xbf16, #tpu.memory_space<vmem>>, %arg44: memref<1x64x96xbf16, #tpu.memory_space<vmem>>, %arg45: memref<1x8x128xf32, #tpu.memory_space<vmem>>, %arg46: memref<8x64xf32, #tpu.memory_space<vmem>>) attributes {dimension_semantics = [#tpu.dimension_semantics<parallel>, #tpu.dimension_semantics<arbitrary>], iteration_bounds = array<i64: 2, 4>, scalar_prefetch = 0 : i64, scratch_operands = 1 : i64, tpu.core_type = #tpu.core_type<tc>, window_params = [{transform_indices = @transform_0, window_bounds = array<i64: 1, 8, 32>}, {transform_indices = @transform_1, window_bounds = array<i64: 1, 1, 8>}, {pipeline_mode = #tpu.pipeline_mode<synchronous>, transform_indices = @transform_2, window_bounds = array<i64: 1, 128>}, {pipeline_mode = #tpu.pipeline_mode<synchronous>, transform_indices = @transform_3, window_bounds = array<i64: 1, 64>}, {pipeline_mode = #tpu.pipeline_mode<synchronous>, transform_indices = @transform_4, window_bounds = array<i64: 1, 80>}, {pipeline_mode = #tpu.pipeline_mode<synchronous>, transform_indices = @transform_5, window_bounds = array<i64: 1, 64>}, {pipeline_mode = #tpu.pipeline_mode<synchronous>, transform_indices = @transform_6, window_bounds = array<i64: 1, 16>}, {pipeline_mode = #tpu.pipeline_mode<synchronous>, transform_indices = @transform_7, window_bounds = array<i64: 1, 32>}, {pipeline_mode = #tpu.pipeline_mode<synchronous>, transform_indices = @transform_8, window_bounds = array<i64: 1, 32>}, {pipeline_mode = #tpu.pipeline_mode<synchronous>, transform_indices = @transform_9, window_bounds = array<i64: 1, 64>}, {pipeline_mode = #tpu.pipeline_mode<synchronous>, transform_indices = @transform_10, window_bounds = array<i64: 1, 64>}, {pipeline_mode = #tpu.pipeline_mode<synchronous>, transform_indices = @transform_11, window_bounds = array<i64: 1, 64>}, {pipeline_mode = #tpu.pipeline_mode<synchronous>, transform_indices = @transform_12, window_bounds = array<i64: 1, 64>}, {pipeline_mode = #tpu.pipeline_mode<synchronous>, transform_indices = @transform_13, window_bounds = array<i64: 64, 128>}, {pipeline_mode = #tpu.pipeline_mode<synchronous>, transform_indices = @transform_14, window_bounds = array<i64: 128, 64>}, {pipeline_mode = #tpu.pipeline_mode<synchronous>, transform_indices = @transform_15, window_bounds = array<i64: 32, 80>}, {pipeline_mode = #tpu.pipeline_mode<synchronous>, transform_indices = @transform_16, window_bounds = array<i64: 64, 64>}, {pipeline_mode = #tpu.pipeline_mode<synchronous>, transform_indices = @transform_17, window_bounds = array<i64: 64, 16>}, {pipeline_mode = #tpu.pipeline_mode<synchronous>, transform_indices = @transform_18, window_bounds = array<i64: 1, 48>}, {pipeline_mode = #tpu.pipeline_mode<synchronous>, transform_indices = @transform_19, window_bounds = array<i64: 1, 32>}, {pipeline_mode = #tpu.pipeline_mode<synchronous>, transform_indices = @transform_20, window_bounds = array<i64: 1, 16>}, {pipeline_mode = #tpu.pipeline_mode<synchronous>, transform_indices = @transform_21, window_bounds = array<i64: 1, 64>}, {pipeline_mode = #tpu.pipeline_mode<synchronous>, transform_indices = @transform_22, window_bounds = array<i64: 1, 64>}, {pipeline_mode = #tpu.pipeline_mode<synchronous>, transform_indices = @transform_23, window_bounds = array<i64: 1, 32>}, {pipeline_mode = #tpu.pipeline_mode<synchronous>, transform_indices = @transform_24, window_bounds = array<i64: 1, 32>}, {pipeline_mode = #tpu.pipeline_mode<synchronous>, transform_indices = @transform_25, window_bounds = array<i64: 64, 48>}, {pipeline_mode = #tpu.pipeline_mode<synchronous>, transform_indices = @transform_26, window_bounds = array<i64: 32, 32>}, {pipeline_mode = #tpu.pipeline_mode<synchronous>, transform_indices = @transform_27, window_bounds = array<i64: 32, 16>}, {pipeline_mode = #tpu.pipeline_mode<synchronous>, transform_indices = @transform_28, window_bounds = array<i64: 1, 128>}, {pipeline_mode = #tpu.pipeline_mode<synchronous>, transform_indices = @transform_29, window_bounds = array<i64: 32, 128>}, {pipeline_mode = #tpu.pipeline_mode<synchronous>, transform_indices = @transform_30, window_bounds = array<i64: 8, 64>}, {transform_indices = @transform_31, window_bounds = array<i64: 1, 1, 128>}, {transform_indices = @transform_32, window_bounds = array<i64: 1, 1, 64>}, {transform_indices = @transform_33, window_bounds = array<i64: 1, 1, 64>}, {transform_indices = @transform_34, window_bounds = array<i64: 1, 1, 96>}, {transform_indices = @transform_35, window_bounds = array<i64: 1, 1, 64>}, {transform_indices = @transform_36, window_bounds = array<i64: 1, 1, 64>}, {transform_indices = @transform_37, window_bounds = array<i64: 1, 1, 64>}, {transform_indices = @transform_38, window_bounds = array<i64: 1, 1, 64>}, {transform_indices = @transform_39, window_bounds = array<i64: 1, 64, 128>}, {transform_indices = @transform_40, window_bounds = array<i64: 1, 128, 64>}, {transform_indices = @transform_41, window_bounds = array<i64: 1, 64, 64>}, {transform_indices = @transform_42, window_bounds = array<i64: 1, 64, 96>}, {transform_indices = @transform_43, window_bounds = array<i64: 1, 8, 128>}]} {
    %c0_i32 = arith.constant 0 : i32
    %0 = arith.cmpi eq, %arg1, %c0_i32 : i32
    %1 = arith.extui %0 : i1 to i32
    %c0_i32_0 = arith.constant 0 : i32
    %2 = arith.cmpi ne, %1, %c0_i32_0 : i32
    scf.if %2 {
      %c0 = arith.constant 0 : index
      %c0_5 = arith.constant 0 : index
      %11 = vector.load %arg4[%c0, %c0_5] : memref<1x128xf32, #tpu.memory_space<vmem>>, vector<1x128xf32>
      %c0_6 = arith.constant 0 : index
      %c0_7 = arith.constant 0 : index
      %12 = vector.load %arg5[%c0_6, %c0_7] : memref<1x64xf32, #tpu.memory_space<vmem>>, vector<1x64xf32>
      %c0_8 = arith.constant 0 : index
      %c0_9 = arith.constant 0 : index
      %13 = vector.load %arg6[%c0_8, %c0_9] : memref<1x80xf32, #tpu.memory_space<vmem>>, vector<1x80xf32>
      %c0_10 = arith.constant 0 : index
      %c0_11 = arith.constant 0 : index
      %14 = vector.load %arg7[%c0_10, %c0_11] : memref<1x64xf32, #tpu.memory_space<vmem>>, vector<1x64xf32>
      %c0_12 = arith.constant 0 : index
      %c0_13 = arith.constant 0 : index
      %15 = vector.load %arg8[%c0_12, %c0_13] : memref<1x16xf32, #tpu.memory_space<vmem>>, vector<1x16xf32>
      %c0_14 = arith.constant 0 : index
      %c0_15 = arith.constant 0 : index
      %16 = vector.load %arg9[%c0_14, %c0_15] : memref<1x32xf32, #tpu.memory_space<vmem>>, vector<1x32xf32>
      %c0_16 = arith.constant 0 : index
      %c0_17 = arith.constant 0 : index
      %17 = vector.load %arg10[%c0_16, %c0_17] : memref<1x32xf32, #tpu.memory_space<vmem>>, vector<1x32xf32>
      %c0_18 = arith.constant 0 : index
      %c0_19 = arith.constant 0 : index
      %18 = vector.load %arg11[%c0_18, %c0_19] : memref<1x64xf32, #tpu.memory_space<vmem>>, vector<1x64xf32>
      %c0_20 = arith.constant 0 : index
      %c0_21 = arith.constant 0 : index
      %19 = vector.load %arg12[%c0_20, %c0_21] : memref<1x64xf32, #tpu.memory_space<vmem>>, vector<1x64xf32>
      %c0_22 = arith.constant 0 : index
      %c0_23 = arith.constant 0 : index
      %20 = vector.load %arg13[%c0_22, %c0_23] : memref<1x64xf32, #tpu.memory_space<vmem>>, vector<1x64xf32>
      %c0_24 = arith.constant 0 : index
      %c0_25 = arith.constant 0 : index
      %21 = vector.load %arg14[%c0_24, %c0_25] : memref<1x64xf32, #tpu.memory_space<vmem>>, vector<1x64xf32>
      %c0_26 = arith.constant 0 : index
      %c0_27 = arith.constant 0 : index
      %22 = vector.load %arg15[%c0_26, %c0_27] : memref<64x128xbf16, #tpu.memory_space<vmem>>, vector<64x128xbf16>
      %c0_28 = arith.constant 0 : index
      %c0_29 = arith.constant 0 : index
      %23 = vector.load %arg16[%c0_28, %c0_29] : memref<128x64xbf16, #tpu.memory_space<vmem>>, vector<128x64xbf16>
      %c0_30 = arith.constant 0 : index
      %c0_31 = arith.constant 0 : index
      %24 = vector.load %arg17[%c0_30, %c0_31] : memref<32x80xbf16, #tpu.memory_space<vmem>>, vector<32x80xbf16>
      %c0_32 = arith.constant 0 : index
      %c0_33 = arith.constant 0 : index
      %25 = vector.load %arg18[%c0_32, %c0_33] : memref<64x64xbf16, #tpu.memory_space<vmem>>, vector<64x64xbf16>
      %c0_34 = arith.constant 0 : index
      %c0_35 = arith.constant 0 : index
      %26 = vector.load %arg19[%c0_34, %c0_35] : memref<64x16xbf16, #tpu.memory_space<vmem>>, vector<64x16xbf16>
      %c0_36 = arith.constant 0 : index
      %c0_37 = arith.constant 0 : index
      %c0_38 = arith.constant 0 : index
      %27 = vector.load %arg2[%c0_36, %c0_37, %c0_38] : memref<1x8x32xbf16, #tpu.memory_space<vmem>>, vector<1x8x32xbf16>
      %28 = arith.extf %27 : vector<1x8x32xbf16> to vector<1x8x32xf32>
      %29 = vector.shape_cast %28 : vector<1x8x32xf32> to vector<8x32xf32>
      %c0_39 = arith.constant 0 : index
      %c0_40 = arith.constant 0 : index
      %c0_41 = arith.constant 0 : index
      %30 = vector.load %arg3[%c0_39, %c0_40, %c0_41] : memref<1x1x8xf32, #tpu.memory_space<vmem>>, vector<1x1x8xf32>
      %cst = arith.constant 0.000000e+00 : f32
      %31 = vector.broadcast %cst : f32 to vector<1x1x8xf32>
      %32 = arith.cmpf ogt, %30, %31 : vector<1x1x8xf32>
      %c0_42 = arith.constant 0 : index
      %c0_43 = arith.constant 0 : index
      %33 = vector.load %arg32[%c0_42, %c0_43] : memref<8x64xf32, #tpu.memory_space<vmem>>, vector<8x64xf32>
      %34 = vector.shape_cast %33 : vector<8x64xf32> to vector<1x8x64xf32>
      %35 = vector.shape_cast %34 : vector<1x8x64xf32> to vector<8x64xf32>
      %cst_44 = arith.constant dense<0.000000e+00> : vector<8xf32>
      %36 = vector.multi_reduction <add>, %35, %cst_44 [1] : vector<8x64xf32> to vector<8xf32>
      %37 = vector.shape_cast %36 : vector<8xf32> to vector<8x1xf32>
      %cst_45 = arith.constant 6.400000e+01 : f32
      %38 = vector.broadcast %cst_45 : f32 to vector<8x1xf32>
      %39 = arith.divf %37, %38 : vector<8x1xf32>
      %40 = vector.broadcast %39 : vector<8x1xf32> to vector<8x64xf32>
      %41 = arith.subf %35, %40 : vector<8x64xf32>
      %42 = arith.mulf %41, %41 : vector<8x64xf32>
      %cst_46 = arith.constant dense<0.000000e+00> : vector<8xf32>
      %43 = vector.multi_reduction <add>, %42, %cst_46 [1] : vector<8x64xf32> to vector<8xf32>
      %44 = vector.shape_cast %43 : vector<8xf32> to vector<8x1xf32>
      %cst_47 = arith.constant 6.400000e+01 : f32
      %45 = vector.broadcast %cst_47 : f32 to vector<8x1xf32>
      %46 = arith.divf %44, %45 : vector<8x1xf32>
      %47 = vector.broadcast %39 : vector<8x1xf32> to vector<8x64xf32>
      %48 = arith.subf %35, %47 : vector<8x64xf32>
      %cst_48 = arith.constant 9.99999974E-6 : f32
      %49 = vector.broadcast %cst_48 : f32 to vector<8x1xf32>
      %50 = arith.addf %46, %49 : vector<8x1xf32>
      %51 = math.rsqrt %50 : vector<8x1xf32>
      %52 = vector.broadcast %51 : vector<8x1xf32> to vector<8x64xf32>
      %53 = arith.mulf %48, %52 : vector<8x64xf32>
      %54 = vector.broadcast %21 : vector<1x64xf32> to vector<8x64xf32>
      %55 = arith.mulf %53, %54 : vector<8x64xf32>
      %56 = vector.broadcast %20 : vector<1x64xf32> to vector<8x64xf32>
      %57 = arith.addf %55, %56 : vector<8x64xf32>
      %cst_49 = arith.constant dense<0.000000e+00> : vector<8xf32>
      %58 = vector.multi_reduction <add>, %29, %cst_49 [1] : vector<8x32xf32> to vector<8xf32>
      %59 = vector.shape_cast %58 : vector<8xf32> to vector<8x1xf32>
      %cst_50 = arith.constant 3.200000e+01 : f32
      %60 = vector.broadcast %cst_50 : f32 to vector<8x1xf32>
      %61 = arith.divf %59, %60 : vector<8x1xf32>
      %62 = vector.broadcast %61 : vector<8x1xf32> to vector<8x32xf32>
      %63 = arith.subf %29, %62 : vector<8x32xf32>
      %64 = arith.mulf %63, %63 : vector<8x32xf32>
      %cst_51 = arith.constant dense<0.000000e+00> : vector<8xf32>
      %65 = vector.multi_reduction <add>, %64, %cst_51 [1] : vector<8x32xf32> to vector<8xf32>
      %66 = vector.shape_cast %65 : vector<8xf32> to vector<8x1xf32>
      %cst_52 = arith.constant 3.200000e+01 : f32
      %67 = vector.broadcast %cst_52 : f32 to vector<8x1xf32>
      %68 = arith.divf %66, %67 : vector<8x1xf32>
      %69 = vector.broadcast %61 : vector<8x1xf32> to vector<8x32xf32>
      %70 = arith.subf %29, %69 : vector<8x32xf32>
      %cst_53 = arith.constant 9.99999974E-6 : f32
      %71 = vector.broadcast %cst_53 : f32 to vector<8x1xf32>
      %72 = arith.addf %68, %71 : vector<8x1xf32>
      %73 = math.rsqrt %72 : vector<8x1xf32>
      %74 = vector.broadcast %73 : vector<8x1xf32> to vector<8x32xf32>
      %75 = arith.mulf %70, %74 : vector<8x32xf32>
      %76 = vector.broadcast %17 : vector<1x32xf32> to vector<8x32xf32>
      %77 = arith.mulf %75, %76 : vector<8x32xf32>
      %78 = vector.broadcast %16 : vector<1x32xf32> to vector<8x32xf32>
      %79 = arith.addf %77, %78 : vector<8x32xf32>
      %80 = arith.truncf %57 : vector<8x64xf32> to vector<8x64xbf16>
      %cst_54 = arith.constant dense<0.000000e+00> : vector<8x16xf32>
      %81 = tpu.matmul %80, %26, %cst_54 {dimension_numbers = #tpu.dot_dimension_numbers<[1], [0], [0], [1], [0, 0, 1, 1], [], []>} : vector<8x64xbf16>, vector<64x16xbf16>, vector<8x16xf32> -> vector<8x16xf32>
      %82 = vector.broadcast %15 : vector<1x16xf32> to vector<8x16xf32>
      %83 = arith.addf %81, %82 : vector<8x16xf32>
      %cst_55 = arith.constant 2.500000e-01 : f32
      %84 = vector.broadcast %cst_55 : f32 to vector<8x16xf32>
      %85 = arith.mulf %83, %84 : vector<8x16xf32>
      %86 = vector.shape_cast %85 : vector<8x16xf32> to vector<1x8x16xf32>
      %87 = arith.truncf %79 : vector<8x32xf32> to vector<8x32xbf16>
      %cst_56 = arith.constant dense<0.000000e+00> : vector<8x80xf32>
      %88 = tpu.matmul %87, %24, %cst_56 {dimension_numbers = #tpu.dot_dimension_numbers<[1], [0], [0], [1], [0, 0, 1, 1], [], []>} : vector<8x32xbf16>, vector<32x80xbf16>, vector<8x80xf32> -> vector<8x80xf32>
      %89 = vector.broadcast %13 : vector<1x80xf32> to vector<8x80xf32>
      %90 = arith.addf %88, %89 : vector<8x80xf32>
      %91 = vector.extract_strided_slice %90 {offsets = [0, 0], sizes = [8, 16], strides = [1, 1]} : vector<8x80xf32> to vector<8x16xf32>
      %92 = vector.shape_cast %91 : vector<8x16xf32> to vector<1x8x16xf32>
      %93 = vector.extract_strided_slice %90 {offsets = [0, 16], sizes = [8, 64], strides = [1, 1]} : vector<8x80xf32> to vector<8x64xf32>
      %94 = vector.shape_cast %93 : vector<8x64xf32> to vector<1x8x64xf32>
      %95 = arith.truncf %86 : vector<1x8x16xf32> to vector<1x8x16xbf16>
      %96 = arith.truncf %92 : vector<1x8x16xf32> to vector<1x8x16xbf16>
      "tpu.trace_start"() <{level = 10 : i32, message = "bqd,bkd->bqk"}> : () -> ()
      %cst_57 = arith.constant dense<0.000000e+00> : vector<1x8x8xf32>
      %97 = tpu.matmul %95, %96, %cst_57 {dimension_numbers = #tpu.dot_dimension_numbers<[2], [2], [1], [1], [0, 0, 0, 1, 1, 1], [0], [0]>} : vector<1x8x16xbf16>, vector<1x8x16xbf16>, vector<1x8x8xf32> -> vector<1x8x8xf32>
      %cst_58 = arith.constant -1.000000e+30 : f32
      "tpu.trace_stop"() : () -> ()
      %98 = vector.shape_cast %32 : vector<1x1x8xi1> to vector<1x1x8xi1>
      %99 = vector.broadcast %98 : vector<1x1x8xi1> to vector<1x8x8xi1>
      %100 = vector.broadcast %cst_58 : f32 to vector<1x8x8xf32>
      %101 = arith.select %99, %97, %100 : vector<1x8x8xi1>, vector<1x8x8xf32>
      %cst_59 = arith.constant dense<0xFF800000> : vector<1x8xf32>
      %102 = vector.multi_reduction <maximumf>, %101, %cst_59 [2] : vector<1x8x8xf32> to vector<1x8xf32>
      %103 = vector.shape_cast %102 : vector<1x8xf32> to vector<1x8x1xf32>
      %104 = vector.broadcast %103 : vector<1x8x1xf32> to vector<1x8x8xf32>
      %105 = arith.subf %101, %104 : vector<1x8x8xf32>
      %106 = math.exp %105 : vector<1x8x8xf32>
      %cst_60 = arith.constant dense<0.000000e+00> : vector<1x8xf32>
      %107 = vector.multi_reduction <add>, %106, %cst_60 [2] : vector<1x8x8xf32> to vector<1x8xf32>
      %108 = vector.shape_cast %107 : vector<1x8xf32> to vector<1x8x1xf32>
      %109 = tpu.reciprocal %108 {approx = true} : vector<1x8x1xf32> -> vector<1x8x1xf32>
      %110 = vector.broadcast %109 : vector<1x8x1xf32> to vector<1x8x8xf32>
      %111 = arith.mulf %106, %110 : vector<1x8x8xf32>
      %112 = arith.truncf %111 : vector<1x8x8xf32> to vector<1x8x8xbf16>
      %113 = arith.truncf %94 : vector<1x8x64xf32> to vector<1x8x64xbf16>
      "tpu.trace_start"() <{level = 10 : i32, message = "bqk,bkd->bqd"}> : () -> ()
      %cst_61 = arith.constant dense<0.000000e+00> : vector<1x8x64xf32>
      %114 = tpu.matmul %112, %113, %cst_61 {dimension_numbers = #tpu.dot_dimension_numbers<[2], [1], [1], [2], [0, 0, 0, 1, 1, 2], [0], [0]>} : vector<1x8x8xbf16>, vector<1x8x64xbf16>, vector<1x8x64xf32> -> vector<1x8x64xf32>
      "tpu.trace_stop"() : () -> ()
      %115 = vector.shape_cast %114 : vector<1x8x64xf32> to vector<8x64xf32>
      %116 = arith.truncf %115 : vector<8x64xf32> to vector<8x64xbf16>
      %cst_62 = arith.constant dense<0.000000e+00> : vector<8x64xf32>
      %117 = tpu.matmul %116, %25, %cst_62 {dimension_numbers = #tpu.dot_dimension_numbers<[1], [0], [0], [1], [0, 0, 1, 1], [], []>} : vector<8x64xbf16>, vector<64x64xbf16>, vector<8x64xf32> -> vector<8x64xf32>
      %118 = vector.broadcast %14 : vector<1x64xf32> to vector<8x64xf32>
      %119 = arith.addf %117, %118 : vector<8x64xf32>
      %120 = arith.addf %35, %119 : vector<8x64xf32>
      %cst_63 = arith.constant dense<0.000000e+00> : vector<8xf32>
      %121 = vector.multi_reduction <add>, %120, %cst_63 [1] : vector<8x64xf32> to vector<8xf32>
      %122 = vector.shape_cast %121 : vector<8xf32> to vector<8x1xf32>
      %cst_64 = arith.constant 6.400000e+01 : f32
      %123 = vector.broadcast %cst_64 : f32 to vector<8x1xf32>
      %124 = arith.divf %122, %123 : vector<8x1xf32>
      %125 = vector.broadcast %124 : vector<8x1xf32> to vector<8x64xf32>
      %126 = arith.subf %120, %125 : vector<8x64xf32>
      %127 = arith.mulf %126, %126 : vector<8x64xf32>
      %cst_65 = arith.constant dense<0.000000e+00> : vector<8xf32>
      %128 = vector.multi_reduction <add>, %127, %cst_65 [1] : vector<8x64xf32> to vector<8xf32>
      %129 = vector.shape_cast %128 : vector<8xf32> to vector<8x1xf32>
      %cst_66 = arith.constant 6.400000e+01 : f32
      %130 = vector.broadcast %cst_66 : f32 to vector<8x1xf32>
      %131 = arith.divf %129, %130 : vector<8x1xf32>
      %132 = vector.broadcast %124 : vector<8x1xf32> to vector<8x64xf32>
      %133 = arith.subf %120, %132 : vector<8x64xf32>
      %cst_67 = arith.constant 9.99999974E-6 : f32
      %134 = vector.broadcast %cst_67 : f32 to vector<8x1xf32>
      %135 = arith.addf %131, %134 : vector<8x1xf32>
      %136 = math.rsqrt %135 : vector<8x1xf32>
      %137 = vector.broadcast %136 : vector<8x1xf32> to vector<8x64xf32>
      %138 = arith.mulf %133, %137 : vector<8x64xf32>
      %139 = vector.broadcast %19 : vector<1x64xf32> to vector<8x64xf32>
      %140 = arith.mulf %138, %139 : vector<8x64xf32>
      %141 = vector.broadcast %18 : vector<1x64xf32> to vector<8x64xf32>
      %142 = arith.addf %140, %141 : vector<8x64xf32>
      %143 = arith.truncf %142 : vector<8x64xf32> to vector<8x64xbf16>
      %cst_68 = arith.constant dense<0.000000e+00> : vector<8x128xf32>
      %144 = tpu.matmul %143, %22, %cst_68 {dimension_numbers = #tpu.dot_dimension_numbers<[1], [0], [0], [1], [0, 0, 1, 1], [], []>} : vector<8x64xbf16>, vector<64x128xbf16>, vector<8x128xf32> -> vector<8x128xf32>
      %145 = vector.broadcast %11 : vector<1x128xf32> to vector<8x128xf32>
      %146 = arith.addf %144, %145 : vector<8x128xf32>
      %147 = arith.mulf %146, %146 : vector<8x128xf32>
      %148 = arith.mulf %146, %147 : vector<8x128xf32>
      %cst_69 = arith.constant 4.471500e-02 : f32
      %149 = vector.broadcast %cst_69 : f32 to vector<8x128xf32>
      %150 = arith.mulf %149, %148 : vector<8x128xf32>
      %151 = arith.addf %146, %150 : vector<8x128xf32>
      %cst_70 = arith.constant 0.797884583 : f32
      %152 = vector.broadcast %cst_70 : f32 to vector<8x128xf32>
      %153 = arith.mulf %152, %151 : vector<8x128xf32>
      %154 = math.tanh %153 : vector<8x128xf32>
      %cst_71 = arith.constant 1.000000e+00 : f32
      %155 = vector.broadcast %cst_71 : f32 to vector<8x128xf32>
      %156 = arith.addf %155, %154 : vector<8x128xf32>
      %cst_72 = arith.constant 5.000000e-01 : f32
      %157 = vector.broadcast %cst_72 : f32 to vector<8x128xf32>
      %158 = arith.mulf %157, %156 : vector<8x128xf32>
      %159 = arith.mulf %146, %158 : vector<8x128xf32>
      %160 = arith.truncf %159 : vector<8x128xf32> to vector<8x128xbf16>
      %cst_73 = arith.constant dense<0.000000e+00> : vector<8x64xf32>
      %161 = tpu.matmul %160, %23, %cst_73 {dimension_numbers = #tpu.dot_dimension_numbers<[1], [0], [0], [1], [0, 0, 1, 1], [], []>} : vector<8x128xbf16>, vector<128x64xbf16>, vector<8x64xf32> -> vector<8x64xf32>
      %162 = vector.broadcast %12 : vector<1x64xf32> to vector<8x64xf32>
      %163 = arith.addf %161, %162 : vector<8x64xf32>
      %164 = arith.addf %120, %163 : vector<8x64xf32>
      %c0_74 = arith.constant 0 : index
      %c0_75 = arith.constant 0 : index
      %165 = vector.load %arg46[%c0_74, %c0_75] : memref<8x64xf32, #tpu.memory_space<vmem>>, vector<8x64xf32>
      tpu.vector_store %arg46[%c0_74, %c0_75], %164 {strides = array<i32>} : memref<8x64xf32, #tpu.memory_space<vmem>>, vector<8x64xf32>,
    } else {
    }
    %c0_i32_1 = arith.constant 0 : i32
    %3 = arith.cmpi sgt, %arg1, %c0_i32_1 : i32
    %c3_i32 = arith.constant 3 : i32
    %4 = arith.cmpi slt, %arg1, %c3_i32 : i32
    %5 = arith.andi %3, %4 : i1
    %6 = arith.extui %5 : i1 to i32
    %c0_i32_2 = arith.constant 0 : i32
    %7 = arith.cmpi ne, %6, %c0_i32_2 : i32
    scf.if %7 {
      %c0 = arith.constant 0 : index
      %c0_5 = arith.constant 0 : index
      %c0_6 = arith.constant 0 : index
      %11 = vector.load %arg33[%c0, %c0_5, %c0_6] : memref<1x1x128xf32, #tpu.memory_space<vmem>>, vector<1x1x128xf32>
      %12 = vector.shape_cast %11 : vector<1x1x128xf32> to vector<1x128xf32>
      %c0_7 = arith.constant 0 : index
      %c0_8 = arith.constant 0 : index
      %c0_9 = arith.constant 0 : index
      %13 = vector.load %arg34[%c0_7, %c0_8, %c0_9] : memref<1x1x64xf32, #tpu.memory_space<vmem>>, vector<1x1x64xf32>
      %14 = vector.shape_cast %13 : vector<1x1x64xf32> to vector<1x64xf32>
      %c0_10 = arith.constant 0 : index
      %c0_11 = arith.constant 0 : index
      %c0_12 = arith.constant 0 : index
      %15 = vector.load %arg35[%c0_10, %c0_11, %c0_12] : memref<1x1x64xf32, #tpu.memory_space<vmem>>, vector<1x1x64xf32>
      %16 = vector.shape_cast %15 : vector<1x1x64xf32> to vector<1x64xf32>
      %c0_13 = arith.constant 0 : index
      %c0_14 = arith.constant 0 : index
      %c0_15 = arith.constant 0 : index
      %17 = vector.load %arg36[%c0_13, %c0_14, %c0_15] : memref<1x1x96xf32, #tpu.memory_space<vmem>>, vector<1x1x96xf32>
      %18 = vector.shape_cast %17 : vector<1x1x96xf32> to vector<1x96xf32>
      %c0_16 = arith.constant 0 : index
      %c0_17 = arith.constant 0 : index
      %c0_18 = arith.constant 0 : index
      %19 = vector.load %arg37[%c0_16, %c0_17, %c0_18] : memref<1x1x64xf32, #tpu.memory_space<vmem>>, vector<1x1x64xf32>
      %20 = vector.shape_cast %19 : vector<1x1x64xf32> to vector<1x64xf32>
      %c0_19 = arith.constant 0 : index
      %c0_20 = arith.constant 0 : index
      %c0_21 = arith.constant 0 : index
      %21 = vector.load %arg38[%c0_19, %c0_20, %c0_21] : memref<1x1x64xf32, #tpu.memory_space<vmem>>, vector<1x1x64xf32>
      %22 = vector.shape_cast %21 : vector<1x1x64xf32> to vector<1x64xf32>
      %c0_22 = arith.constant 0 : index
      %c0_23 = arith.constant 0 : index
      %c0_24 = arith.constant 0 : index
      %23 = vector.load %arg39[%c0_22, %c0_23, %c0_24] : memref<1x1x64xf32, #tpu.memory_space<vmem>>, vector<1x1x64xf32>
      %24 = vector.shape_cast %23 : vector<1x1x64xf32> to vector<1x64xf32>
      %c0_25 = arith.constant 0 : index
      %c0_26 = arith.constant 0 : index
      %c0_27 = arith.constant 0 : index
      %25 = vector.load %arg40[%c0_25, %c0_26, %c0_27] : memref<1x1x64xf32, #tpu.memory_space<vmem>>, vector<1x1x64xf32>
      %26 = vector.shape_cast %25 : vector<1x1x64xf32> to vector<1x64xf32>
      %c0_28 = arith.constant 0 : index
      %c0_29 = arith.constant 0 : index
      %c0_30 = arith.constant 0 : index
      %27 = vector.load %arg41[%c0_28, %c0_29, %c0_30] : memref<1x64x128xbf16, #tpu.memory_space<vmem>>, vector<1x64x128xbf16>
      %28 = vector.shape_cast %27 : vector<1x64x128xbf16> to vector<64x128xbf16>
      %c0_31 = arith.constant 0 : index
      %c0_32 = arith.constant 0 : index
      %c0_33 = arith.constant 0 : index
      %29 = vector.load %arg42[%c0_31, %c0_32, %c0_33] : memref<1x128x64xbf16, #tpu.memory_space<vmem>>, vector<1x128x64xbf16>
      %30 = vector.shape_cast %29 : vector<1x128x64xbf16> to vector<128x64xbf16>
      %c0_34 = arith.constant 0 : index
      %c0_35 = arith.constant 0 : index
      %c0_36 = arith.constant 0 : index
      %31 = vector.load %arg43[%c0_34, %c0_35, %c0_36] : memref<1x64x64xbf16, #tpu.memory_space<vmem>>, vector<1x64x64xbf16>
      %32 = vector.shape_cast %31 : vector<1x64x64xbf16> to vector<64x64xbf16>
      %c0_37 = arith.constant 0 : index
      %c0_38 = arith.constant 0 : index
      %c0_39 = arith.constant 0 : index
      %33 = vector.load %arg44[%c0_37, %c0_38, %c0_39] : memref<1x64x96xbf16, #tpu.memory_space<vmem>>, vector<1x64x96xbf16>
      %34 = vector.shape_cast %33 : vector<1x64x96xbf16> to vector<64x96xbf16>
      %c0_40 = arith.constant 0 : index
      %c0_41 = arith.constant 0 : index
      %35 = vector.load %arg46[%c0_40, %c0_41] : memref<8x64xf32, #tpu.memory_space<vmem>>, vector<8x64xf32>
      %cst = arith.constant dense<0.000000e+00> : vector<8xf32>
      %36 = vector.multi_reduction <add>, %35, %cst [1] : vector<8x64xf32> to vector<8xf32>
      %37 = vector.shape_cast %36 : vector<8xf32> to vector<8x1xf32>
      %cst_42 = arith.constant 6.400000e+01 : f32
      %38 = vector.broadcast %cst_42 : f32 to vector<8x1xf32>
      %39 = arith.divf %37, %38 : vector<8x1xf32>
      %40 = vector.broadcast %39 : vector<8x1xf32> to vector<8x64xf32>
      %41 = arith.subf %35, %40 : vector<8x64xf32>
      %42 = arith.mulf %41, %41 : vector<8x64xf32>
      %cst_43 = arith.constant dense<0.000000e+00> : vector<8xf32>
      %43 = vector.multi_reduction <add>, %42, %cst_43 [1] : vector<8x64xf32> to vector<8xf32>
      %44 = vector.shape_cast %43 : vector<8xf32> to vector<8x1xf32>
      %cst_44 = arith.constant 6.400000e+01 : f32
      %45 = vector.broadcast %cst_44 : f32 to vector<8x1xf32>
      %46 = arith.divf %44, %45 : vector<8x1xf32>
      %47 = vector.broadcast %39 : vector<8x1xf32> to vector<8x64xf32>
      %48 = arith.subf %35, %47 : vector<8x64xf32>
      %cst_45 = arith.constant 9.99999974E-6 : f32
      %49 = vector.broadcast %cst_45 : f32 to vector<8x1xf32>
      %50 = arith.addf %46, %49 : vector<8x1xf32>
      %51 = math.rsqrt %50 : vector<8x1xf32>
      %52 = vector.broadcast %51 : vector<8x1xf32> to vector<8x64xf32>
      %53 = arith.mulf %48, %52 : vector<8x64xf32>
      %54 = vector.broadcast %22 : vector<1x64xf32> to vector<8x64xf32>
      %55 = arith.mulf %53, %54 : vector<8x64xf32>
      %56 = vector.broadcast %20 : vector<1x64xf32> to vector<8x64xf32>
      %57 = arith.addf %55, %56 : vector<8x64xf32>
      %58 = arith.truncf %57 : vector<8x64xf32> to vector<8x64xbf16>
      %cst_46 = arith.constant dense<0.000000e+00> : vector<8x96xf32>
      %59 = tpu.matmul %58, %34, %cst_46 {dimension_numbers = #tpu.dot_dimension_numbers<[1], [0], [0], [1], [0, 0, 1, 1], [], []>} : vector<8x64xbf16>, vector<64x96xbf16>, vector<8x96xf32> -> vector<8x96xf32>
      %60 = vector.broadcast %18 : vector<1x96xf32> to vector<8x96xf32>
      %61 = arith.addf %59, %60 : vector<8x96xf32>
      %62 = vector.extract_strided_slice %61 {offsets = [0, 0], sizes = [8, 16], strides = [1, 1]} : vector<8x96xf32> to vector<8x16xf32>
      %cst_47 = arith.constant 2.500000e-01 : f32
      %63 = vector.broadcast %cst_47 : f32 to vector<8x16xf32>
      %64 = arith.mulf %62, %63 : vector<8x16xf32>
      %65 = vector.shape_cast %64 : vector<8x16xf32> to vector<1x8x16xf32>
      %66 = vector.extract_strided_slice %61 {offsets = [0, 16], sizes = [8, 16], strides = [1, 1]} : vector<8x96xf32> to vector<8x16xf32>
      %67 = vector.shape_cast %66 : vector<8x16xf32> to vector<1x8x16xf32>
      %68 = vector.extract_strided_slice %61 {offsets = [0, 32], sizes = [8, 64], strides = [1, 1]} : vector<8x96xf32> to vector<8x64xf32>
      %69 = vector.shape_cast %68 : vector<8x64xf32> to vector<1x8x64xf32>
      %70 = arith.truncf %65 : vector<1x8x16xf32> to vector<1x8x16xbf16>
      %71 = arith.truncf %67 : vector<1x8x16xf32> to vector<1x8x16xbf16>
      "tpu.trace_start"() <{level = 10 : i32, message = "bqd,bkd->bqk"}> : () -> ()
      %cst_48 = arith.constant dense<0.000000e+00> : vector<1x8x8xf32>
      %72 = tpu.matmul %70, %71, %cst_48 {dimension_numbers = #tpu.dot_dimension_numbers<[2], [2], [1], [1], [0, 0, 0, 1, 1, 1], [0], [0]>} : vector<1x8x16xbf16>, vector<1x8x16xbf16>, vector<1x8x8xf32> -> vector<1x8x8xf32>
      "tpu.trace_stop"() : () -> ()
      %cst_49 = arith.constant dense<0xFF800000> : vector<1x8xf32>
      %73 = vector.multi_reduction <maximumf>, %72, %cst_49 [2] : vector<1x8x8xf32> to vector<1x8xf32>
      %74 = vector.shape_cast %73 : vector<1x8xf32> to vector<1x8x1xf32>
      %75 = vector.broadcast %74 : vector<1x8x1xf32> to vector<1x8x8xf32>
      %76 = arith.subf %72, %75 : vector<1x8x8xf32>
      %77 = math.exp %76 : vector<1x8x8xf32>
      %cst_50 = arith.constant dense<0.000000e+00> : vector<1x8xf32>
      %78 = vector.multi_reduction <add>, %77, %cst_50 [2] : vector<1x8x8xf32> to vector<1x8xf32>
      %79 = vector.shape_cast %78 : vector<1x8xf32> to vector<1x8x1xf32>
      %80 = tpu.reciprocal %79 {approx = true} : vector<1x8x1xf32> -> vector<1x8x1xf32>
      %81 = vector.broadcast %80 : vector<1x8x1xf32> to vector<1x8x8xf32>
      %82 = arith.mulf %77, %81 : vector<1x8x8xf32>
      %83 = arith.truncf %82 : vector<1x8x8xf32> to vector<1x8x8xbf16>
      %84 = arith.truncf %69 : vector<1x8x64xf32> to vector<1x8x64xbf16>
      "tpu.trace_start"() <{level = 10 : i32, message = "bqk,bkd->bqd"}> : () -> ()
      %cst_51 = arith.constant dense<0.000000e+00> : vector<1x8x64xf32>
      %85 = tpu.matmul %83, %84, %cst_51 {dimension_numbers = #tpu.dot_dimension_numbers<[2], [1], [1], [2], [0, 0, 0, 1, 1, 2], [0], [0]>} : vector<1x8x8xbf16>, vector<1x8x64xbf16>, vector<1x8x64xf32> -> vector<1x8x64xf32>
      "tpu.trace_stop"() : () -> ()
      %86 = vector.shape_cast %85 : vector<1x8x64xf32> to vector<8x64xf32>
      %87 = arith.truncf %86 : vector<8x64xf32> to vector<8x64xbf16>
      %cst_52 = arith.constant dense<0.000000e+00> : vector<8x64xf32>
      %88 = tpu.matmul %87, %32, %cst_52 {dimension_numbers = #tpu.dot_dimension_numbers<[1], [0], [0], [1], [0, 0, 1, 1], [], []>} : vector<8x64xbf16>, vector<64x64xbf16>, vector<8x64xf32> -> vector<8x64xf32>
      %89 = vector.broadcast %16 : vector<1x64xf32> to vector<8x64xf32>
      %90 = arith.addf %88, %89 : vector<8x64xf32>
      %91 = arith.addf %35, %90 : vector<8x64xf32>
      %cst_53 = arith.constant dense<0.000000e+00> : vector<8xf32>
      %92 = vector.multi_reduction <add>, %91, %cst_53 [1] : vector<8x64xf32> to vector<8xf32>
      %93 = vector.shape_cast %92 : vector<8xf32> to vector<8x1xf32>
      %cst_54 = arith.constant 6.400000e+01 : f32
      %94 = vector.broadcast %cst_54 : f32 to vector<8x1xf32>
      %95 = arith.divf %93, %94 : vector<8x1xf32>
      %96 = vector.broadcast %95 : vector<8x1xf32> to vector<8x64xf32>
      %97 = arith.subf %91, %96 : vector<8x64xf32>
      %98 = arith.mulf %97, %97 : vector<8x64xf32>
      %cst_55 = arith.constant dense<0.000000e+00> : vector<8xf32>
      %99 = vector.multi_reduction <add>, %98, %cst_55 [1] : vector<8x64xf32> to vector<8xf32>
      %100 = vector.shape_cast %99 : vector<8xf32> to vector<8x1xf32>
      %cst_56 = arith.constant 6.400000e+01 : f32
      %101 = vector.broadcast %cst_56 : f32 to vector<8x1xf32>
      %102 = arith.divf %100, %101 : vector<8x1xf32>
      %103 = vector.broadcast %95 : vector<8x1xf32> to vector<8x64xf32>
      %104 = arith.subf %91, %103 : vector<8x64xf32>
      %cst_57 = arith.constant 9.99999974E-6 : f32
      %105 = vector.broadcast %cst_57 : f32 to vector<8x1xf32>
      %106 = arith.addf %102, %105 : vector<8x1xf32>
      %107 = math.rsqrt %106 : vector<8x1xf32>
      %108 = vector.broadcast %107 : vector<8x1xf32> to vector<8x64xf32>
      %109 = arith.mulf %104, %108 : vector<8x64xf32>
      %110 = vector.broadcast %26 : vector<1x64xf32> to vector<8x64xf32>
      %111 = arith.mulf %109, %110 : vector<8x64xf32>
      %112 = vector.broadcast %24 : vector<1x64xf32> to vector<8x64xf32>
      %113 = arith.addf %111, %112 : vector<8x64xf32>
      %114 = arith.truncf %113 : vector<8x64xf32> to vector<8x64xbf16>
      %cst_58 = arith.constant dense<0.000000e+00> : vector<8x128xf32>
      %115 = tpu.matmul %114, %28, %cst_58 {dimension_numbers = #tpu.dot_dimension_numbers<[1], [0], [0], [1], [0, 0, 1, 1], [], []>} : vector<8x64xbf16>, vector<64x128xbf16>, vector<8x128xf32> -> vector<8x128xf32>
      %116 = vector.broadcast %12 : vector<1x128xf32> to vector<8x128xf32>
      %117 = arith.addf %115, %116 : vector<8x128xf32>
      %118 = arith.mulf %117, %117 : vector<8x128xf32>
      %119 = arith.mulf %117, %118 : vector<8x128xf32>
      %cst_59 = arith.constant 4.471500e-02 : f32
      %120 = vector.broadcast %cst_59 : f32 to vector<8x128xf32>
      %121 = arith.mulf %120, %119 : vector<8x128xf32>
      %122 = arith.addf %117, %121 : vector<8x128xf32>
      %cst_60 = arith.constant 0.797884583 : f32
      %123 = vector.broadcast %cst_60 : f32 to vector<8x128xf32>
      %124 = arith.mulf %123, %122 : vector<8x128xf32>
      %125 = math.tanh %124 : vector<8x128xf32>
      %cst_61 = arith.constant 1.000000e+00 : f32
      %126 = vector.broadcast %cst_61 : f32 to vector<8x128xf32>
      %127 = arith.addf %126, %125 : vector<8x128xf32>
      %cst_62 = arith.constant 5.000000e-01 : f32
      %128 = vector.broadcast %cst_62 : f32 to vector<8x128xf32>
      %129 = arith.mulf %128, %127 : vector<8x128xf32>
      %130 = arith.mulf %117, %129 : vector<8x128xf32>
      %131 = arith.truncf %130 : vector<8x128xf32> to vector<8x128xbf16>
      %cst_63 = arith.constant dense<0.000000e+00> : vector<8x64xf32>
      %132 = tpu.matmul %131, %30, %cst_63 {dimension_numbers = #tpu.dot_dimension_numbers<[1], [0], [0], [1], [0, 0, 1, 1], [], []>} : vector<8x128xbf16>, vector<128x64xbf16>, vector<8x64xf32> -> vector<8x64xf32>
      %133 = vector.broadcast %14 : vector<1x64xf32> to vector<8x64xf32>
      %134 = arith.addf %132, %133 : vector<8x64xf32>
      %135 = arith.addf %91, %134 : vector<8x64xf32>
      %c0_64 = arith.constant 0 : index
      %c0_65 = arith.constant 0 : index
      %136 = vector.load %arg46[%c0_64, %c0_65] : memref<8x64xf32, #tpu.memory_space<vmem>>, vector<8x64xf32>
      tpu.vector_store %arg46[%c0_64, %c0_65], %135 {strides = array<i32>} : memref<8x64xf32, #tpu.memory_space<vmem>>, vector<8x64xf32>,
    } else {
    }
    %c3_i32_3 = arith.constant 3 : i32
    %8 = arith.cmpi eq, %arg1, %c3_i32_3 : i32
    %9 = arith.extui %8 : i1 to i32
    %c0_i32_4 = arith.constant 0 : i32
    %10 = arith.cmpi ne, %9, %c0_i32_4 : i32
    scf.if %10 {
      %c0 = arith.constant 0 : index
      %c0_5 = arith.constant 0 : index
      %11 = vector.load %arg20[%c0, %c0_5] : memref<1x48xf32, #tpu.memory_space<vmem>>, vector<1x48xf32>
      %c0_6 = arith.constant 0 : index
      %c0_7 = arith.constant 0 : index
      %12 = vector.load %arg21[%c0_6, %c0_7] : memref<1x32xf32, #tpu.memory_space<vmem>>, vector<1x32xf32>
      %c0_8 = arith.constant 0 : index
      %c0_9 = arith.constant 0 : index
      %13 = vector.load %arg22[%c0_8, %c0_9] : memref<1x16xf32, #tpu.memory_space<vmem>>, vector<1x16xf32>
      %c0_10 = arith.constant 0 : index
      %c0_11 = arith.constant 0 : index
      %14 = vector.load %arg23[%c0_10, %c0_11] : memref<1x64xf32, #tpu.memory_space<vmem>>, vector<1x64xf32>
      %c0_12 = arith.constant 0 : index
      %c0_13 = arith.constant 0 : index
      %15 = vector.load %arg24[%c0_12, %c0_13] : memref<1x64xf32, #tpu.memory_space<vmem>>, vector<1x64xf32>
      %c0_14 = arith.constant 0 : index
      %c0_15 = arith.constant 0 : index
      %16 = vector.load %arg25[%c0_14, %c0_15] : memref<1x32xf32, #tpu.memory_space<vmem>>, vector<1x32xf32>
      %c0_16 = arith.constant 0 : index
      %c0_17 = arith.constant 0 : index
      %17 = vector.load %arg26[%c0_16, %c0_17] : memref<1x32xf32, #tpu.memory_space<vmem>>, vector<1x32xf32>
      %c0_18 = arith.constant 0 : index
      %c0_19 = arith.constant 0 : index
      %18 = vector.load %arg27[%c0_18, %c0_19] : memref<64x48xbf16, #tpu.memory_space<vmem>>, vector<64x48xbf16>
      %c0_20 = arith.constant 0 : index
      %c0_21 = arith.constant 0 : index
      %19 = vector.load %arg28[%c0_20, %c0_21] : memref<32x32xbf16, #tpu.memory_space<vmem>>, vector<32x32xbf16>
      %c0_22 = arith.constant 0 : index
      %c0_23 = arith.constant 0 : index
      %20 = vector.load %arg29[%c0_22, %c0_23] : memref<32x16xbf16, #tpu.memory_space<vmem>>, vector<32x16xbf16>
      %c0_24 = arith.constant 0 : index
      %c0_25 = arith.constant 0 : index
      %c0_26 = arith.constant 0 : index
      %21 = vector.load %arg2[%c0_24, %c0_25, %c0_26] : memref<1x8x32xbf16, #tpu.memory_space<vmem>>, vector<1x8x32xbf16>
      %22 = arith.extf %21 : vector<1x8x32xbf16> to vector<1x8x32xf32>
      %23 = vector.shape_cast %22 : vector<1x8x32xf32> to vector<8x32xf32>
      %c0_27 = arith.constant 0 : index
      %c0_28 = arith.constant 0 : index
      %24 = vector.load %arg46[%c0_27, %c0_28] : memref<8x64xf32, #tpu.memory_space<vmem>>, vector<8x64xf32>
      %cst = arith.constant dense<0.000000e+00> : vector<8xf32>
      %25 = vector.multi_reduction <add>, %23, %cst [1] : vector<8x32xf32> to vector<8xf32>
      %26 = vector.shape_cast %25 : vector<8xf32> to vector<8x1xf32>
      %cst_29 = arith.constant 3.200000e+01 : f32
      %27 = vector.broadcast %cst_29 : f32 to vector<8x1xf32>
      %28 = arith.divf %26, %27 : vector<8x1xf32>
      %29 = vector.broadcast %28 : vector<8x1xf32> to vector<8x32xf32>
      %30 = arith.subf %23, %29 : vector<8x32xf32>
      %31 = arith.mulf %30, %30 : vector<8x32xf32>
      %cst_30 = arith.constant dense<0.000000e+00> : vector<8xf32>
      %32 = vector.multi_reduction <add>, %31, %cst_30 [1] : vector<8x32xf32> to vector<8xf32>
      %33 = vector.shape_cast %32 : vector<8xf32> to vector<8x1xf32>
      %cst_31 = arith.constant 3.200000e+01 : f32
      %34 = vector.broadcast %cst_31 : f32 to vector<8x1xf32>
      %35 = arith.divf %33, %34 : vector<8x1xf32>
      %36 = vector.broadcast %28 : vector<8x1xf32> to vector<8x32xf32>
      %37 = arith.subf %23, %36 : vector<8x32xf32>
      %cst_32 = arith.constant 9.99999974E-6 : f32
      %38 = vector.broadcast %cst_32 : f32 to vector<8x1xf32>
      %39 = arith.addf %35, %38 : vector<8x1xf32>
      %40 = math.rsqrt %39 : vector<8x1xf32>
      %41 = vector.broadcast %40 : vector<8x1xf32> to vector<8x32xf32>
      %42 = arith.mulf %37, %41 : vector<8x32xf32>
      %43 = vector.broadcast %17 : vector<1x32xf32> to vector<8x32xf32>
      %44 = arith.mulf %42, %43 : vector<8x32xf32>
      %45 = vector.broadcast %16 : vector<1x32xf32> to vector<8x32xf32>
      %46 = arith.addf %44, %45 : vector<8x32xf32>
      %cst_33 = arith.constant dense<0.000000e+00> : vector<8xf32>
      %47 = vector.multi_reduction <add>, %24, %cst_33 [1] : vector<8x64xf32> to vector<8xf32>
      %48 = vector.shape_cast %47 : vector<8xf32> to vector<8x1xf32>
      %cst_34 = arith.constant 6.400000e+01 : f32
      %49 = vector.broadcast %cst_34 : f32 to vector<8x1xf32>
      %50 = arith.divf %48, %49 : vector<8x1xf32>
      %51 = vector.broadcast %50 : vector<8x1xf32> to vector<8x64xf32>
      %52 = arith.subf %24, %51 : vector<8x64xf32>
      %53 = arith.mulf %52, %52 : vector<8x64xf32>
      %cst_35 = arith.constant dense<0.000000e+00> : vector<8xf32>
      %54 = vector.multi_reduction <add>, %53, %cst_35 [1] : vector<8x64xf32> to vector<8xf32>
      %55 = vector.shape_cast %54 : vector<8xf32> to vector<8x1xf32>
      %cst_36 = arith.constant 6.400000e+01 : f32
      %56 = vector.broadcast %cst_36 : f32 to vector<8x1xf32>
      %57 = arith.divf %55, %56 : vector<8x1xf32>
      %58 = vector.broadcast %50 : vector<8x1xf32> to vector<8x64xf32>
      %59 = arith.subf %24, %58 : vector<8x64xf32>
      %cst_37 = arith.constant 9.99999974E-6 : f32
      %60 = vector.broadcast %cst_37 : f32 to vector<8x1xf32>
      %61 = arith.addf %57, %60 : vector<8x1xf32>
      %62 = math.rsqrt %61 : vector<8x1xf32>
      %63 = vector.broadcast %62 : vector<8x1xf32> to vector<8x64xf32>
      %64 = arith.mulf %59, %63 : vector<8x64xf32>
      %65 = vector.broadcast %15 : vector<1x64xf32> to vector<8x64xf32>
      %66 = arith.mulf %64, %65 : vector<8x64xf32>
      %67 = vector.broadcast %14 : vector<1x64xf32> to vector<8x64xf32>
      %68 = arith.addf %66, %67 : vector<8x64xf32>
      %69 = arith.truncf %46 : vector<8x32xf32> to vector<8x32xbf16>
      %cst_38 = arith.constant dense<0.000000e+00> : vector<8x16xf32>
      %70 = tpu.matmul %69, %20, %cst_38 {dimension_numbers = #tpu.dot_dimension_numbers<[1], [0], [0], [1], [0, 0, 1, 1], [], []>} : vector<8x32xbf16>, vector<32x16xbf16>, vector<8x16xf32> -> vector<8x16xf32>
      %71 = vector.broadcast %13 : vector<1x16xf32> to vector<8x16xf32>
      %72 = arith.addf %70, %71 : vector<8x16xf32>
      %cst_39 = arith.constant 2.500000e-01 : f32
      %73 = vector.broadcast %cst_39 : f32 to vector<8x16xf32>
      %74 = arith.mulf %72, %73 : vector<8x16xf32>
      %75 = vector.shape_cast %74 : vector<8x16xf32> to vector<1x8x16xf32>
      %76 = arith.truncf %68 : vector<8x64xf32> to vector<8x64xbf16>
      %cst_40 = arith.constant dense<0.000000e+00> : vector<8x48xf32>
      %77 = tpu.matmul %76, %18, %cst_40 {dimension_numbers = #tpu.dot_dimension_numbers<[1], [0], [0], [1], [0, 0, 1, 1], [], []>} : vector<8x64xbf16>, vector<64x48xbf16>, vector<8x48xf32> -> vector<8x48xf32>
      %78 = vector.broadcast %11 : vector<1x48xf32> to vector<8x48xf32>
      %79 = arith.addf %77, %78 : vector<8x48xf32>
      %80 = vector.extract_strided_slice %79 {offsets = [0, 0], sizes = [8, 16], strides = [1, 1]} : vector<8x48xf32> to vector<8x16xf32>
      %81 = vector.shape_cast %80 : vector<8x16xf32> to vector<1x8x16xf32>
      %82 = vector.extract_strided_slice %79 {offsets = [0, 16], sizes = [8, 32], strides = [1, 1]} : vector<8x48xf32> to vector<8x32xf32>
      %83 = vector.shape_cast %82 : vector<8x32xf32> to vector<1x8x32xf32>
      %84 = arith.truncf %75 : vector<1x8x16xf32> to vector<1x8x16xbf16>
      %85 = arith.truncf %81 : vector<1x8x16xf32> to vector<1x8x16xbf16>
      "tpu.trace_start"() <{level = 10 : i32, message = "bqd,bkd->bqk"}> : () -> ()
      %cst_41 = arith.constant dense<0.000000e+00> : vector<1x8x8xf32>
      %86 = tpu.matmul %84, %85, %cst_41 {dimension_numbers = #tpu.dot_dimension_numbers<[2], [2], [1], [1], [0, 0, 0, 1, 1, 1], [0], [0]>} : vector<1x8x16xbf16>, vector<1x8x16xbf16>, vector<1x8x8xf32> -> vector<1x8x8xf32>
      "tpu.trace_stop"() : () -> ()
      %cst_42 = arith.constant dense<0xFF800000> : vector<1x8xf32>
      %87 = vector.multi_reduction <maximumf>, %86, %cst_42 [2] : vector<1x8x8xf32> to vector<1x8xf32>
      %88 = vector.shape_cast %87 : vector<1x8xf32> to vector<1x8x1xf32>
      %89 = vector.broadcast %88 : vector<1x8x1xf32> to vector<1x8x8xf32>
      %90 = arith.subf %86, %89 : vector<1x8x8xf32>
      %91 = math.exp %90 : vector<1x8x8xf32>
      %cst_43 = arith.constant dense<0.000000e+00> : vector<1x8xf32>
      %92 = vector.multi_reduction <add>, %91, %cst_43 [2] : vector<1x8x8xf32> to vector<1x8xf32>
      %93 = vector.shape_cast %92 : vector<1x8xf32> to vector<1x8x1xf32>
      %94 = tpu.reciprocal %93 {approx = true} : vector<1x8x1xf32> -> vector<1x8x1xf32>
      %95 = vector.broadcast %94 : vector<1x8x1xf32> to vector<1x8x8xf32>
      %96 = arith.mulf %91, %95 : vector<1x8x8xf32>
      %97 = arith.truncf %96 : vector<1x8x8xf32> to vector<1x8x8xbf16>
      %98 = arith.truncf %83 : vector<1x8x32xf32> to vector<1x8x32xbf16>
      "tpu.trace_start"() <{level = 10 : i32, message = "bqk,bkd->bqd"}> : () -> ()
      %cst_44 = arith.constant dense<0.000000e+00> : vector<1x8x32xf32>
      %99 = tpu.matmul %97, %98, %cst_44 {dimension_numbers = #tpu.dot_dimension_numbers<[2], [1], [1], [2], [0, 0, 0, 1, 1, 2], [0], [0]>} : vector<1x8x8xbf16>, vector<1x8x32xbf16>, vector<1x8x32xf32> -> vector<1x8x32xf32>
      "tpu.trace_stop"() : () -> ()
      %100 = vector.shape_cast %99 : vector<1x8x32xf32> to vector<8x32xf32>
      %101 = arith.truncf %100 : vector<8x32xf32> to vector<8x32xbf16>
      %cst_45 = arith.constant dense<0.000000e+00> : vector<8x32xf32>
      %102 = tpu.matmul %101, %19, %cst_45 {dimension_numbers = #tpu.dot_dimension_numbers<[1], [0], [0], [1], [0, 0, 1, 1], [], []>} : vector<8x32xbf16>, vector<32x32xbf16>, vector<8x32xf32> -> vector<8x32xf32>
      %103 = vector.broadcast %12 : vector<1x32xf32> to vector<8x32xf32>
      %104 = arith.addf %102, %103 : vector<8x32xf32>
      %105 = vector.shape_cast %104 : vector<8x32xf32> to vector<1x8x32xf32>
      %c0_46 = arith.constant 0 : index
      %c0_47 = arith.constant 0 : index
      %c0_48 = arith.constant 0 : index
      %106 = vector.load %arg3[%c0_46, %c0_47, %c0_48] : memref<1x1x8xf32, #tpu.memory_space<vmem>>, vector<1x1x8xf32>
      %107 = vector.shape_cast %106 : vector<1x1x8xf32> to vector<1x8xf32>
      %cst_49 = arith.constant dense<0.000000e+00> : vector<1xf32>
      %108 = vector.multi_reduction <add>, %107, %cst_49 [1] : vector<1x8xf32> to vector<1xf32>
      %109 = vector.shape_cast %108 : vector<1xf32> to vector<1x1xf32>
      %cst_50 = arith.constant 1.000000e+00 : f32
      %110 = vector.broadcast %cst_50 : f32 to vector<1x1xf32>
      %111 = arith.maximumf %109, %110 : vector<1x1xf32>
      %112 = vector.shape_cast %107 : vector<1x8xf32> to vector<1x8x1xf32>
      %113 = vector.broadcast %112 : vector<1x8x1xf32> to vector<1x8x32xf32>
      %114 = arith.mulf %105, %113 : vector<1x8x32xf32>
      %cst_51 = arith.constant dense<0.000000e+00> : vector<1x32xf32>
      %115 = vector.multi_reduction <add>, %114, %cst_51 [1] : vector<1x8x32xf32> to vector<1x32xf32>
      %116 = vector.broadcast %111 : vector<1x1xf32> to vector<1x32xf32>
      %117 = arith.divf %115, %116 : vector<1x32xf32>
      %118 = arith.truncf %117 : vector<1x32xf32> to vector<1x32xbf16>
      %c0_52 = arith.constant 0 : index
      %c0_53 = arith.constant 0 : index
      %119 = vector.load %arg31[%c0_52, %c0_53] : memref<32x128xbf16, #tpu.memory_space<vmem>>, vector<32x128xbf16>
      %cst_54 = arith.constant dense<0.000000e+00> : vector<1x128xf32>
      %120 = tpu.matmul %118, %119, %cst_54 {dimension_numbers = #tpu.dot_dimension_numbers<[1], [0], [0], [1], [0, 0, 1, 1], [], []>} : vector<1x32xbf16>, vector<32x128xbf16>, vector<1x128xf32> -> vector<1x128xf32>
      %c0_55 = arith.constant 0 : index
      %c0_56 = arith.constant 0 : index
      %121 = vector.load %arg30[%c0_55, %c0_56] : memref<1x128xf32, #tpu.memory_space<vmem>>, vector<1x128xf32>
      %122 = arith.addf %120, %121 : vector<1x128xf32>
      %123 = vector.shape_cast %122 : vector<1x128xf32> to vector<1x1x128xf32>
      %124 = vector.shape_cast %123 : vector<1x1x128xf32> to vector<1x1x128xf32>
      %125 = vector.broadcast %124 : vector<1x1x128xf32> to vector<1x8x128xf32>
      %c0_57 = arith.constant 0 : index
      %c0_58 = arith.constant 0 : index
      %c0_59 = arith.constant 0 : index
      %126 = vector.load %arg45[%c0_57, %c0_58, %c0_59] : memref<1x8x128xf32, #tpu.memory_space<vmem>>, vector<1x8x128xf32>
      tpu.vector_store %arg45[%c0_57, %c0_58, %c0_59], %125 {strides = array<i32>} : memref<1x8x128xf32, #tpu.memory_space<vmem>>, vector<1x8x128xf32>,
    } else {
    }
    return
  }
  func.func @transform_0(%arg0: i32, %arg1: i32) -> (i32, i32, i32) {
    %c0_i32 = arith.constant 0 : i32
    %c0_i32_0 = arith.constant 0 : i32
    %c0_i32_1 = arith.constant 0 : i32
    return %arg0, %c0_i32, %c0_i32_0 : i32, i32, i32
  }
  func.func @transform_1(%arg0: i32, %arg1: i32) -> (i32, i32, i32) {
    %c0_i32 = arith.constant 0 : i32
    %c0_i32_0 = arith.constant 0 : i32
    %c0_i32_1 = arith.constant 0 : i32
    return %arg0, %c0_i32, %c0_i32_0 : i32, i32, i32
  }
  func.func @transform_2(%arg0: i32, %arg1: i32) -> (i32, i32) {
    %c0_i32 = arith.constant 0 : i32
    %c0_i32_0 = arith.constant 0 : i32
    %c0_i32_1 = arith.constant 0 : i32
    return %c0_i32, %c0_i32_0 : i32, i32
  }
  func.func @transform_3(%arg0: i32, %arg1: i32) -> (i32, i32) {
    %c0_i32 = arith.constant 0 : i32
    %c0_i32_0 = arith.constant 0 : i32
    %c0_i32_1 = arith.constant 0 : i32
    return %c0_i32, %c0_i32_0 : i32, i32
  }
  func.func @transform_4(%arg0: i32, %arg1: i32) -> (i32, i32) {
    %c0_i32 = arith.constant 0 : i32
    %c0_i32_0 = arith.constant 0 : i32
    %c0_i32_1 = arith.constant 0 : i32
    return %c0_i32, %c0_i32_0 : i32, i32
  }
  func.func @transform_5(%arg0: i32, %arg1: i32) -> (i32, i32) {
    %c0_i32 = arith.constant 0 : i32
    %c0_i32_0 = arith.constant 0 : i32
    %c0_i32_1 = arith.constant 0 : i32
    return %c0_i32, %c0_i32_0 : i32, i32
  }
  func.func @transform_6(%arg0: i32, %arg1: i32) -> (i32, i32) {
    %c0_i32 = arith.constant 0 : i32
    %c0_i32_0 = arith.constant 0 : i32
    %c0_i32_1 = arith.constant 0 : i32
    return %c0_i32, %c0_i32_0 : i32, i32
  }
  func.func @transform_7(%arg0: i32, %arg1: i32) -> (i32, i32) {
    %c0_i32 = arith.constant 0 : i32
    %c0_i32_0 = arith.constant 0 : i32
    %c0_i32_1 = arith.constant 0 : i32
    return %c0_i32, %c0_i32_0 : i32, i32
  }
  func.func @transform_8(%arg0: i32, %arg1: i32) -> (i32, i32) {
    %c0_i32 = arith.constant 0 : i32
    %c0_i32_0 = arith.constant 0 : i32
    %c0_i32_1 = arith.constant 0 : i32
    return %c0_i32, %c0_i32_0 : i32, i32
  }
  func.func @transform_9(%arg0: i32, %arg1: i32) -> (i32, i32) {
    %c0_i32 = arith.constant 0 : i32
    %c0_i32_0 = arith.constant 0 : i32
    %c0_i32_1 = arith.constant 0 : i32
    return %c0_i32, %c0_i32_0 : i32, i32
  }
  func.func @transform_10(%arg0: i32, %arg1: i32) -> (i32, i32) {
    %c0_i32 = arith.constant 0 : i32
    %c0_i32_0 = arith.constant 0 : i32
    %c0_i32_1 = arith.constant 0 : i32
    return %c0_i32, %c0_i32_0 : i32, i32
  }
  func.func @transform_11(%arg0: i32, %arg1: i32) -> (i32, i32) {
    %c0_i32 = arith.constant 0 : i32
    %c0_i32_0 = arith.constant 0 : i32
    %c0_i32_1 = arith.constant 0 : i32
    return %c0_i32, %c0_i32_0 : i32, i32
  }
  func.func @transform_12(%arg0: i32, %arg1: i32) -> (i32, i32) {
    %c0_i32 = arith.constant 0 : i32
    %c0_i32_0 = arith.constant 0 : i32
    %c0_i32_1 = arith.constant 0 : i32
    return %c0_i32, %c0_i32_0 : i32, i32
  }
  func.func @transform_13(%arg0: i32, %arg1: i32) -> (i32, i32) {
    %c0_i32 = arith.constant 0 : i32
    %c0_i32_0 = arith.constant 0 : i32
    %c0_i32_1 = arith.constant 0 : i32
    return %c0_i32, %c0_i32_0 : i32, i32
  }
  func.func @transform_14(%arg0: i32, %arg1: i32) -> (i32, i32) {
    %c0_i32 = arith.constant 0 : i32
    %c0_i32_0 = arith.constant 0 : i32
    %c0_i32_1 = arith.constant 0 : i32
    return %c0_i32, %c0_i32_0 : i32, i32
  }
  func.func @transform_15(%arg0: i32, %arg1: i32) -> (i32, i32) {
    %c0_i32 = arith.constant 0 : i32
    %c0_i32_0 = arith.constant 0 : i32
    %c0_i32_1 = arith.constant 0 : i32
    return %c0_i32, %c0_i32_0 : i32, i32
  }
  func.func @transform_16(%arg0: i32, %arg1: i32) -> (i32, i32) {
    %c0_i32 = arith.constant 0 : i32
    %c0_i32_0 = arith.constant 0 : i32
    %c0_i32_1 = arith.constant 0 : i32
    return %c0_i32, %c0_i32_0 : i32, i32
  }
  func.func @transform_17(%arg0: i32, %arg1: i32) -> (i32, i32) {
    %c0_i32 = arith.constant 0 : i32
    %c0_i32_0 = arith.constant 0 : i32
    %c0_i32_1 = arith.constant 0 : i32
    return %c0_i32, %c0_i32_0 : i32, i32
  }
  func.func @transform_18(%arg0: i32, %arg1: i32) -> (i32, i32) {
    %c0_i32 = arith.constant 0 : i32
    %c0_i32_0 = arith.constant 0 : i32
    %c0_i32_1 = arith.constant 0 : i32
    return %c0_i32, %c0_i32_0 : i32, i32
  }
  func.func @transform_19(%arg0: i32, %arg1: i32) -> (i32, i32) {
    %c0_i32 = arith.constant 0 : i32
    %c0_i32_0 = arith.constant 0 : i32
    %c0_i32_1 = arith.constant 0 : i32
    return %c0_i32, %c0_i32_0 : i32, i32
  }
  func.func @transform_20(%arg0: i32, %arg1: i32) -> (i32, i32) {
    %c0_i32 = arith.constant 0 : i32
    %c0_i32_0 = arith.constant 0 : i32
    %c0_i32_1 = arith.constant 0 : i32
    return %c0_i32, %c0_i32_0 : i32, i32
  }
  func.func @transform_21(%arg0: i32, %arg1: i32) -> (i32, i32) {
    %c0_i32 = arith.constant 0 : i32
    %c0_i32_0 = arith.constant 0 : i32
    %c0_i32_1 = arith.constant 0 : i32
    return %c0_i32, %c0_i32_0 : i32, i32
  }
  func.func @transform_22(%arg0: i32, %arg1: i32) -> (i32, i32) {
    %c0_i32 = arith.constant 0 : i32
    %c0_i32_0 = arith.constant 0 : i32
    %c0_i32_1 = arith.constant 0 : i32
    return %c0_i32, %c0_i32_0 : i32, i32
  }
  func.func @transform_23(%arg0: i32, %arg1: i32) -> (i32, i32) {
    %c0_i32 = arith.constant 0 : i32
    %c0_i32_0 = arith.constant 0 : i32
    %c0_i32_1 = arith.constant 0 : i32
    return %c0_i32, %c0_i32_0 : i32, i32
  }
  func.func @transform_24(%arg0: i32, %arg1: i32) -> (i32, i32) {
    %c0_i32 = arith.constant 0 : i32
    %c0_i32_0 = arith.constant 0 : i32
    %c0_i32_1 = arith.constant 0 : i32
    return %c0_i32, %c0_i32_0 : i32, i32
  }
  func.func @transform_25(%arg0: i32, %arg1: i32) -> (i32, i32) {
    %c0_i32 = arith.constant 0 : i32
    %c0_i32_0 = arith.constant 0 : i32
    %c0_i32_1 = arith.constant 0 : i32
    return %c0_i32, %c0_i32_0 : i32, i32
  }
  func.func @transform_26(%arg0: i32, %arg1: i32) -> (i32, i32) {
    %c0_i32 = arith.constant 0 : i32
    %c0_i32_0 = arith.constant 0 : i32
    %c0_i32_1 = arith.constant 0 : i32
    return %c0_i32, %c0_i32_0 : i32, i32
  }
  func.func @transform_27(%arg0: i32, %arg1: i32) -> (i32, i32) {
    %c0_i32 = arith.constant 0 : i32
    %c0_i32_0 = arith.constant 0 : i32
    %c0_i32_1 = arith.constant 0 : i32
    return %c0_i32, %c0_i32_0 : i32, i32
  }
  func.func @transform_28(%arg0: i32, %arg1: i32) -> (i32, i32) {
    %c0_i32 = arith.constant 0 : i32
    %c0_i32_0 = arith.constant 0 : i32
    %c0_i32_1 = arith.constant 0 : i32
    return %c0_i32, %c0_i32_0 : i32, i32
  }
  func.func @transform_29(%arg0: i32, %arg1: i32) -> (i32, i32) {
    %c0_i32 = arith.constant 0 : i32
    %c0_i32_0 = arith.constant 0 : i32
    %c0_i32_1 = arith.constant 0 : i32
    return %c0_i32, %c0_i32_0 : i32, i32
  }
  func.func @transform_30(%arg0: i32, %arg1: i32) -> (i32, i32) {
    %c0_i32 = arith.constant 0 : i32
    %c0_i32_0 = arith.constant 0 : i32
    %c0_i32_1 = arith.constant 0 : i32
    return %c0_i32, %c0_i32_0 : i32, i32
  }
  func.func @transform_31(%arg0: i32, %arg1: i32) -> (i32, i32, i32) {
    %c1_i32 = arith.constant 1 : i32
    %0 = arith.subi %arg1, %c1_i32 : i32
    %c0_i32 = arith.constant 0 : i32
    %c1_i32_0 = arith.constant 1 : i32
    %1 = arith.maxsi %c0_i32, %0 : i32
    %2 = arith.minsi %c1_i32_0, %1 : i32
    %c0_i32_1 = arith.constant 0 : i32
    %c0_i32_2 = arith.constant 0 : i32
    %c0_i32_3 = arith.constant 0 : i32
    return %2, %c0_i32_1, %c0_i32_2 : i32, i32, i32
  }
  func.func @transform_32(%arg0: i32, %arg1: i32) -> (i32, i32, i32) {
    %c1_i32 = arith.constant 1 : i32
    %0 = arith.subi %arg1, %c1_i32 : i32
    %c0_i32 = arith.constant 0 : i32
    %c1_i32_0 = arith.constant 1 : i32
    %1 = arith.maxsi %c0_i32, %0 : i32
    %2 = arith.minsi %c1_i32_0, %1 : i32
    %c0_i32_1 = arith.constant 0 : i32
    %c0_i32_2 = arith.constant 0 : i32
    %c0_i32_3 = arith.constant 0 : i32
    return %2, %c0_i32_1, %c0_i32_2 : i32, i32, i32
  }
  func.func @transform_33(%arg0: i32, %arg1: i32) -> (i32, i32, i32) {
    %c1_i32 = arith.constant 1 : i32
    %0 = arith.subi %arg1, %c1_i32 : i32
    %c0_i32 = arith.constant 0 : i32
    %c1_i32_0 = arith.constant 1 : i32
    %1 = arith.maxsi %c0_i32, %0 : i32
    %2 = arith.minsi %c1_i32_0, %1 : i32
    %c0_i32_1 = arith.constant 0 : i32
    %c0_i32_2 = arith.constant 0 : i32
    %c0_i32_3 = arith.constant 0 : i32
    return %2, %c0_i32_1, %c0_i32_2 : i32, i32, i32
  }
  func.func @transform_34(%arg0: i32, %arg1: i32) -> (i32, i32, i32) {
    %c1_i32 = arith.constant 1 : i32
    %0 = arith.subi %arg1, %c1_i32 : i32
    %c0_i32 = arith.constant 0 : i32
    %c1_i32_0 = arith.constant 1 : i32
    %1 = arith.maxsi %c0_i32, %0 : i32
    %2 = arith.minsi %c1_i32_0, %1 : i32
    %c0_i32_1 = arith.constant 0 : i32
    %c0_i32_2 = arith.constant 0 : i32
    %c0_i32_3 = arith.constant 0 : i32
    return %2, %c0_i32_1, %c0_i32_2 : i32, i32, i32
  }
  func.func @transform_35(%arg0: i32, %arg1: i32) -> (i32, i32, i32) {
    %c1_i32 = arith.constant 1 : i32
    %0 = arith.subi %arg1, %c1_i32 : i32
    %c0_i32 = arith.constant 0 : i32
    %c1_i32_0 = arith.constant 1 : i32
    %1 = arith.maxsi %c0_i32, %0 : i32
    %2 = arith.minsi %c1_i32_0, %1 : i32
    %c0_i32_1 = arith.constant 0 : i32
    %c0_i32_2 = arith.constant 0 : i32
    %c0_i32_3 = arith.constant 0 : i32
    return %2, %c0_i32_1, %c0_i32_2 : i32, i32, i32
  }
  func.func @transform_36(%arg0: i32, %arg1: i32) -> (i32, i32, i32) {
    %c1_i32 = arith.constant 1 : i32
    %0 = arith.subi %arg1, %c1_i32 : i32
    %c0_i32 = arith.constant 0 : i32
    %c1_i32_0 = arith.constant 1 : i32
    %1 = arith.maxsi %c0_i32, %0 : i32
    %2 = arith.minsi %c1_i32_0, %1 : i32
    %c0_i32_1 = arith.constant 0 : i32
    %c0_i32_2 = arith.constant 0 : i32
    %c0_i32_3 = arith.constant 0 : i32
    return %2, %c0_i32_1, %c0_i32_2 : i32, i32, i32
  }
  func.func @transform_37(%arg0: i32, %arg1: i32) -> (i32, i32, i32) {
    %c1_i32 = arith.constant 1 : i32
    %0 = arith.subi %arg1, %c1_i32 : i32
    %c0_i32 = arith.constant 0 : i32
    %c1_i32_0 = arith.constant 1 : i32
    %1 = arith.maxsi %c0_i32, %0 : i32
    %2 = arith.minsi %c1_i32_0, %1 : i32
    %c0_i32_1 = arith.constant 0 : i32
    %c0_i32_2 = arith.constant 0 : i32
    %c0_i32_3 = arith.constant 0 : i32
    return %2, %c0_i32_1, %c0_i32_2 : i32, i32, i32
  }
  func.func @transform_38(%arg0: i32, %arg1: i32) -> (i32, i32, i32) {
    %c1_i32 = arith.constant 1 : i32
    %0 = arith.subi %arg1, %c1_i32 : i32
    %c0_i32 = arith.constant 0 : i32
    %c1_i32_0 = arith.constant 1 : i32
    %1 = arith.maxsi %c0_i32, %0 : i32
    %2 = arith.minsi %c1_i32_0, %1 : i32
    %c0_i32_1 = arith.constant 0 : i32
    %c0_i32_2 = arith.constant 0 : i32
    %c0_i32_3 = arith.constant 0 : i32
    return %2, %c0_i32_1, %c0_i32_2 : i32, i32, i32
  }
  func.func @transform_39(%arg0: i32, %arg1: i32) -> (i32, i32, i32) {
    %c1_i32 = arith.constant 1 : i32
    %0 = arith.subi %arg1, %c1_i32 : i32
    %c0_i32 = arith.constant 0 : i32
    %c1_i32_0 = arith.constant 1 : i32
    %1 = arith.maxsi %c0_i32, %0 : i32
    %2 = arith.minsi %c1_i32_0, %1 : i32
    %c0_i32_1 = arith.constant 0 : i32
    %c0_i32_2 = arith.constant 0 : i32
    %c0_i32_3 = arith.constant 0 : i32
    return %2, %c0_i32_1, %c0_i32_2 : i32, i32, i32
  }
  func.func @transform_40(%arg0: i32, %arg1: i32) -> (i32, i32, i32) {
    %c1_i32 = arith.constant 1 : i32
    %0 = arith.subi %arg1, %c1_i32 : i32
    %c0_i32 = arith.constant 0 : i32
    %c1_i32_0 = arith.constant 1 : i32
    %1 = arith.maxsi %c0_i32, %0 : i32
    %2 = arith.minsi %c1_i32_0, %1 : i32
    %c0_i32_1 = arith.constant 0 : i32
    %c0_i32_2 = arith.constant 0 : i32
    %c0_i32_3 = arith.constant 0 : i32
    return %2, %c0_i32_1, %c0_i32_2 : i32, i32, i32
  }
  func.func @transform_41(%arg0: i32, %arg1: i32) -> (i32, i32, i32) {
    %c1_i32 = arith.constant 1 : i32
    %0 = arith.subi %arg1, %c1_i32 : i32
    %c0_i32 = arith.constant 0 : i32
    %c1_i32_0 = arith.constant 1 : i32
    %1 = arith.maxsi %c0_i32, %0 : i32
    %2 = arith.minsi %c1_i32_0, %1 : i32
    %c0_i32_1 = arith.constant 0 : i32
    %c0_i32_2 = arith.constant 0 : i32
    %c0_i32_3 = arith.constant 0 : i32
    return %2, %c0_i32_1, %c0_i32_2 : i32, i32, i32
  }
  func.func @transform_42(%arg0: i32, %arg1: i32) -> (i32, i32, i32) {
    %c1_i32 = arith.constant 1 : i32
    %0 = arith.subi %arg1, %c1_i32 : i32
    %c0_i32 = arith.constant 0 : i32
    %c1_i32_0 = arith.constant 1 : i32
    %1 = arith.maxsi %c0_i32, %0 : i32
    %2 = arith.minsi %c1_i32_0, %1 : i32
    %c0_i32_1 = arith.constant 0 : i32
    %c0_i32_2 = arith.constant 0 : i32
    %c0_i32_3 = arith.constant 0 : i32
    return %2, %c0_i32_1, %c0_i32_2 : i32, i32, i32
  }
  func.func @transform_43(%arg0: i32, %arg1: i32) -> (i32, i32, i32) {
    %c0_i32 = arith.constant 0 : i32
    %c0_i32_0 = arith.constant 0 : i32
    %c0_i32_1 = arith.constant 0 : i32
    return %arg0, %c0_i32, %c0_i32_0 : i32, i32, i32
  }
}

</mosaic_0001>

<llo_original>
// kernel: net_forward.1
$region0: #{net_forward.1}
  #allocation0 [shape = 'u32[]', space=smem, size = 0x4, offset = 0x4, fixed_abs, tag = 'smem constant byte address 0x4 - core index']
  #allocation1 [shape = 'u32[72,128]{1,0:T(1,128)}', space=vmem, size = 0x9000, scoped, tag = 'internal scratch']
  #allocation2 [shape = 'f32[8,64]{1,0:T(8,128)}', space=vmem, size = 0x1000, scoped, tag = 'scratch operand']
  %s0 = inlined_call_operand.smem [shape: u32[44], index: -1, kind: input, shape index: {}]
  %s1 = sld [smem:[%s0]]
  %s2 = scalar_lea.smem %s0, 1
  %s3 = sld [smem:[%s2]]
  %s4 = scalar_lea.smem %s0, 2
  %s5 = sld [smem:[%s4]]
  %s6 = scalar_lea.smem %s0, 3
  %s7 = sld [smem:[%s6]]
  %s8 = scalar_lea.smem %s0, 4
  %s9 = sld [smem:[%s8]]
  %s10 = scalar_lea.smem %s0, 5
  %s11 = sld [smem:[%s10]]
  %s12 = scalar_lea.smem %s0, 6
  %s13 = sld [smem:[%s12]]
  %s14 = scalar_lea.smem %s0, 7
  %s15 = sld [smem:[%s14]]
  %s16 = scalar_lea.smem %s0, 8
  %s17 = sld [smem:[%s16]]
  %s18 = scalar_lea.smem %s0, 9
  %s19 = sld [smem:[%s18]]
  %s20 = scalar_lea.smem %s0, 10
  %s21 = sld [smem:[%s20]]
  %s22 = scalar_lea.smem %s0, 11
  %s23 = sld [smem:[%s22]]
  %s24 = scalar_lea.smem %s0, 12
  %s25 = sld [smem:[%s24]]
  %s26 = scalar_lea.smem %s0, 13
  %s27 = sld [smem:[%s26]]
  %s28 = scalar_lea.smem %s0, 14
  %s29 = sld [smem:[%s28]]
  %s30 = scalar_lea.smem %s0, 15
  %s31 = sld [smem:[%s30]]
  %s32 = scalar_lea.smem %s0, 16
  %s33 = sld [smem:[%s32]]
  %s34 = scalar_lea.smem %s0, 17
  %s35 = sld [smem:[%s34]]
  %s36 = scalar_lea.smem %s0, 18
  %s37 = sld [smem:[%s36]]
  %s38 = scalar_lea.smem %s0, 19
  %s39 = sld [smem:[%s38]]
  %s40 = scalar_lea.smem %s0, 20
  %s41 = sld [smem:[%s40]]
  %s42 = scalar_lea.smem %s0, 21
  %s43 = sld [smem:[%s42]]
  %s44 = scalar_lea.smem %s0, 22
  %s45 = sld [smem:[%s44]]
  %s46 = scalar_lea.smem %s0, 23
  %s47 = sld [smem:[%s46]]
  %s48 = scalar_lea.smem %s0, 24
  %s49 = sld [smem:[%s48]]
  %s50 = scalar_lea.smem %s0, 25
  %s51 = sld [smem:[%s50]]
  %s52 = scalar_lea.smem %s0, 26
  %s53 = sld [smem:[%s52]]
  %s54 = scalar_lea.smem %s0, 27
  %s55 = sld [smem:[%s54]]
  %s56 = scalar_lea.smem %s0, 28
  %s57 = sld [smem:[%s56]]
  %s58 = scalar_lea.smem %s0, 29
  %s59 = sld [smem:[%s58]]
  %s60 = scalar_lea.smem %s0, 30
  %s61 = sld [smem:[%s60]]
  %s62 = scalar_lea.smem %s0, 31
  %s63 = sld [smem:[%s62]]
  %s64 = scalar_lea.smem %s0, 32
  %s65 = sld [smem:[%s64]]
  %s66 = scalar_lea.smem %s0, 33
  %s67 = sld [smem:[%s66]]
  %s68 = scalar_lea.smem %s0, 34
  %s69 = sld [smem:[%s68]]
  %s70 = scalar_lea.smem %s0, 35
  %s71 = sld [smem:[%s70]]
  %s72 = scalar_lea.smem %s0, 36
  %s73 = sld [smem:[%s72]]
  %s74 = scalar_lea.smem %s0, 37
  %s75 = sld [smem:[%s74]]
  %s76 = scalar_lea.smem %s0, 38
  %s77 = sld [smem:[%s76]]
  %s78 = scalar_lea.smem %s0, 39
  %s79 = sld [smem:[%s78]]
  %s80 = scalar_lea.smem %s0, 40
  %s81 = sld [smem:[%s80]]
  %s82 = scalar_lea.smem %s0, 41
  %s83 = sld [smem:[%s82]]
  %s84 = scalar_lea.smem %s0, 42
  %s85 = sld [smem:[%s84]]
  %s86 = scalar_lea.smem %s0, 43
  %s87 = sld [smem:[%s86]]
  %s88 = sld [smem:[#allocation0]]
  $region261: #{net_forward.1} parent=0
    _
  %s90 = ssub.s32 1, %s88
  %s91 = scalar_select 0, %s90, %s88
  $region1: #{net_forward.1} parent=0
    #allocation3 [shape = 'u8[1024]{0}', space=vmem, size = 0x400, scoped, tag = 'input window, operand 1']
    #allocation4 [shape = 's32[2]{0}', space=sflag, size = 0x8, scoped, tag = 'scoped memory for net_forward.1']
    #allocation5 [shape = 'u8[8192]{0}', space=vmem, size = 0x2000, scoped, tag = 'input window, operand 15, single buffered']
    #allocation6 [shape = 's32[1]{0}', space=sflag, size = 0x4, scoped, tag = 'scoped memory for net_forward.1']
    #allocation7 [shape = 'u8[16384]{0}', space=vmem, size = 0x4000, scoped, tag = 'input window, operand 16, single buffered']
    #allocation8 [shape = 'u8[16384]{0}', space=vmem, size = 0x4000, scoped, tag = 'input window, operand 17, single buffered']
    #allocation9 [shape = 's32[1]{0}', space=sflag, size = 0x4, scoped, tag = 'scoped memory for net_forward.1']
    #allocation10 [shape = 'u8[16384]{0}', space=vmem, size = 0x4000, scoped, tag = 'input window, operand 25, single buffered']
    #allocation11 [shape = 'u8[8192]{0}', space=vmem, size = 0x2000, scoped, tag = 'input window, operand 26, single buffered']
    #allocation12 [shape = 's32[1]{0}', space=sflag, size = 0x4, scoped, tag = 'scoped memory for net_forward.1']
    #allocation13 [shape = 'u8[8192]{0}', space=vmem, size = 0x2000, scoped, tag = 'input window, operand 27, single buffered']
    #allocation14 [shape = 'u8[8192]{0}', space=vmem, size = 0x2000, scoped, tag = 'input window, operand 29, single buffered']
    #allocation15 [shape = 's32[1]{0}', space=sflag, size = 0x4, scoped, tag = 'scoped memory for net_forward.1']
    #allocation16 [shape = 'u8[32768]{0}', space=vmem, size = 0x8000, scoped, tag = 'input window, operand 39']
    #allocation17 [shape = 'u8[32768]{0}', space=vmem, size = 0x8000, scoped, tag = 'input window, operand 41']
    #allocation18 [shape = 'u8[32768]{0}', space=vmem, size = 0x8000, scoped, tag = 'input window, operand 42']
    %92 = vsyncpa [#allocation4], 0
    %s93 = scalar_lea.sflag [#allocation4], 1
    %94 = vsyncpa %s93, 0
    %95 = vsyncpa [#allocation6], 0
    %96 = vsyncpa [#allocation9], 0
    %97 = vsyncpa [#allocation12], 0
    %98 = vsyncpa [#allocation15], 0
    loop: start=0, step=1, limit=10
    $region2: #{net_forward.1} parent=1 // loop_pre_header
      _
    $region3: #{net_forward.1} parent=1 // loop_header
      %s100 = sphi 0, %s104
      %p101 = scmp.ge.s32.totalorder %s100, 10
      %s107 = sphi 0, %s119
      %s108 = sphi 0, %s115
      %s109 = sphi 0, %s107
      %s110 = sphi 0, %s108
      %s111 = sphi 0, %s109
      %s112 = sphi 0, %s110
      %s122 = sphi 0, %s124
      %s125 = sphi 0, %s122
      %s126 = sphi 0, %s125
      %s142 = sphi 0, %s126
      %s148 = sphi 0, %s150
      %s151 = sphi 0, %s148
      %s152 = sphi 0, %s151
      %s168 = sphi 0, %s152
      %s172 = sphi 0, %s172
      %s174 = sphi 0, %s172
      %s175 = sphi 0, %s174
      %s189 = sphi 0, %s175
      %s193 = sphi 0, %s193
      %s195 = sphi 0, %s193
      %s196 = sphi 0, %s195
      %s210 = sphi 0, %s196
      %s214 = sphi 0, %s214
      %s216 = sphi 0, %s214
      %s217 = sphi 0, %s216
      %s231 = sphi 0, %s217
      %s235 = sphi 0, %s235
      %s237 = sphi 0, %s235
      %s238 = sphi 0, %s237
      %s252 = sphi 0, %s238
      %s256 = sphi 0, %s256
      %s258 = sphi 0, %s256
      %s259 = sphi 0, %s258
      %s273 = sphi 0, %s259
      %s277 = sphi 0, %s277
      %s279 = sphi 0, %s277
      %s280 = sphi 0, %s279
      %s294 = sphi 0, %s280
      %s298 = sphi 0, %s298
      %s300 = sphi 0, %s298
      %s301 = sphi 0, %s300
      %s315 = sphi 0, %s301
      %s319 = sphi 0, %s319
      %s321 = sphi 0, %s319
      %s322 = sphi 0, %s321
      %s336 = sphi 0, %s322
      %s340 = sphi 0, %s340
      %s342 = sphi 0, %s340
      %s343 = sphi 0, %s342
      %s357 = sphi 0, %s343
      %s361 = sphi 0, %s361
      %s363 = sphi 0, %s361
      %s364 = sphi 0, %s363
      %s378 = sphi 0, %s364
      %s382 = sphi 0, %s382
      %s384 = sphi 0, %s382
      %s385 = sphi 0, %s384
      %s399 = sphi 0, %s385
      %s403 = sphi 0, %s403
      %s405 = sphi 0, %s403
      %s406 = sphi 0, %s405
      %s420 = sphi 0, %s406
      %s424 = sphi 0, %s424
      %s426 = sphi 0, %s424
      %s427 = sphi 0, %s426
      %s441 = sphi 0, %s427
      %s445 = sphi 0, %s445
      %s447 = sphi 0, %s445
      %s448 = sphi 0, %s447
      %s462 = sphi 0, %s448
      %s466 = sphi 0, %s466
      %s468 = sphi 0, %s466
      %s469 = sphi 0, %s468
      %s483 = sphi 0, %s469
      %s487 = sphi 0, %s487
      %s489 = sphi 0, %s487
      %s490 = sphi 0, %s489
      %s504 = sphi 0, %s490
      %s508 = sphi 0, %s508
      %s510 = sphi 0, %s508
      %s511 = sphi 0, %s510
      %s525 = sphi 0, %s511
      %s529 = sphi 0, %s529
      %s531 = sphi 0, %s529
      %s532 = sphi 0, %s531
      %s546 = sphi 0, %s532
      %s550 = sphi 0, %s550
      %s552 = sphi 0, %s550
      %s553 = sphi 0, %s552
      %s567 = sphi 0, %s553
      %s571 = sphi 0, %s571
      %s573 = sphi 0, %s571
      %s574 = sphi 0, %s573
      %s588 = sphi 0, %s574
      %s592 = sphi 0, %s592
      %s594 = sphi 0, %s592
      %s595 = sphi 0, %s594
      %s609 = sphi 0, %s595
      %s613 = sphi 0, %s613
      %s615 = sphi 0, %s613
      %s616 = sphi 0, %s615
      %s630 = sphi 0, %s616
      %s634 = sphi 0, %s634
      %s636 = sphi 0, %s634
      %s637 = sphi 0, %s636
      %s651 = sphi 0, %s637
      %s655 = sphi 0, %s655
      %s657 = sphi 0, %s655
      %s658 = sphi 0, %s657
      %s672 = sphi 0, %s658
      %s676 = sphi 0, %s676
      %s678 = sphi 0, %s676
      %s679 = sphi 0, %s678
      %s693 = sphi 0, %s679
      %s697 = sphi 0, %s697
      %s699 = sphi 0, %s697
      %s700 = sphi 0, %s699
      %s714 = sphi 0, %s700
      %s718 = sphi 0, %s718
      %s720 = sphi 0, %s718
      %s721 = sphi 0, %s720
      %s735 = sphi 0, %s721
      %s739 = sphi 0, %s739
      %s741 = sphi 0, %s739
      %s742 = sphi 0, %s741
      %s756 = sphi 0, %s742
      %s760 = sphi 0, %s760
      %s762 = sphi 0, %s760
      %s763 = sphi 0, %s762
      %s777 = sphi 0, %s763
      %s793 = sphi 0, %s795
      %s796 = sphi 0, %s793
      %s797 = sphi 0, %s796
      %s813 = sphi 0, %s797
      %s829 = sphi 0, %s831
      %s832 = sphi 0, %s829
      %s833 = sphi 0, %s832
      %s849 = sphi 0, %s833
      %s865 = sphi 0, %s867
      %s868 = sphi 0, %s865
      %s869 = sphi 0, %s868
      %s885 = sphi 0, %s869
      %s901 = sphi 0, %s903
      %s904 = sphi 0, %s901
      %s905 = sphi 0, %s904
      %s921 = sphi 0, %s905
      %s937 = sphi 0, %s939
      %s940 = sphi 0, %s937
      %s941 = sphi 0, %s940
      %s957 = sphi 0, %s941
      %s973 = sphi 0, %s975
      %s976 = sphi 0, %s973
      %s977 = sphi 0, %s976
      %s993 = sphi 0, %s977
      %s1009 = sphi 0, %s1011
      %s1012 = sphi 0, %s1009
      %s1013 = sphi 0, %s1012
      %s1029 = sphi 0, %s1013
      %s1045 = sphi 0, %s1047
      %s1048 = sphi 0, %s1045
      %s1049 = sphi 0, %s1048
      %s1065 = sphi 0, %s1049
      %s1081 = sphi 0, %s1083
      %s1084 = sphi 0, %s1081
      %s1085 = sphi 0, %s1084
      %s1101 = sphi 0, %s1085
      %s1117 = sphi 0, %s1119
      %s1120 = sphi 0, %s1117
      %s1121 = sphi 0, %s1120
      %s1137 = sphi 0, %s1121
      %s1153 = sphi 0, %s1155
      %s1156 = sphi 0, %s1153
      %s1157 = sphi 0, %s1156
      %s1173 = sphi 0, %s1157
      %s1189 = sphi 0, %s1191
      %s1192 = sphi 0, %s1189
      %s1193 = sphi 0, %s1192
      %s1209 = sphi 0, %s1193
      %s1215 = sphi 0, %s1217
      %s1218 = sphi 0, %s1215
      %s1219 = sphi 0, %s1218
      %s1235 = sphi 0, %s1219
    $region4: #{net_forward.1} parent=1 // loop_header_branch
      %103 = sbr.rel (%p101) target = $region8
    $region5: #{net_forward.1} parent=1 // loop_body
      %s105 = ssub.s32 %s100, 1
      %s106 = ssub.s32 %s100, 2
      %s113 = sadd.s32 1, %s108
      %p114 = scmp.ge.s32.totalorder %s113, 4
      %s115 = scalar_select %p114, 0, %s113
      %s116 = sadd.s32 1, %s107
      %s117 = scalar_select %p114, %s116, %s107
      %p118 = scmp.ge.s32.totalorder %s117, 2
      %s119 = scalar_select %p118, 0, %s117
      %s120 = ssub.s32 %s107, %s119
      %p121 = scmp.eq.s32.totalorder %s120, 0
      %s123 = sadd.s32 %s122, 1
      %s124 = scalar_select %p121, %s122, %s123
      %p127 = pneg %p121
      %p128 = scmp.eq.s32.totalorder %s100, 7
      %p129 = por %p127, %p128
      %p130 = scmp.ne.s32.totalorder %s122, %s125
      %p131 = scmp.eq.s32.totalorder %s100, 0
      %p132 = por %p130, %p131
      %p133 = scmp.ne.s32.totalorder %s122, %s125
      %p134 = scmp.eq.s32.totalorder %s105, 7
      %p135 = por %p133, %p134
      %p136 = scmp.ne.s32.totalorder %s125, %s126
      %p137 = scmp.eq.s32.totalorder %s105, 0
      %p138 = por %p136, %p137
      %p139 = scmp.ne.s32.totalorder %s125, %s126
      %p140 = scmp.eq.s32.totalorder %s106, 7
      %p141 = por %p139, %p140
      %p143 = scmp.ne.s32.totalorder %s126, %s142
      %p144 = scmp.eq.s32.totalorder %s106, 0
      %p145 = por %p143, %p144
      %s146 = ssub.s32 %s107, %s119
      %p147 = scmp.eq.s32.totalorder %s146, 0
      %s149 = sadd.s32 %s148, 1
      %s150 = scalar_select %p147, %s148, %s149
      %p153 = pneg %p147
      %p154 = scmp.eq.s32.totalorder %s100, 7
      %p155 = por %p153, %p154
      %p156 = scmp.ne.s32.totalorder %s148, %s151
      %p157 = scmp.eq.s32.totalorder %s100, 0
      %p158 = por %p156, %p157
      %p159 = scmp.ne.s32.totalorder %s148, %s151
      %p160 = scmp.eq.s32.totalorder %s105, 7
      %p161 = por %p159, %p160
      %p162 = scmp.ne.s32.totalorder %s151, %s152
      %p163 = scmp.eq.s32.totalorder %s105, 0
      %p164 = por %p162, %p163
      %p165 = scmp.ne.s32.totalorder %s151, %s152
      %p166 = scmp.eq.s32.totalorder %s106, 7
      %p167 = por %p165, %p166
      %p169 = scmp.ne.s32.totalorder %s152, %s168
      %p170 = scmp.eq.s32.totalorder %s106, 0
      %p171 = por %p169, %p170
      %s173 = sadd.s32 %s172, 1
      %p176 = scmp.eq.s32.totalorder %s100, 7
      %p177 = scmp.ne.s32.totalorder %s172, %s174
      %p178 = scmp.eq.s32.totalorder %s100, 0
      %p179 = por %p177, %p178
      %p180 = scmp.ne.s32.totalorder %s172, %s174
      %p181 = scmp.eq.s32.totalorder %s105, 7
      %p182 = por %p180, %p181
      %p183 = scmp.ne.s32.totalorder %s174, %s175
      %p184 = scmp.eq.s32.totalorder %s105, 0
      %p185 = por %p183, %p184
      %p186 = scmp.ne.s32.totalorder %s174, %s175
      %p187 = scmp.eq.s32.totalorder %s106, 7
      %p188 = por %p186, %p187
      %p190 = scmp.ne.s32.totalorder %s175, %s189
      %p191 = scmp.eq.s32.totalorder %s106, 0
      %p192 = por %p190, %p191
      %s194 = sadd.s32 %s193, 1
      %p197 = scmp.eq.s32.totalorder %s100, 7
      %p198 = scmp.ne.s32.totalorder %s193, %s195
      %p199 = scmp.eq.s32.totalorder %s100, 0
      %p200 = por %p198, %p199
      %p201 = scmp.ne.s32.totalorder %s193, %s195
      %p202 = scmp.eq.s32.totalorder %s105, 7
      %p203 = por %p201, %p202
      %p204 = scmp.ne.s32.totalorder %s195, %s196
      %p205 = scmp.eq.s32.totalorder %s105, 0
      %p206 = por %p204, %p205
      %p207 = scmp.ne.s32.totalorder %s195, %s196
      %p208 = scmp.eq.s32.totalorder %s106, 7
      %p209 = por %p207, %p208
      %p211 = scmp.ne.s32.totalorder %s196, %s210
      %p212 = scmp.eq.s32.totalorder %s106, 0
      %p213 = por %p211, %p212
      %s215 = sadd.s32 %s214, 1
      %p218 = scmp.eq.s32.totalorder %s100, 7
      %p219 = scmp.ne.s32.totalorder %s214, %s216
      %p220 = scmp.eq.s32.totalorder %s100, 0
      %p221 = por %p219, %p220
      %p222 = scmp.ne.s32.totalorder %s214, %s216
      %p223 = scmp.eq.s32.totalorder %s105, 7
      %p224 = por %p222, %p223
      %p225 = scmp.ne.s32.totalorder %s216, %s217
      %p226 = scmp.eq.s32.totalorder %s105, 0
      %p227 = por %p225, %p226
      %p228 = scmp.ne.s32.totalorder %s216, %s217
      %p229 = scmp.eq.s32.totalorder %s106, 7
      %p230 = por %p228, %p229
      %p232 = scmp.ne.s32.totalorder %s217, %s231
      %p233 = scmp.eq.s32.totalorder %s106, 0
      %p234 = por %p232, %p233
      %s236 = sadd.s32 %s235, 1
      %p239 = scmp.eq.s32.totalorder %s100, 7
      %p240 = scmp.ne.s32.totalorder %s235, %s237
      %p241 = scmp.eq.s32.totalorder %s100, 0
      %p242 = por %p240, %p241
      %p243 = scmp.ne.s32.totalorder %s235, %s237
      %p244 = scmp.eq.s32.totalorder %s105, 7
      %p245 = por %p243, %p244
      %p246 = scmp.ne.s32.totalorder %s237, %s238
      %p247 = scmp.eq.s32.totalorder %s105, 0
      %p248 = por %p246, %p247
      %p249 = scmp.ne.s32.totalorder %s237, %s238
      %p250 = scmp.eq.s32.totalorder %s106, 7
      %p251 = por %p249, %p250
      %p253 = scmp.ne.s32.totalorder %s238, %s252
      %p254 = scmp.eq.s32.totalorder %s106, 0
      %p255 = por %p253, %p254
      %s257 = sadd.s32 %s256, 1
      %p260 = scmp.eq.s32.totalorder %s100, 7
      %p261 = scmp.ne.s32.totalorder %s256, %s258
      %p262 = scmp.eq.s32.totalorder %s100, 0
      %p263 = por %p261, %p262
      %p264 = scmp.ne.s32.totalorder %s256, %s258
      %p265 = scmp.eq.s32.totalorder %s105, 7
      %p266 = por %p264, %p265
      %p267 = scmp.ne.s32.totalorder %s258, %s259
      %p268 = scmp.eq.s32.totalorder %s105, 0
      %p269 = por %p267, %p268
      %p270 = scmp.ne.s32.totalorder %s258, %s259
      %p271 = scmp.eq.s32.totalorder %s106, 7
      %p272 = por %p270, %p271
      %p274 = scmp.ne.s32.totalorder %s259, %s273
      %p275 = scmp.eq.s32.totalorder %s106, 0
      %p276 = por %p274, %p275
      %s278 = sadd.s32 %s277, 1
      %p281 = scmp.eq.s32.totalorder %s100, 7
      %p282 = scmp.ne.s32.totalorder %s277, %s279
      %p283 = scmp.eq.s32.totalorder %s100, 0
      %p284 = por %p282, %p283
      %p285 = scmp.ne.s32.totalorder %s277, %s279
      %p286 = scmp.eq.s32.totalorder %s105, 7
      %p287 = por %p285, %p286
      %p288 = scmp.ne.s32.totalorder %s279, %s280
      %p289 = scmp.eq.s32.totalorder %s105, 0
      %p290 = por %p288, %p289
      %p291 = scmp.ne.s32.totalorder %s279, %s280
      %p292 = scmp.eq.s32.totalorder %s106, 7
      %p293 = por %p291, %p292
      %p295 = scmp.ne.s32.totalorder %s280, %s294
      %p296 = scmp.eq.s32.totalorder %s106, 0
      %p297 = por %p295, %p296
      %s299 = sadd.s32 %s298, 1
      %p302 = scmp.eq.s32.totalorder %s100, 7
      %p303 = scmp.ne.s32.totalorder %s298, %s300
      %p304 = scmp.eq.s32.totalorder %s100, 0
      %p305 = por %p303, %p304
      %p306 = scmp.ne.s32.totalorder %s298, %s300
      %p307 = scmp.eq.s32.totalorder %s105, 7
      %p308 = por %p306, %p307
      %p309 = scmp.ne.s32.totalorder %s300, %s301
      %p310 = scmp.eq.s32.totalorder %s105, 0
      %p311 = por %p309, %p310
      %p312 = scmp.ne.s32.totalorder %s300, %s301
      %p313 = scmp.eq.s32.totalorder %s106, 7
      %p314 = por %p312, %p313
      %p316 = scmp.ne.s32.totalorder %s301, %s315
      %p317 = scmp.eq.s32.totalorder %s106, 0
      %p318 = por %p316, %p317
      %s320 = sadd.s32 %s319, 1
      %p323 = scmp.eq.s32.totalorder %s100, 7
      %p324 = scmp.ne.s32.totalorder %s319, %s321
      %p325 = scmp.eq.s32.totalorder %s100, 0
      %p326 = por %p324, %p325
      %p327 = scmp.ne.s32.totalorder %s319, %s321
      %p328 = scmp.eq.s32.totalorder %s105, 7
      %p329 = por %p327, %p328
      %p330 = scmp.ne.s32.totalorder %s321, %s322
      %p331 = scmp.eq.s32.totalorder %s105, 0
      %p332 = por %p330, %p331
      %p333 = scmp.ne.s32.totalorder %s321, %s322
      %p334 = scmp.eq.s32.totalorder %s106, 7
      %p335 = por %p333, %p334
      %p337 = scmp.ne.s32.totalorder %s322, %s336
      %p338 = scmp.eq.s32.totalorder %s106, 0
      %p339 = por %p337, %p338
      %s341 = sadd.s32 %s340, 1
      %p344 = scmp.eq.s32.totalorder %s100, 7
      %p345 = scmp.ne.s32.totalorder %s340, %s342
      %p346 = scmp.eq.s32.totalorder %s100, 0
      %p347 = por %p345, %p346
      %p348 = scmp.ne.s32.totalorder %s340, %s342
      %p349 = scmp.eq.s32.totalorder %s105, 7
      %p350 = por %p348, %p349
      %p351 = scmp.ne.s32.totalorder %s342, %s343
      %p352 = scmp.eq.s32.totalorder %s105, 0
      %p353 = por %p351, %p352
      %p354 = scmp.ne.s32.totalorder %s342, %s343
      %p355 = scmp.eq.s32.totalorder %s106, 7
      %p356 = por %p354, %p355
      %p358 = scmp.ne.s32.totalorder %s343, %s357
      %p359 = scmp.eq.s32.totalorder %s106, 0
      %p360 = por %p358, %p359
      %s362 = sadd.s32 %s361, 1
      %p365 = scmp.eq.s32.totalorder %s100, 7
      %p366 = scmp.ne.s32.totalorder %s361, %s363
      %p367 = scmp.eq.s32.totalorder %s100, 0
      %p368 = por %p366, %p367
      %p369 = scmp.ne.s32.totalorder %s361, %s363
      %p370 = scmp.eq.s32.totalorder %s105, 7
      %p371 = por %p369, %p370
      %p372 = scmp.ne.s32.totalorder %s363, %s364
      %p373 = scmp.eq.s32.totalorder %s105, 0
      %p374 = por %p372, %p373
      %p375 = scmp.ne.s32.totalorder %s363, %s364
      %p376 = scmp.eq.s32.totalorder %s106, 7
      %p377 = por %p375, %p376
      %p379 = scmp.ne.s32.totalorder %s364, %s378
      %p380 = scmp.eq.s32.totalorder %s106, 0
      %p381 = por %p379, %p380
      %s383 = sadd.s32 %s382, 1
      %p386 = scmp.eq.s32.totalorder %s100, 7
      %p387 = scmp.ne.s32.totalorder %s382, %s384
      %p388 = scmp.eq.s32.totalorder %s100, 0
      %p389 = por %p387, %p388
      %p390 = scmp.ne.s32.totalorder %s382, %s384
      %p391 = scmp.eq.s32.totalorder %s105, 7
      %p392 = por %p390, %p391
      %p393 = scmp.ne.s32.totalorder %s384, %s385
      %p394 = scmp.eq.s32.totalorder %s105, 0
      %p395 = por %p393, %p394
      %p396 = scmp.ne.s32.totalorder %s384, %s385
      %p397 = scmp.eq.s32.totalorder %s106, 7
      %p398 = por %p396, %p397
      %p400 = scmp.ne.s32.totalorder %s385, %s399
      %p401 = scmp.eq.s32.totalorder %s106, 0
      %p402 = por %p400, %p401
      %s404 = sadd.s32 %s403, 1
      %p407 = scmp.eq.s32.totalorder %s100, 7
      %p408 = scmp.ne.s32.totalorder %s403, %s405
      %p409 = scmp.eq.s32.totalorder %s100, 0
      %p410 = por %p408, %p409
      %p411 = scmp.ne.s32.totalorder %s403, %s405
      %p412 = scmp.eq.s32.totalorder %s105, 7
      %p413 = por %p411, %p412
      %p414 = scmp.ne.s32.totalorder %s405, %s406
      %p415 = scmp.eq.s32.totalorder %s105, 0
      %p416 = por %p414, %p415
      %p417 = scmp.ne.s32.totalorder %s405, %s406
      %p418 = scmp.eq.s32.totalorder %s106, 7
      %p419 = por %p417, %p418
      %p421 = scmp.ne.s32.totalorder %s406, %s420
      %p422 = scmp.eq.s32.totalorder %s106, 0
      %p423 = por %p421, %p422
      %s425 = sadd.s32 %s424, 1
      %p428 = scmp.eq.s32.totalorder %s100, 7
      %p429 = scmp.ne.s32.totalorder %s424, %s426
      %p430 = scmp.eq.s32.totalorder %s100, 0
      %p431 = por %p429, %p430
      %p432 = scmp.ne.s32.totalorder %s424, %s426
      %p433 = scmp.eq.s32.totalorder %s105, 7
      %p434 = por %p432, %p433
      %p435 = scmp.ne.s32.totalorder %s426, %s427
      %p436 = scmp.eq.s32.totalorder %s105, 0
      %p437 = por %p435, %p436
      %p438 = scmp.ne.s32.totalorder %s426, %s427
      %p439 = scmp.eq.s32.totalorder %s106, 7
      %p440 = por %p438, %p439
      %p442 = scmp.ne.s32.totalorder %s427, %s441
      %p443 = scmp.eq.s32.totalorder %s106, 0
      %p444 = por %p442, %p443
      %s446 = sadd.s32 %s445, 1
      %p449 = scmp.eq.s32.totalorder %s100, 7
      %p450 = scmp.ne.s32.totalorder %s445, %s447
      %p451 = scmp.eq.s32.totalorder %s100, 0
      %p452 = por %p450, %p451
      %p453 = scmp.ne.s32.totalorder %s445, %s447
      %p454 = scmp.eq.s32.totalorder %s105, 7
      %p455 = por %p453, %p454
      %p456 = scmp.ne.s32.totalorder %s447, %s448
      %p457 = scmp.eq.s32.totalorder %s105, 0
      %p458 = por %p456, %p457
      %p459 = scmp.ne.s32.totalorder %s447, %s448
      %p460 = scmp.eq.s32.totalorder %s106, 7
      %p461 = por %p459, %p460
      %p463 = scmp.ne.s32.totalorder %s448, %s462
      %p464 = scmp.eq.s32.totalorder %s106, 0
      %p465 = por %p463, %p464
      %s467 = sadd.s32 %s466, 1
      %p470 = scmp.eq.s32.totalorder %s100, 7
      %p471 = scmp.ne.s32.totalorder %s466, %s468
      %p472 = scmp.eq.s32.totalorder %s100, 0
      %p473 = por %p471, %p472
      %p474 = scmp.ne.s32.totalorder %s466, %s468
      %p475 = scmp.eq.s32.totalorder %s105, 7
      %p476 = por %p474, %p475
      %p477 = scmp.ne.s32.totalorder %s468, %s469
      %p478 = scmp.eq.s32.totalorder %s105, 0
      %p479 = por %p477, %p478
      %p480 = scmp.ne.s32.totalorder %s468, %s469
      %p481 = scmp.eq.s32.totalorder %s106, 7
      %p482 = por %p480, %p481
      %p484 = scmp.ne.s32.totalorder %s469, %s483
      %p485 = scmp.eq.s32.totalorder %s106, 0
      %p486 = por %p484, %p485
      %s488 = sadd.s32 %s487, 1
      %p491 = scmp.eq.s32.totalorder %s100, 7
      %p492 = scmp.ne.s32.totalorder %s487, %s489
      %p493 = scmp.eq.s32.totalorder %s100, 0
      %p494 = por %p492, %p493
      %p495 = scmp.ne.s32.totalorder %s487, %s489
      %p496 = scmp.eq.s32.totalorder %s105, 7
      %p497 = por %p495, %p496
      %p498 = scmp.ne.s32.totalorder %s489, %s490
      %p499 = scmp.eq.s32.totalorder %s105, 0
      %p500 = por %p498, %p499
      %p501 = scmp.ne.s32.totalorder %s489, %s490
      %p502 = scmp.eq.s32.totalorder %s106, 7
      %p503 = por %p501, %p502
      %p505 = scmp.ne.s32.totalorder %s490, %s504
      %p506 = scmp.eq.s32.totalorder %s106, 0
      %p507 = por %p505, %p506
      %s509 = sadd.s32 %s508, 1
      %p512 = scmp.eq.s32.totalorder %s100, 7
      %p513 = scmp.ne.s32.totalorder %s508, %s510
      %p514 = scmp.eq.s32.totalorder %s100, 0
      %p515 = por %p513, %p514
      %p516 = scmp.ne.s32.totalorder %s508, %s510
      %p517 = scmp.eq.s32.totalorder %s105, 7
      %p518 = por %p516, %p517
      %p519 = scmp.ne.s32.totalorder %s510, %s511
      %p520 = scmp.eq.s32.totalorder %s105, 0
      %p521 = por %p519, %p520
      %p522 = scmp.ne.s32.totalorder %s510, %s511
      %p523 = scmp.eq.s32.totalorder %s106, 7
      %p524 = por %p522, %p523
      %p526 = scmp.ne.s32.totalorder %s511, %s525
      %p527 = scmp.eq.s32.totalorder %s106, 0
      %p528 = por %p526, %p527
      %s530 = sadd.s32 %s529, 1
      %p533 = scmp.eq.s32.totalorder %s100, 7
      %p534 = scmp.ne.s32.totalorder %s529, %s531
      %p535 = scmp.eq.s32.totalorder %s100, 0
      %p536 = por %p534, %p535
      %p537 = scmp.ne.s32.totalorder %s529, %s531
      %p538 = scmp.eq.s32.totalorder %s105, 7
      %p539 = por %p537, %p538
      %p540 = scmp.ne.s32.totalorder %s531, %s532
      %p541 = scmp.eq.s32.totalorder %s105, 0
      %p542 = por %p540, %p541
      %p543 = scmp.ne.s32.totalorder %s531, %s532
      %p544 = scmp.eq.s32.totalorder %s106, 7
      %p545 = por %p543, %p544
      %p547 = scmp.ne.s32.totalorder %s532, %s546
      %p548 = scmp.eq.s32.totalorder %s106, 0
      %p549 = por %p547, %p548
      %s551 = sadd.s32 %s550, 1
      %p554 = scmp.eq.s32.totalorder %s100, 7
      %p555 = scmp.ne.s32.totalorder %s550, %s552
      %p556 = scmp.eq.s32.totalorder %s100, 0
      %p557 = por %p555, %p556
      %p558 = scmp.ne.s32.totalorder %s550, %s552
      %p559 = scmp.eq.s32.totalorder %s105, 7
      %p560 = por %p558, %p559
      %p561 = scmp.ne.s32.totalorder %s552, %s553
      %p562 = scmp.eq.s32.totalorder %s105, 0
      %p563 = por %p561, %p562
      %p564 = scmp.ne.s32.totalorder %s552, %s553
      %p565 = scmp.eq.s32.totalorder %s106, 7
      %p566 = por %p564, %p565
      %p568 = scmp.ne.s32.totalorder %s553, %s567
      %p569 = scmp.eq.s32.totalorder %s106, 0
      %p570 = por %p568, %p569
      %s572 = sadd.s32 %s571, 1
      %p575 = scmp.eq.s32.totalorder %s100, 7
      %p576 = scmp.ne.s32.totalorder %s571, %s573
      %p577 = scmp.eq.s32.totalorder %s100, 0
      %p578 = por %p576, %p577
      %p579 = scmp.ne.s32.totalorder %s571, %s573
      %p580 = scmp.eq.s32.totalorder %s105, 7
      %p581 = por %p579, %p580
      %p582 = scmp.ne.s32.totalorder %s573, %s574
      %p583 = scmp.eq.s32.totalorder %s105, 0
      %p584 = por %p582, %p583
      %p585 = scmp.ne.s32.totalorder %s573, %s574
      %p586 = scmp.eq.s32.totalorder %s106, 7
      %p587 = por %p585, %p586
      %p589 = scmp.ne.s32.totalorder %s574, %s588
      %p590 = scmp.eq.s32.totalorder %s106, 0
      %p591 = por %p589, %p590
      %s593 = sadd.s32 %s592, 1
      %p596 = scmp.eq.s32.totalorder %s100, 7
      %p597 = scmp.ne.s32.totalorder %s592, %s594
      %p598 = scmp.eq.s32.totalorder %s100, 0
      %p599 = por %p597, %p598
      %p600 = scmp.ne.s32.totalorder %s592, %s594
      %p601 = scmp.eq.s32.totalorder %s105, 7
      %p602 = por %p600, %p601
      %p603 = scmp.ne.s32.totalorder %s594, %s595
      %p604 = scmp.eq.s32.totalorder %s105, 0
      %p605 = por %p603, %p604
      %p606 = scmp.ne.s32.totalorder %s594, %s595
      %p607 = scmp.eq.s32.totalorder %s106, 7
      %p608 = por %p606, %p607
      %p610 = scmp.ne.s32.totalorder %s595, %s609
      %p611 = scmp.eq.s32.totalorder %s106, 0
      %p612 = por %p610, %p611
      %s614 = sadd.s32 %s613, 1
      %p617 = scmp.eq.s32.totalorder %s100, 7
      %p618 = scmp.ne.s32.totalorder %s613, %s615
      %p619 = scmp.eq.s32.totalorder %s100, 0
      %p620 = por %p618, %p619
      %p621 = scmp.ne.s32.totalorder %s613, %s615
      %p622 = scmp.eq.s32.totalorder %s105, 7
      %p623 = por %p621, %p622
      %p624 = scmp.ne.s32.totalorder %s615, %s616
      %p625 = scmp.eq.s32.totalorder %s105, 0
      %p626 = por %p624, %p625
      %p627 = scmp.ne.s32.totalorder %s615, %s616
      %p628 = scmp.eq.s32.totalorder %s106, 7
      %p629 = por %p627, %p628
      %p631 = scmp.ne.s32.totalorder %s616, %s630
      %p632 = scmp.eq.s32.totalorder %s106, 0
      %p633 = por %p631, %p632
      %s635 = sadd.s32 %s634, 1
      %p638 = scmp.eq.s32.totalorder %s100, 7
      %p639 = scmp.ne.s32.totalorder %s634, %s636
      %p640 = scmp.eq.s32.totalorder %s100, 0
      %p641 = por %p639, %p640
      %p642 = scmp.ne.s32.totalorder %s634, %s636
      %p643 = scmp.eq.s32.totalorder %s105, 7
      %p644 = por %p642, %p643
      %p645 = scmp.ne.s32.totalorder %s636, %s637
      %p646 = scmp.eq.s32.totalorder %s105, 0
      %p647 = por %p645, %p646
      %p648 = scmp.ne.s32.totalorder %s636, %s637
      %p649 = scmp.eq.s32.totalorder %s106, 7
      %p650 = por %p648, %p649
      %p652 = scmp.ne.s32.totalorder %s637, %s651
      %p653 = scmp.eq.s32.totalorder %s106, 0
      %p654 = por %p652, %p653
      %s656 = sadd.s32 %s655, 1
      %p659 = scmp.eq.s32.totalorder %s100, 7
      %p660 = scmp.ne.s32.totalorder %s655, %s657
      %p661 = scmp.eq.s32.totalorder %s100, 0
      %p662 = por %p660, %p661
      %p663 = scmp.ne.s32.totalorder %s655, %s657
      %p664 = scmp.eq.s32.totalorder %s105, 7
      %p665 = por %p663, %p664
      %p666 = scmp.ne.s32.totalorder %s657, %s658
      %p667 = scmp.eq.s32.totalorder %s105, 0
      %p668 = por %p666, %p667
      %p669 = scmp.ne.s32.totalorder %s657, %s658
      %p670 = scmp.eq.s32.totalorder %s106, 7
      %p671 = por %p669, %p670
      %p673 = scmp.ne.s32.totalorder %s658, %s672
      %p674 = scmp.eq.s32.totalorder %s106, 0
      %p675 = por %p673, %p674
      %s677 = sadd.s32 %s676, 1
      %p680 = scmp.eq.s32.totalorder %s100, 7
      %p681 = scmp.ne.s32.totalorder %s676, %s678
      %p682 = scmp.eq.s32.totalorder %s100, 0
      %p683 = por %p681, %p682
      %p684 = scmp.ne.s32.totalorder %s676, %s678
      %p685 = scmp.eq.s32.totalorder %s105, 7
      %p686 = por %p684, %p685
      %p687 = scmp.ne.s32.totalorder %s678, %s679
      %p688 = scmp.eq.s32.totalorder %s105, 0
      %p689 = por %p687, %p688
      %p690 = scmp.ne.s32.totalorder %s678, %s679
      %p691 = scmp.eq.s32.totalorder %s106, 7
      %p692 = por %p690, %p691
      %p694 = scmp.ne.s32.totalorder %s679, %s693
      %p695 = scmp.eq.s32.totalorder %s106, 0
      %p696 = por %p694, %p695
      %s698 = sadd.s32 %s697, 1
      %p701 = scmp.eq.s32.totalorder %s100, 7
      %p702 = scmp.ne.s32.totalorder %s697, %s699
      %p703 = scmp.eq.s32.totalorder %s100, 0
      %p704 = por %p702, %p703
      %p705 = scmp.ne.s32.totalorder %s697, %s699
      %p706 = scmp.eq.s32.totalorder %s105, 7
      %p707 = por %p705, %p706
      %p708 = scmp.ne.s32.totalorder %s699, %s700
      %p709 = scmp.eq.s32.totalorder %s105, 0
      %p710 = por %p708, %p709
      %p711 = scmp.ne.s32.totalorder %s699, %s700
      %p712 = scmp.eq.s32.totalorder %s106, 7
      %p713 = por %p711, %p712
      %p715 = scmp.ne.s32.totalorder %s700, %s714
      %p716 = scmp.eq.s32.totalorder %s106, 0
      %p717 = por %p715, %p716
      %s719 = sadd.s32 %s718, 1
      %p722 = scmp.eq.s32.totalorder %s100, 7
      %p723 = scmp.ne.s32.totalorder %s718, %s720
      %p724 = scmp.eq.s32.totalorder %s100, 0
      %p725 = por %p723, %p724
      %p726 = scmp.ne.s32.totalorder %s718, %s720
      %p727 = scmp.eq.s32.totalorder %s105, 7
      %p728 = por %p726, %p727
      %p729 = scmp.ne.s32.totalorder %s720, %s721
      %p730 = scmp.eq.s32.totalorder %s105, 0
      %p731 = por %p729, %p730
      %p732 = scmp.ne.s32.totalorder %s720, %s721
      %p733 = scmp.eq.s32.totalorder %s106, 7
      %p734 = por %p732, %p733
      %p736 = scmp.ne.s32.totalorder %s721, %s735
      %p737 = scmp.eq.s32.totalorder %s106, 0
      %p738 = por %p736, %p737
      %s740 = sadd.s32 %s739, 1
      %p743 = scmp.eq.s32.totalorder %s100, 7
      %p744 = scmp.ne.s32.totalorder %s739, %s741
      %p745 = scmp.eq.s32.totalorder %s100, 0
      %p746 = por %p744, %p745
      %p747 = scmp.ne.s32.totalorder %s739, %s741
      %p748 = scmp.eq.s32.totalorder %s105, 7
      %p749 = por %p747, %p748
      %p750 = scmp.ne.s32.totalorder %s741, %s742
      %p751 = scmp.eq.s32.totalorder %s105, 0
      %p752 = por %p750, %p751
      %p753 = scmp.ne.s32.totalorder %s741, %s742
      %p754 = scmp.eq.s32.totalorder %s106, 7
      %p755 = por %p753, %p754
      %p757 = scmp.ne.s32.totalorder %s742, %s756
      %p758 = scmp.eq.s32.totalorder %s106, 0
      %p759 = por %p757, %p758
      %s761 = sadd.s32 %s760, 1
      %p764 = scmp.eq.s32.totalorder %s100, 7
      %p765 = scmp.ne.s32.totalorder %s760, %s762
      %p766 = scmp.eq.s32.totalorder %s100, 0
      %p767 = por %p765, %p766
      %p768 = scmp.ne.s32.totalorder %s760, %s762
      %p769 = scmp.eq.s32.totalorder %s105, 7
      %p770 = por %p768, %p769
      %p771 = scmp.ne.s32.totalorder %s762, %s763
      %p772 = scmp.eq.s32.totalorder %s105, 0
      %p773 = por %p771, %p772
      %p774 = scmp.ne.s32.totalorder %s762, %s763
      %p775 = scmp.eq.s32.totalorder %s106, 7
      %p776 = por %p774, %p775
      %p778 = scmp.ne.s32.totalorder %s763, %s777
      %p779 = scmp.eq.s32.totalorder %s106, 0
      %p780 = por %p778, %p779
      %s781 = ssub.s32 %s108, 1
      %p782 = scmp.gt.s32.totalorder %s781, 0
      %s783 = scalar_select %p782, %s781, 0
      %p784 = scmp.lt.s32.totalorder %s783, 1
      %s785 = scalar_select %p784, %s783, 1
      %s786 = ssub.s32 %s115, 1
      %p787 = scmp.gt.s32.totalorder %s786, 0
      %s788 = scalar_select %p787, %s786, 0
      %p789 = scmp.lt.s32.totalorder %s788, 1
      %s790 = scalar_select %p789, %s788, 1
      %s791 = ssub.s32 %s785, %s790
      %p792 = scmp.eq.s32.totalorder %s791, 0
      %s794 = sadd.s32 %s793, 1
      %s795 = scalar_select %p792, %s793, %s794
      %p798 = pneg %p792
      %p799 = scmp.eq.s32.totalorder %s100, 7
      %p800 = por %p798, %p799
      %p801 = scmp.ne.s32.totalorder %s793, %s796
      %p802 = scmp.eq.s32.totalorder %s100, 0
      %p803 = por %p801, %p802
      %p804 = scmp.ne.s32.totalorder %s793, %s796
      %p805 = scmp.eq.s32.totalorder %s105, 7
      %p806 = por %p804, %p805
      %p807 = scmp.ne.s32.totalorder %s796, %s797
      %p808 = scmp.eq.s32.totalorder %s105, 0
      %p809 = por %p807, %p808
      %p810 = scmp.ne.s32.totalorder %s796, %s797
      %p811 = scmp.eq.s32.totalorder %s106, 7
      %p812 = por %p810, %p811
      %p814 = scmp.ne.s32.totalorder %s797, %s813
      %p815 = scmp.eq.s32.totalorder %s106, 0
      %p816 = por %p814, %p815
      %s817 = ssub.s32 %s108, 1
      %p818 = scmp.gt.s32.totalorder %s817, 0
      %s819 = scalar_select %p818, %s817, 0
      %p820 = scmp.lt.s32.totalorder %s819, 1
      %s821 = scalar_select %p820, %s819, 1
      %s822 = ssub.s32 %s115, 1
      %p823 = scmp.gt.s32.totalorder %s822, 0
      %s824 = scalar_select %p823, %s822, 0
      %p825 = scmp.lt.s32.totalorder %s824, 1
      %s826 = scalar_select %p825, %s824, 1
      %s827 = ssub.s32 %s821, %s826
      %p828 = scmp.eq.s32.totalorder %s827, 0
      %s830 = sadd.s32 %s829, 1
      %s831 = scalar_select %p828, %s829, %s830
      %p834 = pneg %p828
      %p835 = scmp.eq.s32.totalorder %s100, 7
      %p836 = por %p834, %p835
      %p837 = scmp.ne.s32.totalorder %s829, %s832
      %p838 = scmp.eq.s32.totalorder %s100, 0
      %p839 = por %p837, %p838
      %p840 = scmp.ne.s32.totalorder %s829, %s832
      %p841 = scmp.eq.s32.totalorder %s105, 7
      %p842 = por %p840, %p841
      %p843 = scmp.ne.s32.totalorder %s832, %s833
      %p844 = scmp.eq.s32.totalorder %s105, 0
      %p845 = por %p843, %p844
      %p846 = scmp.ne.s32.totalorder %s832, %s833
      %p847 = scmp.eq.s32.totalorder %s106, 7
      %p848 = por %p846, %p847
      %p850 = scmp.ne.s32.totalorder %s833, %s849
      %p851 = scmp.eq.s32.totalorder %s106, 0
      %p852 = por %p850, %p851
      %s853 = ssub.s32 %s108, 1
      %p854 = scmp.gt.s32.totalorder %s853, 0
      %s855 = scalar_select %p854, %s853, 0
      %p856 = scmp.lt.s32.totalorder %s855, 1
      %s857 = scalar_select %p856, %s855, 1
      %s858 = ssub.s32 %s115, 1
      %p859 = scmp.gt.s32.totalorder %s858, 0
      %s860 = scalar_select %p859, %s858, 0
      %p861 = scmp.lt.s32.totalorder %s860, 1
      %s862 = scalar_select %p861, %s860, 1
      %s863 = ssub.s32 %s857, %s862
      %p864 = scmp.eq.s32.totalorder %s863, 0
      %s866 = sadd.s32 %s865, 1
      %s867 = scalar_select %p864, %s865, %s866
      %p870 = pneg %p864
      %p871 = scmp.eq.s32.totalorder %s100, 7
      %p872 = por %p870, %p871
      %p873 = scmp.ne.s32.totalorder %s865, %s868
      %p874 = scmp.eq.s32.totalorder %s100, 0
      %p875 = por %p873, %p874
      %p876 = scmp.ne.s32.totalorder %s865, %s868
      %p877 = scmp.eq.s32.totalorder %s105, 7
      %p878 = por %p876, %p877
      %p879 = scmp.ne.s32.totalorder %s868, %s869
      %p880 = scmp.eq.s32.totalorder %s105, 0
      %p881 = por %p879, %p880
      %p882 = scmp.ne.s32.totalorder %s868, %s869
      %p883 = scmp.eq.s32.totalorder %s106, 7
      %p884 = por %p882, %p883
      %p886 = scmp.ne.s32.totalorder %s869, %s885
      %p887 = scmp.eq.s32.totalorder %s106, 0
      %p888 = por %p886, %p887
      %s889 = ssub.s32 %s108, 1
      %p890 = scmp.gt.s32.totalorder %s889, 0
      %s891 = scalar_select %p890, %s889, 0
      %p892 = scmp.lt.s32.totalorder %s891, 1
      %s893 = scalar_select %p892, %s891, 1
      %s894 = ssub.s32 %s115, 1
      %p895 = scmp.gt.s32.totalorder %s894, 0
      %s896 = scalar_select %p895, %s894, 0
      %p897 = scmp.lt.s32.totalorder %s896, 1
      %s898 = scalar_select %p897, %s896, 1
      %s899 = ssub.s32 %s893, %s898
      %p900 = scmp.eq.s32.totalorder %s899, 0
      %s902 = sadd.s32 %s901, 1
      %s903 = scalar_select %p900, %s901, %s902
      %p906 = pneg %p900
      %p907 = scmp.eq.s32.totalorder %s100, 7
      %p908 = por %p906, %p907
      %p909 = scmp.ne.s32.totalorder %s901, %s904
      %p910 = scmp.eq.s32.totalorder %s100, 0
      %p911 = por %p909, %p910
      %p912 = scmp.ne.s32.totalorder %s901, %s904
      %p913 = scmp.eq.s32.totalorder %s105, 7
      %p914 = por %p912, %p913
      %p915 = scmp.ne.s32.totalorder %s904, %s905
      %p916 = scmp.eq.s32.totalorder %s105, 0
      %p917 = por %p915, %p916
      %p918 = scmp.ne.s32.totalorder %s904, %s905
      %p919 = scmp.eq.s32.totalorder %s106, 7
      %p920 = por %p918, %p919
      %p922 = scmp.ne.s32.totalorder %s905, %s921
      %p923 = scmp.eq.s32.totalorder %s106, 0
      %p924 = por %p922, %p923
      %s925 = ssub.s32 %s108, 1
      %p926 = scmp.gt.s32.totalorder %s925, 0
      %s927 = scalar_select %p926, %s925, 0
      %p928 = scmp.lt.s32.totalorder %s927, 1
      %s929 = scalar_select %p928, %s927, 1
      %s930 = ssub.s32 %s115, 1
      %p931 = scmp.gt.s32.totalorder %s930, 0
      %s932 = scalar_select %p931, %s930, 0
      %p933 = scmp.lt.s32.totalorder %s932, 1
      %s934 = scalar_select %p933, %s932, 1
      %s935 = ssub.s32 %s929, %s934
      %p936 = scmp.eq.s32.totalorder %s935, 0
      %s938 = sadd.s32 %s937, 1
      %s939 = scalar_select %p936, %s937, %s938
      %p942 = pneg %p936
      %p943 = scmp.eq.s32.totalorder %s100, 7
      %p944 = por %p942, %p943
      %p945 = scmp.ne.s32.totalorder %s937, %s940
      %p946 = scmp.eq.s32.totalorder %s100, 0
      %p947 = por %p945, %p946
      %p948 = scmp.ne.s32.totalorder %s937, %s940
      %p949 = scmp.eq.s32.totalorder %s105, 7
      %p950 = por %p948, %p949
      %p951 = scmp.ne.s32.totalorder %s940, %s941
      %p952 = scmp.eq.s32.totalorder %s105, 0
      %p953 = por %p951, %p952
      %p954 = scmp.ne.s32.totalorder %s940, %s941
      %p955 = scmp.eq.s32.totalorder %s106, 7
      %p956 = por %p954, %p955
      %p958 = scmp.ne.s32.totalorder %s941, %s957
      %p959 = scmp.eq.s32.totalorder %s106, 0
      %p960 = por %p958, %p959
      %s961 = ssub.s32 %s108, 1
      %p962 = scmp.gt.s32.totalorder %s961, 0
      %s963 = scalar_select %p962, %s961, 0
      %p964 = scmp.lt.s32.totalorder %s963, 1
      %s965 = scalar_select %p964, %s963, 1
      %s966 = ssub.s32 %s115, 1
      %p967 = scmp.gt.s32.totalorder %s966, 0
      %s968 = scalar_select %p967, %s966, 0
      %p969 = scmp.lt.s32.totalorder %s968, 1
      %s970 = scalar_select %p969, %s968, 1
      %s971 = ssub.s32 %s965, %s970
      %p972 = scmp.eq.s32.totalorder %s971, 0
      %s974 = sadd.s32 %s973, 1
      %s975 = scalar_select %p972, %s973, %s974
      %p978 = pneg %p972
      %p979 = scmp.eq.s32.totalorder %s100, 7
      %p980 = por %p978, %p979
      %p981 = scmp.ne.s32.totalorder %s973, %s976
      %p982 = scmp.eq.s32.totalorder %s100, 0
      %p983 = por %p981, %p982
      %p984 = scmp.ne.s32.totalorder %s973, %s976
      %p985 = scmp.eq.s32.totalorder %s105, 7
      %p986 = por %p984, %p985
      %p987 = scmp.ne.s32.totalorder %s976, %s977
      %p988 = scmp.eq.s32.totalorder %s105, 0
      %p989 = por %p987, %p988
      %p990 = scmp.ne.s32.totalorder %s976, %s977
      %p991 = scmp.eq.s32.totalorder %s106, 7
      %p992 = por %p990, %p991
      %p994 = scmp.ne.s32.totalorder %s977, %s993
      %p995 = scmp.eq.s32.totalorder %s106, 0
      %p996 = por %p994, %p995
      %s997 = ssub.s32 %s108, 1
      %p998 = scmp.gt.s32.totalorder %s997, 0
      %s999 = scalar_select %p998, %s997, 0
      %p1000 = scmp.lt.s32.totalorder %s999, 1
      %s1001 = scalar_select %p1000, %s999, 1
      %s1002 = ssub.s32 %s115, 1
      %p1003 = scmp.gt.s32.totalorder %s1002, 0
      %s1004 = scalar_select %p1003, %s1002, 0
      %p1005 = scmp.lt.s32.totalorder %s1004, 1
      %s1006 = scalar_select %p1005, %s1004, 1
      %s1007 = ssub.s32 %s1001, %s1006
      %p1008 = scmp.eq.s32.totalorder %s1007, 0
      %s1010 = sadd.s32 %s1009, 1
      %s1011 = scalar_select %p1008, %s1009, %s1010
      %p1014 = pneg %p1008
      %p1015 = scmp.eq.s32.totalorder %s100, 7
      %p1016 = por %p1014, %p1015
      %p1017 = scmp.ne.s32.totalorder %s1009, %s1012
      %p1018 = scmp.eq.s32.totalorder %s100, 0
      %p1019 = por %p1017, %p1018
      %p1020 = scmp.ne.s32.totalorder %s1009, %s1012
      %p1021 = scmp.eq.s32.totalorder %s105, 7
      %p1022 = por %p1020, %p1021
      %p1023 = scmp.ne.s32.totalorder %s1012, %s1013
      %p1024 = scmp.eq.s32.totalorder %s105, 0
      %p1025 = por %p1023, %p1024
      %p1026 = scmp.ne.s32.totalorder %s1012, %s1013
      %p1027 = scmp.eq.s32.totalorder %s106, 7
      %p1028 = por %p1026, %p1027
      %p1030 = scmp.ne.s32.totalorder %s1013, %s1029
      %p1031 = scmp.eq.s32.totalorder %s106, 0
      %p1032 = por %p1030, %p1031
      %s1033 = ssub.s32 %s108, 1
      %p1034 = scmp.gt.s32.totalorder %s1033, 0
      %s1035 = scalar_select %p1034, %s1033, 0
      %p1036 = scmp.lt.s32.totalorder %s1035, 1
      %s1037 = scalar_select %p1036, %s1035, 1
      %s1038 = ssub.s32 %s115, 1
      %p1039 = scmp.gt.s32.totalorder %s1038, 0
      %s1040 = scalar_select %p1039, %s1038, 0
      %p1041 = scmp.lt.s32.totalorder %s1040, 1
      %s1042 = scalar_select %p1041, %s1040, 1
      %s1043 = ssub.s32 %s1037, %s1042
      %p1044 = scmp.eq.s32.totalorder %s1043, 0
      %s1046 = sadd.s32 %s1045, 1
      %s1047 = scalar_select %p1044, %s1045, %s1046
      %p1050 = pneg %p1044
      %p1051 = scmp.eq.s32.totalorder %s100, 7
      %p1052 = por %p1050, %p1051
      %p1053 = scmp.ne.s32.totalorder %s1045, %s1048
      %p1054 = scmp.eq.s32.totalorder %s100, 0
      %p1055 = por %p1053, %p1054
      %p1056 = scmp.ne.s32.totalorder %s1045, %s1048
      %p1057 = scmp.eq.s32.totalorder %s105, 7
      %p1058 = por %p1056, %p1057
      %p1059 = scmp.ne.s32.totalorder %s1048, %s1049
      %p1060 = scmp.eq.s32.totalorder %s105, 0
      %p1061 = por %p1059, %p1060
      %p1062 = scmp.ne.s32.totalorder %s1048, %s1049
      %p1063 = scmp.eq.s32.totalorder %s106, 7
      %p1064 = por %p1062, %p1063
      %p1066 = scmp.ne.s32.totalorder %s1049, %s1065
      %p1067 = scmp.eq.s32.totalorder %s106, 0
      %p1068 = por %p1066, %p1067
      %s1069 = ssub.s32 %s108, 1
      %p1070 = scmp.gt.s32.totalorder %s1069, 0
      %s1071 = scalar_select %p1070, %s1069, 0
      %p1072 = scmp.lt.s32.totalorder %s1071, 1
      %s1073 = scalar_select %p1072, %s1071, 1
      %s1074 = ssub.s32 %s115, 1
      %p1075 = scmp.gt.s32.totalorder %s1074, 0
      %s1076 = scalar_select %p1075, %s1074, 0
      %p1077 = scmp.lt.s32.totalorder %s1076, 1
      %s1078 = scalar_select %p1077, %s1076, 1
      %s1079 = ssub.s32 %s1073, %s1078
      %p1080 = scmp.eq.s32.totalorder %s1079, 0
      %s1082 = sadd.s32 %s1081, 1
      %s1083 = scalar_select %p1080, %s1081, %s1082
      %p1086 = pneg %p1080
      %p1087 = scmp.eq.s32.totalorder %s100, 7
      %p1088 = por %p1086, %p1087
      %p1089 = scmp.ne.s32.totalorder %s1081, %s1084
      %p1090 = scmp.eq.s32.totalorder %s100, 0
      %p1091 = por %p1089, %p1090
      %p1092 = scmp.ne.s32.totalorder %s1081, %s1084
      %p1093 = scmp.eq.s32.totalorder %s105, 7
      %p1094 = por %p1092, %p1093
      %p1095 = scmp.ne.s32.totalorder %s1084, %s1085
      %p1096 = scmp.eq.s32.totalorder %s105, 0
      %p1097 = por %p1095, %p1096
      %p1098 = scmp.ne.s32.totalorder %s1084, %s1085
      %p1099 = scmp.eq.s32.totalorder %s106, 7
      %p1100 = por %p1098, %p1099
      %p1102 = scmp.ne.s32.totalorder %s1085, %s1101
      %p1103 = scmp.eq.s32.totalorder %s106, 0
      %p1104 = por %p1102, %p1103
      %s1105 = ssub.s32 %s108, 1
      %p1106 = scmp.gt.s32.totalorder %s1105, 0
      %s1107 = scalar_select %p1106, %s1105, 0
      %p1108 = scmp.lt.s32.totalorder %s1107, 1
      %s1109 = scalar_select %p1108, %s1107, 1
      %s1110 = ssub.s32 %s115, 1
      %p1111 = scmp.gt.s32.totalorder %s1110, 0
      %s1112 = scalar_select %p1111, %s1110, 0
      %p1113 = scmp.lt.s32.totalorder %s1112, 1
      %s1114 = scalar_select %p1113, %s1112, 1
      %s1115 = ssub.s32 %s1109, %s1114
      %p1116 = scmp.eq.s32.totalorder %s1115, 0
      %s1118 = sadd.s32 %s1117, 1
      %s1119 = scalar_select %p1116, %s1117, %s1118
      %p1122 = pneg %p1116
      %p1123 = scmp.eq.s32.totalorder %s100, 7
      %p1124 = por %p1122, %p1123
      %p1125 = scmp.ne.s32.totalorder %s1117, %s1120
      %p1126 = scmp.eq.s32.totalorder %s100, 0
      %p1127 = por %p1125, %p1126
      %p1128 = scmp.ne.s32.totalorder %s1117, %s1120
      %p1129 = scmp.eq.s32.totalorder %s105, 7
      %p1130 = por %p1128, %p1129
      %p1131 = scmp.ne.s32.totalorder %s1120, %s1121
      %p1132 = scmp.eq.s32.totalorder %s105, 0
      %p1133 = por %p1131, %p1132
      %p1134 = scmp.ne.s32.totalorder %s1120, %s1121
      %p1135 = scmp.eq.s32.totalorder %s106, 7
      %p1136 = por %p1134, %p1135
      %p1138 = scmp.ne.s32.totalorder %s1121, %s1137
      %p1139 = scmp.eq.s32.totalorder %s106, 0
      %p1140 = por %p1138, %p1139
      %s1141 = ssub.s32 %s108, 1
      %p1142 = scmp.gt.s32.totalorder %s1141, 0
      %s1143 = scalar_select %p1142, %s1141, 0
      %p1144 = scmp.lt.s32.totalorder %s1143, 1
      %s1145 = scalar_select %p1144, %s1143, 1
      %s1146 = ssub.s32 %s115, 1
      %p1147 = scmp.gt.s32.totalorder %s1146, 0
      %s1148 = scalar_select %p1147, %s1146, 0
      %p1149 = scmp.lt.s32.totalorder %s1148, 1
      %s1150 = scalar_select %p1149, %s1148, 1
      %s1151 = ssub.s32 %s1145, %s1150
      %p1152 = scmp.eq.s32.totalorder %s1151, 0
      %s1154 = sadd.s32 %s1153, 1
      %s1155 = scalar_select %p1152, %s1153, %s1154
      %p1158 = pneg %p1152
      %p1159 = scmp.eq.s32.totalorder %s100, 7
      %p1160 = por %p1158, %p1159
      %p1161 = scmp.ne.s32.totalorder %s1153, %s1156
      %p1162 = scmp.eq.s32.totalorder %s100, 0
      %p1163 = por %p1161, %p1162
      %p1164 = scmp.ne.s32.totalorder %s1153, %s1156
      %p1165 = scmp.eq.s32.totalorder %s105, 7
      %p1166 = por %p1164, %p1165
      %p1167 = scmp.ne.s32.totalorder %s1156, %s1157
      %p1168 = scmp.eq.s32.totalorder %s105, 0
      %p1169 = por %p1167, %p1168
      %p1170 = scmp.ne.s32.totalorder %s1156, %s1157
      %p1171 = scmp.eq.s32.totalorder %s106, 7
      %p1172 = por %p1170, %p1171
      %p1174 = scmp.ne.s32.totalorder %s1157, %s1173
      %p1175 = scmp.eq.s32.totalorder %s106, 0
      %p1176 = por %p1174, %p1175
      %s1177 = ssub.s32 %s108, 1
      %p1178 = scmp.gt.s32.totalorder %s1177, 0
      %s1179 = scalar_select %p1178, %s1177, 0
      %p1180 = scmp.lt.s32.totalorder %s1179, 1
      %s1181 = scalar_select %p1180, %s1179, 1
      %s1182 = ssub.s32 %s115, 1
      %p1183 = scmp.gt.s32.totalorder %s1182, 0
      %s1184 = scalar_select %p1183, %s1182, 0
      %p1185 = scmp.lt.s32.totalorder %s1184, 1
      %s1186 = scalar_select %p1185, %s1184, 1
      %s1187 = ssub.s32 %s1181, %s1186
      %p1188 = scmp.eq.s32.totalorder %s1187, 0
      %s1190 = sadd.s32 %s1189, 1
      %s1191 = scalar_select %p1188, %s1189, %s1190
      %p1194 = pneg %p1188
      %p1195 = scmp.eq.s32.totalorder %s100, 7
      %p1196 = por %p1194, %p1195
      %p1197 = scmp.ne.s32.totalorder %s1189, %s1192
      %p1198 = scmp.eq.s32.totalorder %s100, 0
      %p1199 = por %p1197, %p1198
      %p1200 = scmp.ne.s32.totalorder %s1189, %s1192
      %p1201 = scmp.eq.s32.totalorder %s105, 7
      %p1202 = por %p1200, %p1201
      %p1203 = scmp.ne.s32.totalorder %s1192, %s1193
      %p1204 = scmp.eq.s32.totalorder %s105, 0
      %p1205 = por %p1203, %p1204
      %p1206 = scmp.ne.s32.totalorder %s1192, %s1193
      %p1207 = scmp.eq.s32.totalorder %s106, 7
      %p1208 = por %p1206, %p1207
      %p1210 = scmp.ne.s32.totalorder %s1193, %s1209
      %p1211 = scmp.eq.s32.totalorder %s106, 0
      %p1212 = por %p1210, %p1211
      %s1213 = ssub.s32 %s107, %s119
      %p1214 = scmp.eq.s32.totalorder %s1213, 0
      %s1216 = sadd.s32 %s1215, 1
      %s1217 = scalar_select %p1214, %s1215, %s1216
      %p1220 = pneg %p1214
      %p1221 = scmp.eq.s32.totalorder %s100, 7
      %p1222 = por %p1220, %p1221
      %p1223 = scmp.ne.s32.totalorder %s1215, %s1218
      %p1224 = scmp.eq.s32.totalorder %s100, 0
      %p1225 = por %p1223, %p1224
      %p1226 = scmp.ne.s32.totalorder %s1215, %s1218
      %p1227 = scmp.eq.s32.totalorder %s105, 7
      %p1228 = por %p1226, %p1227
      %p1229 = scmp.ne.s32.totalorder %s1218, %s1219
      %p1230 = scmp.eq.s32.totalorder %s105, 0
      %p1231 = por %p1229, %p1230
      %p1232 = scmp.ne.s32.totalorder %s1218, %s1219
      %p1233 = scmp.eq.s32.totalorder %s106, 7
      %p1234 = por %p1232, %p1233
      %p1236 = scmp.ne.s32.totalorder %s1219, %s1235
      %p1237 = scmp.eq.s32.totalorder %s106, 0
      %p1238 = por %p1236, %p1237
      %p1239 = scmp.le.s32.totalorder 1, %s100
      %p1240 = scmp.lt.s32.totalorder %s100, 9
      %p1241 = pnand %p1239, %p1240
      %p1242 = pneg %p1241
      // Predicated region
      $region9: #{net_forward.1} parent=5 // pred_check
        _
      $region10: #{net_forward.1} parent=5 // pred_check_branch
        %1244 = sbr.rel (%p1241) target = $region12
      $region11: #{net_forward.1} parent=5 // pred_region
        %s1245 = ssub.s32 %s100, 1
        // Predicated region
        $region13: #{net_forward.1} parent=11 // pred_check
          %p1246 = pneg %p185
        $region14: #{net_forward.1} parent=11 // pred_check_branch
          %1248 = sbr.rel (%p1246) target = $region16
        $region15: #{net_forward.1} parent=11 // pred_region
          _
        $region16: #{net_forward.1} parent=11 // pred_fallthru
          _
        // Predicated region
        $region17: #{net_forward.1} parent=11 // pred_check
          %p1249 = pneg %p206
        $region18: #{net_forward.1} parent=11 // pred_check_branch
          %1251 = sbr.rel (%p1249) target = $region20
        $region19: #{net_forward.1} parent=11 // pred_region
          _
        $region20: #{net_forward.1} parent=11 // pred_fallthru
          _
        // Predicated region
        $region21: #{net_forward.1} parent=11 // pred_check
          %p1252 = pneg %p227
        $region22: #{net_forward.1} parent=11 // pred_check_branch
          %1254 = sbr.rel (%p1252) target = $region24
        $region23: #{net_forward.1} parent=11 // pred_region
          _
        $region24: #{net_forward.1} parent=11 // pred_fallthru
          _
        // Predicated region
        $region25: #{net_forward.1} parent=11 // pred_check
          %p1255 = pneg %p248
        $region26: #{net_forward.1} parent=11 // pred_check_branch
          %1257 = sbr.rel (%p1255) target = $region28
        $region27: #{net_forward.1} parent=11 // pred_region
          _
        $region28: #{net_forward.1} parent=11 // pred_fallthru
          _
        // Predicated region
        $region29: #{net_forward.1} parent=11 // pred_check
          %p1258 = pneg %p269
        $region30: #{net_forward.1} parent=11 // pred_check_branch
          %1260 = sbr.rel (%p1258) target = $region32
        $region31: #{net_forward.1} parent=11 // pred_region
          _
        $region32: #{net_forward.1} parent=11 // pred_fallthru
          _
        // Predicated region
        $region33: #{net_forward.1} parent=11 // pred_check
          %p1261 = pneg %p290
        $region34: #{net_forward.1} parent=11 // pred_check_branch
          %1263 = sbr.rel (%p1261) target = $region36
        $region35: #{net_forward.1} parent=11 // pred_region
          _
        $region36: #{net_forward.1} parent=11 // pred_fallthru
          _
        // Predicated region
        $region37: #{net_forward.1} parent=11 // pred_check
          %p1264 = pneg %p311
        $region38: #{net_forward.1} parent=11 // pred_check_branch
          %1266 = sbr.rel (%p1264) target = $region40
        $region39: #{net_forward.1} parent=11 // pred_region
          _
        $region40: #{net_forward.1} parent=11 // pred_fallthru
          _
        // Predicated region
        $region41: #{net_forward.1} parent=11 // pred_check
          %p1267 = pneg %p332
        $region42: #{net_forward.1} parent=11 // pred_check_branch
          %1269 = sbr.rel (%p1267) target = $region44
        $region43: #{net_forward.1} parent=11 // pred_region
          _
        $region44: #{net_forward.1} parent=11 // pred_fallthru
          _
        // Predicated region
        $region45: #{net_forward.1} parent=11 // pred_check
          %p1270 = pneg %p353
        $region46: #{net_forward.1} parent=11 // pred_check_branch
          %1272 = sbr.rel (%p1270) target = $region48
        $region47: #{net_forward.1} parent=11 // pred_region
          _
        $region48: #{net_forward.1} parent=11 // pred_fallthru
          _
        // Predicated region
        $region49: #{net_forward.1} parent=11 // pred_check
          %p1273 = pneg %p374
        $region50: #{net_forward.1} parent=11 // pred_check_branch
          %1275 = sbr.rel (%p1273) target = $region52
        $region51: #{net_forward.1} parent=11 // pred_region
          _
        $region52: #{net_forward.1} parent=11 // pred_fallthru
          _
        // Predicated region
        $region53: #{net_forward.1} parent=11 // pred_check
          %p1276 = pneg %p395
        $region54: #{net_forward.1} parent=11 // pred_check_branch
          %1278 = sbr.rel (%p1276) target = $region56
        $region55: #{net_forward.1} parent=11 // pred_region
          _
        $region56: #{net_forward.1} parent=11 // pred_fallthru
          _
        // Predicated region
        $region57: #{net_forward.1} parent=11 // pred_check
          %p1279 = pneg %p416
        $region58: #{net_forward.1} parent=11 // pred_check_branch
          %1281 = sbr.rel (%p1279) target = $region60
        $region59: #{net_forward.1} parent=11 // pred_region
          _
        $region60: #{net_forward.1} parent=11 // pred_fallthru
          _
        // Predicated region
        $region61: #{net_forward.1} parent=11 // pred_check
          %p1282 = pneg %p437
        $region62: #{net_forward.1} parent=11 // pred_check_branch
          %1284 = sbr.rel (%p1282) target = $region64
        $region63: #{net_forward.1} parent=11 // pred_region
          _
        $region64: #{net_forward.1} parent=11 // pred_fallthru
          _
        // Predicated region
        $region65: #{net_forward.1} parent=11 // pred_check
          %p1285 = pneg %p458
        $region66: #{net_forward.1} parent=11 // pred_check_branch
          %1287 = sbr.rel (%p1285) target = $region68
        $region67: #{net_forward.1} parent=11 // pred_region
          %1289 = vsyncadd [#allocation6], 0
          %s1290 = sshll.u32 %s31, 4
          %s1291 = int_to_ptr.hbm [resolvable:$true] %s1290
          %s1292 = sshll.u32 [#allocation5], 4
          %s1293 = int_to_ptr.vmem [resolvable:$true] %s1292
          %1298 = dma.hbm_to_vmem [thread:$0]  %s1291, 256, %s1293, [#allocation6], 64, 64, 4
        $region68: #{net_forward.1} parent=11 // pred_fallthru
          _
        // Predicated region
        $region69: #{net_forward.1} parent=11 // pred_check
          %p1299 = pneg %p479
        $region70: #{net_forward.1} parent=11 // pred_check_branch
          %1301 = sbr.rel (%p1299) target = $region72
        $region71: #{net_forward.1} parent=11 // pred_region
          %1303 = vsyncadd [#allocation6], 0
          %s1304 = sshll.u32 %s33, 4
          %s1305 = int_to_ptr.hbm [resolvable:$true] %s1304
          %s1306 = sshll.u32 [#allocation7], 4
          %s1307 = int_to_ptr.vmem [resolvable:$true] %s1306
          %1312 = dma.hbm_to_vmem [thread:$0]  %s1305, 512, %s1307, [#allocation6], 64, 64, 4
        $region72: #{net_forward.1} parent=11 // pred_fallthru
          _
        // Predicated region
        $region73: #{net_forward.1} parent=11 // pred_check
          %p1313 = pneg %p500
        $region74: #{net_forward.1} parent=11 // pred_check_branch
          %1315 = sbr.rel (%p1313) target = $region76
        $region75: #{net_forward.1} parent=11 // pred_region
          %1317 = vsyncadd [#allocation9], 0
          %s1318 = sshll.u32 %s35, 4
          %s1319 = int_to_ptr.hbm [resolvable:$true] %s1318
          %s1320 = sshll.u32 [#allocation8], 4
          %s1321 = int_to_ptr.vmem [resolvable:$true] %s1320
          %1326 = dma.hbm_to_vmem [thread:$0]  %s1319, 512, %s1321, [#allocation9], 64, 64, 4
        $region76: #{net_forward.1} parent=11 // pred_fallthru
          _
        // Predicated region
        $region77: #{net_forward.1} parent=11 // pred_check
          %p1327 = pneg %p521
        $region78: #{net_forward.1} parent=11 // pred_check_branch
          %1329 = sbr.rel (%p1327) target = $region80
        $region79: #{net_forward.1} parent=11 // pred_region
          _
        $region80: #{net_forward.1} parent=11 // pred_fallthru
          _
        // Predicated region
        $region81: #{net_forward.1} parent=11 // pred_check
          %p1330 = pneg %p542
        $region82: #{net_forward.1} parent=11 // pred_check_branch
          %1332 = sbr.rel (%p1330) target = $region84
        $region83: #{net_forward.1} parent=11 // pred_region
          _
        $region84: #{net_forward.1} parent=11 // pred_fallthru
          _
        // Predicated region
        $region85: #{net_forward.1} parent=11 // pred_check
          %p1333 = pneg %p563
        $region86: #{net_forward.1} parent=11 // pred_check_branch
          %1335 = sbr.rel (%p1333) target = $region88
        $region87: #{net_forward.1} parent=11 // pred_region
          _
        $region88: #{net_forward.1} parent=11 // pred_fallthru
          _
        // Predicated region
        $region89: #{net_forward.1} parent=11 // pred_check
          %p1336 = pneg %p584
        $region90: #{net_forward.1} parent=11 // pred_check_branch
          %1338 = sbr.rel (%p1336) target = $region92
        $region91: #{net_forward.1} parent=11 // pred_region
          _
        $region92: #{net_forward.1} parent=11 // pred_fallthru
          _
        // Predicated region
        $region93: #{net_forward.1} parent=11 // pred_check
          %p1339 = pneg %p605
        $region94: #{net_forward.1} parent=11 // pred_check_branch
          %1341 = sbr.rel (%p1339) target = $region96
        $region95: #{net_forward.1} parent=11 // pred_region
          _
        $region96: #{net_forward.1} parent=11 // pred_fallthru
          _
        // Predicated region
        $region97: #{net_forward.1} parent=11 // pred_check
          %p1342 = pneg %p626
        $region98: #{net_forward.1} parent=11 // pred_check_branch
          %1344 = sbr.rel (%p1342) target = $region100
        $region99: #{net_forward.1} parent=11 // pred_region
          _
        $region100: #{net_forward.1} parent=11 // pred_fallthru
          _
        // Predicated region
        $region101: #{net_forward.1} parent=11 // pred_check
          %p1345 = pneg %p647
        $region102: #{net_forward.1} parent=11 // pred_check_branch
          %1347 = sbr.rel (%p1345) target = $region104
        $region103: #{net_forward.1} parent=11 // pred_region
          _
        $region104: #{net_forward.1} parent=11 // pred_fallthru
          _
        // Predicated region
        $region105: #{net_forward.1} parent=11 // pred_check
          %p1348 = pneg %p668
        $region106: #{net_forward.1} parent=11 // pred_check_branch
          %1350 = sbr.rel (%p1348) target = $region108
        $region107: #{net_forward.1} parent=11 // pred_region
          %1352 = vsyncadd [#allocation9], 0
          %s1353 = sshll.u32 %s51, 4
          %s1354 = int_to_ptr.hbm [resolvable:$true] %s1353
          %s1355 = sshll.u32 [#allocation10], 4
          %s1356 = int_to_ptr.vmem [resolvable:$true] %s1355
          %1361 = dma.hbm_to_vmem [thread:$0]  %s1354, 512, %s1356, [#allocation9], 64, 64, 4
        $region108: #{net_forward.1} parent=11 // pred_fallthru
          _
        // Predicated region
        $region109: #{net_forward.1} parent=11 // pred_check
          %p1362 = pneg %p689
        $region110: #{net_forward.1} parent=11 // pred_check_branch
          %1364 = sbr.rel (%p1362) target = $region112
        $region111: #{net_forward.1} parent=11 // pred_region
          %1366 = vsyncadd [#allocation12], 0
          %s1367 = sshll.u32 %s53, 4
          %s1368 = int_to_ptr.hbm [resolvable:$true] %s1367
          %s1369 = sshll.u32 [#allocation11], 4
          %s1370 = int_to_ptr.vmem [resolvable:$true] %s1369
          %1375 = dma.hbm_to_vmem [thread:$0]  %s1368, 256, %s1370, [#allocation12], 64, 64, 4
        $region112: #{net_forward.1} parent=11 // pred_fallthru
          _
        // Predicated region
        $region113: #{net_forward.1} parent=11 // pred_check
          %p1376 = pneg %p710
        $region114: #{net_forward.1} parent=11 // pred_check_branch
          %1378 = sbr.rel (%p1376) target = $region116
        $region115: #{net_forward.1} parent=11 // pred_region
          %1380 = vsyncadd [#allocation12], 0
          %s1381 = sshll.u32 %s55, 4
          %s1382 = int_to_ptr.hbm [resolvable:$true] %s1381
          %s1383 = sshll.u32 [#allocation13], 4
          %s1384 = int_to_ptr.vmem [resolvable:$true] %s1383
          %1389 = dma.hbm_to_vmem [thread:$0]  %s1382, 256, %s1384, [#allocation12], 64, 64, 4
        $region116: #{net_forward.1} parent=11 // pred_fallthru
          _
        // Predicated region
        $region117: #{net_forward.1} parent=11 // pred_check
          %p1390 = pneg %p731
        $region118: #{net_forward.1} parent=11 // pred_check_branch
          %1392 = sbr.rel (%p1390) target = $region120
        $region119: #{net_forward.1} parent=11 // pred_region
          _
        $region120: #{net_forward.1} parent=11 // pred_fallthru
          _
        // Predicated region
        $region121: #{net_forward.1} parent=11 // pred_check
          %p1393 = pneg %p752
        $region122: #{net_forward.1} parent=11 // pred_check_branch
          %1395 = sbr.rel (%p1393) target = $region124
        $region123: #{net_forward.1} parent=11 // pred_region
          %1397 = vsyncadd [#allocation15], 0
          %s1398 = sshll.u32 %s59, 4
          %s1399 = int_to_ptr.hbm [resolvable:$true] %s1398
          %s1400 = sshll.u32 [#allocation14], 4
          %s1401 = int_to_ptr.vmem [resolvable:$true] %s1400
          %1406 = dma.hbm_to_vmem [thread:$0]  %s1399, 256, %s1401, [#allocation15], 64, 64, 4
        $region124: #{net_forward.1} parent=11 // pred_fallthru
          _
        // Predicated region
        $region125: #{net_forward.1} parent=11 // pred_check
          %p1407 = pneg %p773
        $region126: #{net_forward.1} parent=11 // pred_check_branch
          %1409 = sbr.rel (%p1407) target = $region128
        $region127: #{net_forward.1} parent=11 // pred_region
          _
        $region128: #{net_forward.1} parent=11 // pred_fallthru
          _
      $region12: #{net_forward.1} parent=5 // pred_fallthru
        _
      %p1410 = scmp.lt.s32.totalorder %s100, 8
      // Predicated region
      $region129: #{net_forward.1} parent=5 // pred_check
        %p1411 = pneg %p1410
      $region130: #{net_forward.1} parent=5 // pred_check_branch
        %1413 = sbr.rel (%p1411) target = $region132
      $region131: #{net_forward.1} parent=5 // pred_region
        // Predicated region
        $region133: #{net_forward.1} parent=131 // pred_check
          %p1414 = pneg %p132
        $region134: #{net_forward.1} parent=131 // pred_check_branch
          %1416 = sbr.rel (%p1414) target = $region136
        $region135: #{net_forward.1} parent=131 // pred_region
          %p1417 = scmp.lt.s32.totalorder %s107, 1
          %s1418 = scalar_select %p1417, %s107, 1
          %s1419 = smul.addr %s1418, 4
          %s1420 = scalar_lea.vmem %s1, %s1419
        $region136: #{net_forward.1} parent=131 // pred_fallthru
          _
        // Predicated region
        $region137: #{net_forward.1} parent=131 // pred_check
          %p1421 = pneg %p158
        $region138: #{net_forward.1} parent=131 // pred_check_branch
          %1423 = sbr.rel (%p1421) target = $region140
        $region139: #{net_forward.1} parent=131 // pred_region
          %s1424 = sand.u32 %s100, 1
          %s1425 = scalar_lea.sflag [#allocation4], %s1424
          %s1426 = sand.u32 %s148, 1
          %s1427 = scalar_lea.vmem [#allocation3], %s1426
          %1429 = vsyncadd %s1425, 0
          %s1430 = scalar_lea.hbm %s3, %s107
          %s1432 = sshll.u32 %s1430, 4
          %s1433 = int_to_ptr.hbm [resolvable:$true] %s1432
          %s1434 = sshll.u32 %s1427, 4
          %s1435 = int_to_ptr.vmem [resolvable:$true] %s1434
          %1437 = dma.hbm_to_vmem [thread:$0]  %s1433, 16, %s1435, %s1425
        $region140: #{net_forward.1} parent=131 // pred_fallthru
          _
        // Predicated region
        $region141: #{net_forward.1} parent=131 // pred_check
          %p1438 = pneg %p803
        $region142: #{net_forward.1} parent=131 // pred_check_branch
          %1440 = sbr.rel (%p1438) target = $region144
        $region143: #{net_forward.1} parent=131 // pred_region
          %s1441 = ssub.s32 %s108, 1
          %p1442 = scmp.gt.s32.totalorder %s1441, 0
          %s1443 = scalar_select %p1442, %s1441, 0
          %p1444 = scmp.lt.s32.totalorder %s1443, 1
          %s1445 = scalar_select %p1444, %s1443, 1
          %p1446 = scmp.lt.s32.totalorder %s1445, 1
          %s1447 = scalar_select %p1446, %s1445, 1
          %s1448 = scalar_lea.vmem %s63, %s1447
          %s1449 = ssub.s32 %s108, 1
          %p1450 = scmp.gt.s32.totalorder %s1449, 0
          %s1451 = scalar_select %p1450, %s1449, 0
          %p1452 = scmp.lt.s32.totalorder %s1451, 1
          %s1453 = scalar_select %p1452, %s1451, 1
        $region144: #{net_forward.1} parent=131 // pred_fallthru
          _
        // Predicated region
        $region145: #{net_forward.1} parent=131 // pred_check
          %p1454 = pneg %p839
        $region146: #{net_forward.1} parent=131 // pred_check_branch
          %1456 = sbr.rel (%p1454) target = $region148
        $region147: #{net_forward.1} parent=131 // pred_region
          %s1457 = ssub.s32 %s108, 1
          %p1458 = scmp.gt.s32.totalorder %s1457, 0
          %s1459 = scalar_select %p1458, %s1457, 0
          %p1460 = scmp.lt.s32.totalorder %s1459, 1
          %s1461 = scalar_select %p1460, %s1459, 1
          %p1462 = scmp.lt.s32.totalorder %s1461, 1
          %s1463 = scalar_select %p1462, %s1461, 1
          %s1464 = scalar_lea.vmem %s65, %s1463
          %s1465 = ssub.s32 %s108, 1
          %p1466 = scmp.gt.s32.totalorder %s1465, 0
          %s1467 = scalar_select %p1466, %s1465, 0
          %p1468 = scmp.lt.s32.totalorder %s1467, 1
          %s1469 = scalar_select %p1468, %s1467, 1
        $region148: #{net_forward.1} parent=131 // pred_fallthru
          _
        // Predicated region
        $region149: #{net_forward.1} parent=131 // pred_check
          %p1470 = pneg %p875
        $region150: #{net_forward.1} parent=131 // pred_check_branch
          %1472 = sbr.rel (%p1470) target = $region152
        $region151: #{net_forward.1} parent=131 // pred_region
          %s1473 = ssub.s32 %s108, 1
          %p1474 = scmp.gt.s32.totalorder %s1473, 0
          %s1475 = scalar_select %p1474, %s1473, 0
          %p1476 = scmp.lt.s32.totalorder %s1475, 1
          %s1477 = scalar_select %p1476, %s1475, 1
          %p1478 = scmp.lt.s32.totalorder %s1477, 1
          %s1479 = scalar_select %p1478, %s1477, 1
          %s1480 = scalar_lea.vmem %s67, %s1479
          %s1481 = ssub.s32 %s108, 1
          %p1482 = scmp.gt.s32.totalorder %s1481, 0
          %s1483 = scalar_select %p1482, %s1481, 0
          %p1484 = scmp.lt.s32.totalorder %s1483, 1
          %s1485 = scalar_select %p1484, %s1483, 1
        $region152: #{net_forward.1} parent=131 // pred_fallthru
          _
        // Predicated region
        $region153: #{net_forward.1} parent=131 // pred_check
          %p1486 = pneg %p911
        $region154: #{net_forward.1} parent=131 // pred_check_branch
          %1488 = sbr.rel (%p1486) target = $region156
        $region155: #{net_forward.1} parent=131 // pred_region
          %s1489 = ssub.s32 %s108, 1
          %p1490 = scmp.gt.s32.totalorder %s1489, 0
          %s1491 = scalar_select %p1490, %s1489, 0
          %p1492 = scmp.lt.s32.totalorder %s1491, 1
          %s1493 = scalar_select %p1492, %s1491, 1
          %p1494 = scmp.lt.s32.totalorder %s1493, 1
          %s1495 = scalar_select %p1494, %s1493, 1
          %s1496 = scalar_lea.vmem %s69, %s1495
          %s1497 = ssub.s32 %s108, 1
          %p1498 = scmp.gt.s32.totalorder %s1497, 0
          %s1499 = scalar_select %p1498, %s1497, 0
          %p1500 = scmp.lt.s32.totalorder %s1499, 1
          %s1501 = scalar_select %p1500, %s1499, 1
        $region156: #{net_forward.1} parent=131 // pred_fallthru
          _
        // Predicated region
        $region157: #{net_forward.1} parent=131 // pred_check
          %p1502 = pneg %p947
        $region158: #{net_forward.1} parent=131 // pred_check_branch
          %1504 = sbr.rel (%p1502) target = $region160
        $region159: #{net_forward.1} parent=131 // pred_region
          %s1505 = ssub.s32 %s108, 1
          %p1506 = scmp.gt.s32.totalorder %s1505, 0
          %s1507 = scalar_select %p1506, %s1505, 0
          %p1508 = scmp.lt.s32.totalorder %s1507, 1
          %s1509 = scalar_select %p1508, %s1507, 1
          %p1510 = scmp.lt.s32.totalorder %s1509, 1
          %s1511 = scalar_select %p1510, %s1509, 1
          %s1512 = scalar_lea.vmem %s71, %s1511
          %s1513 = ssub.s32 %s108, 1
          %p1514 = scmp.gt.s32.totalorder %s1513, 0
          %s1515 = scalar_select %p1514, %s1513, 0
          %p1516 = scmp.lt.s32.totalorder %s1515, 1
          %s1517 = scalar_select %p1516, %s1515, 1
        $region160: #{net_forward.1} parent=131 // pred_fallthru
          _
        // Predicated region
        $region161: #{net_forward.1} parent=131 // pred_check
          %p1518 = pneg %p983
        $region162: #{net_forward.1} parent=131 // pred_check_branch
          %1520 = sbr.rel (%p1518) target = $region164
        $region163: #{net_forward.1} parent=131 // pred_region
          %s1521 = ssub.s32 %s108, 1
          %p1522 = scmp.gt.s32.totalorder %s1521, 0
          %s1523 = scalar_select %p1522, %s1521, 0
          %p1524 = scmp.lt.s32.totalorder %s1523, 1
          %s1525 = scalar_select %p1524, %s1523, 1
          %p1526 = scmp.lt.s32.totalorder %s1525, 1
          %s1527 = scalar_select %p1526, %s1525, 1
          %s1528 = scalar_lea.vmem %s73, %s1527
          %s1529 = ssub.s32 %s108, 1
          %p1530 = scmp.gt.s32.totalorder %s1529, 0
          %s1531 = scalar_select %p1530, %s1529, 0
          %p1532 = scmp.lt.s32.totalorder %s1531, 1
          %s1533 = scalar_select %p1532, %s1531, 1
        $region164: #{net_forward.1} parent=131 // pred_fallthru
          _
        // Predicated region
        $region165: #{net_forward.1} parent=131 // pred_check
          %p1534 = pneg %p1019
        $region166: #{net_forward.1} parent=131 // pred_check_branch
          %1536 = sbr.rel (%p1534) target = $region168
        $region167: #{net_forward.1} parent=131 // pred_region
          %s1537 = ssub.s32 %s108, 1
          %p1538 = scmp.gt.s32.totalorder %s1537, 0
          %s1539 = scalar_select %p1538, %s1537, 0
          %p1540 = scmp.lt.s32.totalorder %s1539, 1
          %s1541 = scalar_select %p1540, %s1539, 1
          %p1542 = scmp.lt.s32.totalorder %s1541, 1
          %s1543 = scalar_select %p1542, %s1541, 1
          %s1544 = scalar_lea.vmem %s75, %s1543
          %s1545 = ssub.s32 %s108, 1
          %p1546 = scmp.gt.s32.totalorder %s1545, 0
          %s1547 = scalar_select %p1546, %s1545, 0
          %p1548 = scmp.lt.s32.totalorder %s1547, 1
          %s1549 = scalar_select %p1548, %s1547, 1
        $region168: #{net_forward.1} parent=131 // pred_fallthru
          _
        // Predicated region
        $region169: #{net_forward.1} parent=131 // pred_check
          %p1550 = pneg %p1055
        $region170: #{net_forward.1} parent=131 // pred_check_branch
          %1552 = sbr.rel (%p1550) target = $region172
        $region171: #{net_forward.1} parent=131 // pred_region
          %s1553 = ssub.s32 %s108, 1
          %p1554 = scmp.gt.s32.totalorder %s1553, 0
          %s1555 = scalar_select %p1554, %s1553, 0
          %p1556 = scmp.lt.s32.totalorder %s1555, 1
          %s1557 = scalar_select %p1556, %s1555, 1
          %p1558 = scmp.lt.s32.totalorder %s1557, 1
          %s1559 = scalar_select %p1558, %s1557, 1
          %s1560 = scalar_lea.vmem %s77, %s1559
          %s1561 = ssub.s32 %s108, 1
          %p1562 = scmp.gt.s32.totalorder %s1561, 0
          %s1563 = scalar_select %p1562, %s1561, 0
          %p1564 = scmp.lt.s32.totalorder %s1563, 1
          %s1565 = scalar_select %p1564, %s1563, 1
        $region172: #{net_forward.1} parent=131 // pred_fallthru
          _
        // Predicated region
        $region173: #{net_forward.1} parent=131 // pred_check
          %p1566 = pneg %p1091
        $region174: #{net_forward.1} parent=131 // pred_check_branch
          %1568 = sbr.rel (%p1566) target = $region176
        $region175: #{net_forward.1} parent=131 // pred_region
          %s1569 = sand.u32 %s100, 1
          %s1570 = scalar_lea.sflag [#allocation4], %s1569
          %s1571 = sand.u32 %s1081, 1
          %s1572 = smul.addr %s1571, 32
          %s1573 = scalar_lea.vmem [#allocation16], %s1572
          %s1574 = ssub.s32 %s108, 1
          %p1575 = scmp.gt.s32.totalorder %s1574, 0
          %s1576 = scalar_select %p1575, %s1574, 0
          %p1577 = scmp.lt.s32.totalorder %s1576, 1
          %s1578 = scalar_select %p1577, %s1576, 1
          %1580 = vsyncadd %s1570, 0
          %s1581 = smul.addr %s1578, 8
          %s1582 = smul.addr %s1581, 4
          %s1583 = scalar_lea.hbm %s79, %s1582
          %s1584 = sshll.u32 %s1583, 4
          %s1585 = int_to_ptr.hbm [resolvable:$true] %s1584
          %s1586 = sshll.u32 %s1573, 4
          %s1587 = int_to_ptr.vmem [resolvable:$true] %s1586
          %1592 = dma.hbm_to_vmem [thread:$0]  %s1585, 512, %s1587, %s1570, 64, 64, 4
        $region176: #{net_forward.1} parent=131 // pred_fallthru
          _
        // Predicated region
        $region177: #{net_forward.1} parent=131 // pred_check
          %p1593 = pneg %p1127
        $region178: #{net_forward.1} parent=131 // pred_check_branch
          %1595 = sbr.rel (%p1593) target = $region180
        $region179: #{net_forward.1} parent=131 // pred_region
          %s1596 = ssub.s32 %s108, 1
          %p1597 = scmp.gt.s32.totalorder %s1596, 0
          %s1598 = scalar_select %p1597, %s1596, 0
          %p1599 = scmp.lt.s32.totalorder %s1598, 1
          %s1600 = scalar_select %p1599, %s1598, 1
          %p1601 = scmp.lt.s32.totalorder %s1600, 1
          %s1602 = scalar_select %p1601, %s1600, 1
          %s1603 = smul.addr %s1602, 16
          %s1604 = smul.addr %s1603, 4
          %s1605 = scalar_lea.vmem %s81, %s1604
          %s1606 = ssub.s32 %s108, 1
          %p1607 = scmp.gt.s32.totalorder %s1606, 0
          %s1608 = scalar_select %p1607, %s1606, 0
          %p1609 = scmp.lt.s32.totalorder %s1608, 1
          %s1610 = scalar_select %p1609, %s1608, 1
        $region180: #{net_forward.1} parent=131 // pred_fallthru
          _
        // Predicated region
        $region181: #{net_forward.1} parent=131 // pred_check
          %p1611 = pneg %p1163
        $region182: #{net_forward.1} parent=131 // pred_check_branch
          %1613 = sbr.rel (%p1611) target = $region184
        $region183: #{net_forward.1} parent=131 // pred_region
          %s1614 = sand.u32 %s100, 1
          %s1615 = scalar_lea.sflag [#allocation4], %s1614
          %s1616 = sand.u32 %s1153, 1
          %s1617 = smul.addr %s1616, 32
          %s1618 = scalar_lea.vmem [#allocation17], %s1617
          %s1619 = ssub.s32 %s108, 1
          %p1620 = scmp.gt.s32.totalorder %s1619, 0
          %s1621 = scalar_select %p1620, %s1619, 0
          %p1622 = scmp.lt.s32.totalorder %s1621, 1
          %s1623 = scalar_select %p1622, %s1621, 1
          %1625 = vsyncadd %s1615, 0
          %s1626 = smul.addr %s1623, 8
          %s1627 = smul.addr %s1626, 4
          %s1628 = scalar_lea.hbm %s83, %s1627
          %s1629 = sshll.u32 %s1628, 4
          %s1630 = int_to_ptr.hbm [resolvable:$true] %s1629
          %s1631 = sshll.u32 %s1618, 4
          %s1632 = int_to_ptr.vmem [resolvable:$true] %s1631
          %1637 = dma.hbm_to_vmem [thread:$0]  %s1630, 512, %s1632, %s1615, 64, 64, 4
        $region184: #{net_forward.1} parent=131 // pred_fallthru
          _
        // Predicated region
        $region185: #{net_forward.1} parent=131 // pred_check
          %p1638 = pneg %p1199
        $region186: #{net_forward.1} parent=131 // pred_check_branch
          %1640 = sbr.rel (%p1638) target = $region188
        $region187: #{net_forward.1} parent=131 // pred_region
          %s1641 = sand.u32 %s100, 1
          %s1642 = scalar_lea.sflag [#allocation4], %s1641
          %s1643 = sand.u32 %s1189, 1
          %s1644 = smul.addr %s1643, 32
          %s1645 = scalar_lea.vmem [#allocation18], %s1644
          %s1646 = ssub.s32 %s108, 1
          %p1647 = scmp.gt.s32.totalorder %s1646, 0
          %s1648 = scalar_select %p1647, %s1646, 0
          %p1649 = scmp.lt.s32.totalorder %s1648, 1
          %s1650 = scalar_select %p1649, %s1648, 1
          %1652 = vsyncadd %s1642, 0
          %s1653 = smul.addr %s1650, 8
          %s1654 = smul.addr %s1653, 4
          %s1655 = scalar_lea.hbm %s85, %s1654
          %s1656 = sshll.u32 %s1655, 4
          %s1657 = int_to_ptr.hbm [resolvable:$true] %s1656
          %s1658 = sshll.u32 %s1645, 4
          %s1659 = int_to_ptr.vmem [resolvable:$true] %s1658
          %1664 = dma.hbm_to_vmem [thread:$0]  %s1657, 512, %s1659, %s1642, 64, 64, 4
        $region188: #{net_forward.1} parent=131 // pred_fallthru
          _
      $region132: #{net_forward.1} parent=5 // pred_fallthru
        _
      %p1665 = scmp.le.s32.totalorder 1, %s100
      %p1666 = scmp.lt.s32.totalorder %s100, 9
      %p1667 = pnand %p1665, %p1666
      %p1668 = pneg %p1667
      // Predicated region
      $region189: #{net_forward.1} parent=5 // pred_check
        _
      $region190: #{net_forward.1} parent=5 // pred_check_branch
        %1670 = sbr.rel (%p1667) target = $region192
      $region191: #{net_forward.1} parent=5 // pred_region
        %s1671 = ssub.s32 %s100, 1
        %s1672 = sand.u32 %s105, 1
        %s1673 = scalar_lea.sflag [#allocation4], %s1672
        %s1674 = sand.u32 %s151, 1
        %s1675 = scalar_lea.vmem [#allocation3], %s1674
        // Predicated region
        $region193: #{net_forward.1} parent=191 // pred_check
          %p1676 = pneg %p164
        $region194: #{net_forward.1} parent=191 // pred_check_branch
          %1678 = sbr.rel (%p1676) target = $region196
        $region195: #{net_forward.1} parent=191 // pred_region
          %1680 = dma.done %s1673, 16
        $region196: #{net_forward.1} parent=191 // pred_fallthru
          _
        // Predicated region
        $region197: #{net_forward.1} parent=191 // pred_check
          %p1681 = pneg %p458
        $region198: #{net_forward.1} parent=191 // pred_check_branch
          %1683 = sbr.rel (%p1681) target = $region200
        $region199: #{net_forward.1} parent=191 // pred_region
          %1685 = dma.done [#allocation6], 256
        $region200: #{net_forward.1} parent=191 // pred_fallthru
          _
        // Predicated region
        $region201: #{net_forward.1} parent=191 // pred_check
          %p1686 = pneg %p479
        $region202: #{net_forward.1} parent=191 // pred_check_branch
          %1688 = sbr.rel (%p1686) target = $region204
        $region203: #{net_forward.1} parent=191 // pred_region
          %1690 = dma.done [#allocation6], 512
        $region204: #{net_forward.1} parent=191 // pred_fallthru
          _
        // Predicated region
        $region205: #{net_forward.1} parent=191 // pred_check
          %p1691 = pneg %p500
        $region206: #{net_forward.1} parent=191 // pred_check_branch
          %1693 = sbr.rel (%p1691) target = $region208
        $region207: #{net_forward.1} parent=191 // pred_region
          %1695 = dma.done [#allocation9], 512
        $region208: #{net_forward.1} parent=191 // pred_fallthru
          _
        // Predicated region
        $region209: #{net_forward.1} parent=191 // pred_check
          %p1696 = pneg %p668
        $region210: #{net_forward.1} parent=191 // pred_check_branch
          %1698 = sbr.rel (%p1696) target = $region212
        $region211: #{net_forward.1} parent=191 // pred_region
          %1700 = dma.done [#allocation9], 512
        $region212: #{net_forward.1} parent=191 // pred_fallthru
          _
        // Predicated region
        $region213: #{net_forward.1} parent=191 // pred_check
          %p1701 = pneg %p689
        $region214: #{net_forward.1} parent=191 // pred_check_branch
          %1703 = sbr.rel (%p1701) target = $region216
        $region215: #{net_forward.1} parent=191 // pred_region
          %1705 = dma.done [#allocation12], 256
        $region216: #{net_forward.1} parent=191 // pred_fallthru
          _
        // Predicated region
        $region217: #{net_forward.1} parent=191 // pred_check
          %p1706 = pneg %p710
        $region218: #{net_forward.1} parent=191 // pred_check_branch
          %1708 = sbr.rel (%p1706) target = $region220
        $region219: #{net_forward.1} parent=191 // pred_region
          %1710 = dma.done [#allocation12], 256
        $region220: #{net_forward.1} parent=191 // pred_fallthru
          _
        // Predicated region
        $region221: #{net_forward.1} parent=191 // pred_check
          %p1711 = pneg %p752
        $region222: #{net_forward.1} parent=191 // pred_check_branch
          %1713 = sbr.rel (%p1711) target = $region224
        $region223: #{net_forward.1} parent=191 // pred_region
          %1715 = dma.done [#allocation15], 256
        $region224: #{net_forward.1} parent=191 // pred_fallthru
          _
        %s1716 = sand.u32 %s105, 1
        %s1717 = scalar_lea.sflag [#allocation4], %s1716
        %s1718 = sand.u32 %s1084, 1
        %s1719 = smul.addr %s1718, 32
        %s1720 = scalar_lea.vmem [#allocation16], %s1719
        // Predicated region
        $region225: #{net_forward.1} parent=191 // pred_check
          %p1721 = pneg %p1097
        $region226: #{net_forward.1} parent=191 // pred_check_branch
          %1723 = sbr.rel (%p1721) target = $region228
        $region227: #{net_forward.1} parent=191 // pred_region
          %1725 = dma.done %s1717, 512
        $region228: #{net_forward.1} parent=191 // pred_fallthru
          _
        %s1726 = sand.u32 %s105, 1
        %s1727 = scalar_lea.sflag [#allocation4], %s1726
        %s1728 = sand.u32 %s1156, 1
        %s1729 = smul.addr %s1728, 32
        %s1730 = scalar_lea.vmem [#allocation17], %s1729
        // Predicated region
        $region229: #{net_forward.1} parent=191 // pred_check
          %p1731 = pneg %p1169
        $region230: #{net_forward.1} parent=191 // pred_check_branch
          %1733 = sbr.rel (%p1731) target = $region232
        $region231: #{net_forward.1} parent=191 // pred_region
          %1735 = dma.done %s1727, 512
        $region232: #{net_forward.1} parent=191 // pred_fallthru
          _
        %s1736 = sand.u32 %s105, 1
        %s1737 = scalar_lea.sflag [#allocation4], %s1736
        %s1738 = sand.u32 %s1192, 1
        %s1739 = smul.addr %s1738, 32
        %s1740 = scalar_lea.vmem [#allocation18], %s1739
        // Predicated region
        $region233: #{net_forward.1} parent=191 // pred_check
          %p1741 = pneg %p1205
        $region234: #{net_forward.1} parent=191 // pred_check_branch
          %1743 = sbr.rel (%p1741) target = $region236
        $region235: #{net_forward.1} parent=191 // pred_region
          %1745 = dma.done %s1737, 512
        $region236: #{net_forward.1} parent=191 // pred_fallthru
          _
        %p1746 = scmp.lt.s32.totalorder %s109, 1
        %s1747 = scalar_select %p1746, %s109, 1
        %s1748 = smul.addr %s1747, 4
        %s1749 = scalar_lea.vmem %s1, %s1748
        %p1750 = pneg %p138
        %p1751 = pneg %p135
        %s1752 = sand.u32 %s105, 1
        %s1753 = scalar_lea.sflag [#allocation4], %s1752
        %s1754 = sand.u32 %s151, 1
        %s1755 = scalar_lea.vmem [#allocation3], %s1754
        %p1756 = pneg %p164
        %p1757 = pneg %p161
        %p1758 = pneg %p185
        %p1759 = pneg %p182
        %p1760 = pneg %p206
        %p1761 = pneg %p203
        %p1762 = pneg %p227
        %p1763 = pneg %p224
        %p1764 = pneg %p248
        %p1765 = pneg %p245
        %p1766 = pneg %p269
        %p1767 = pneg %p266
        %p1768 = pneg %p290
        %p1769 = pneg %p287
        %p1770 = pneg %p311
        %p1771 = pneg %p308
        %p1772 = pneg %p332
        %p1773 = pneg %p329
        %p1774 = pneg %p353
        %p1775 = pneg %p350
        %p1776 = pneg %p374
        %p1777 = pneg %p371
        %p1778 = pneg %p395
        %p1779 = pneg %p392
        %p1780 = pneg %p416
        %p1781 = pneg %p413
        %p1782 = pneg %p437
        %p1783 = pneg %p434
        %p1784 = pneg %p458
        %p1785 = pneg %p455
        %p1786 = pneg %p479
        %p1787 = pneg %p476
        %p1788 = pneg %p500
        %p1789 = pneg %p497
        %p1790 = pneg %p521
        %p1791 = pneg %p518
        %p1792 = pneg %p542
        %p1793 = pneg %p539
        %p1794 = pneg %p563
        %p1795 = pneg %p560
        %p1796 = pneg %p584
        %p1797 = pneg %p581
        %p1798 = pneg %p605
        %p1799 = pneg %p602
        %p1800 = pneg %p626
        %p1801 = pneg %p623
        %p1802 = pneg %p647
        %p1803 = pneg %p644
        %p1804 = pneg %p668
        %p1805 = pneg %p665
        %p1806 = pneg %p689
        %p1807 = pneg %p686
        %p1808 = pneg %p710
        %p1809 = pneg %p707
        %p1810 = pneg %p731
        %p1811 = pneg %p728
        %p1812 = pneg %p752
        %p1813 = pneg %p749
        %p1814 = pneg %p773
        %p1815 = pneg %p770
        %s1816 = ssub.s32 %s110, 1
        %p1817 = scmp.gt.s32.totalorder %s1816, 0
        %s1818 = scalar_select %p1817, %s1816, 0
        %p1819 = scmp.lt.s32.totalorder %s1818, 1
        %s1820 = scalar_select %p1819, %s1818, 1
        %p1821 = scmp.lt.s32.totalorder %s1820, 1
        %s1822 = scalar_select %p1821, %s1820, 1
        %s1823 = scalar_lea.vmem %s63, %s1822
        %p1824 = pneg %p809
        %p1825 = pneg %p806
        %s1826 = ssub.s32 %s110, 1
        %p1827 = scmp.gt.s32.totalorder %s1826, 0
        %s1828 = scalar_select %p1827, %s1826, 0
        %p1829 = scmp.lt.s32.totalorder %s1828, 1
        %s1830 = scalar_select %p1829, %s1828, 1
        %p1831 = scmp.lt.s32.totalorder %s1830, 1
        %s1832 = scalar_select %p1831, %s1830, 1
        %s1833 = scalar_lea.vmem %s65, %s1832
        %p1834 = pneg %p845
        %p1835 = pneg %p842
        %s1836 = ssub.s32 %s110, 1
        %p1837 = scmp.gt.s32.totalorder %s1836, 0
        %s1838 = scalar_select %p1837, %s1836, 0
        %p1839 = scmp.lt.s32.totalorder %s1838, 1
        %s1840 = scalar_select %p1839, %s1838, 1
        %p1841 = scmp.lt.s32.totalorder %s1840, 1
        %s1842 = scalar_select %p1841, %s1840, 1
        %s1843 = scalar_lea.vmem %s67, %s1842
        %p1844 = pneg %p881
        %p1845 = pneg %p878
        %s1846 = ssub.s32 %s110, 1
        %p1847 = scmp.gt.s32.totalorder %s1846, 0
        %s1848 = scalar_select %p1847, %s1846, 0
        %p1849 = scmp.lt.s32.totalorder %s1848, 1
        %s1850 = scalar_select %p1849, %s1848, 1
        %p1851 = scmp.lt.s32.totalorder %s1850, 1
        %s1852 = scalar_select %p1851, %s1850, 1
        %s1853 = scalar_lea.vmem %s69, %s1852
        %p1854 = pneg %p917
        %p1855 = pneg %p914
        %s1856 = ssub.s32 %s110, 1
        %p1857 = scmp.gt.s32.totalorder %s1856, 0
        %s1858 = scalar_select %p1857, %s1856, 0
        %p1859 = scmp.lt.s32.totalorder %s1858, 1
        %s1860 = scalar_select %p1859, %s1858, 1
        %p1861 = scmp.lt.s32.totalorder %s1860, 1
        %s1862 = scalar_select %p1861, %s1860, 1
        %s1863 = scalar_lea.vmem %s71, %s1862
        %p1864 = pneg %p953
        %p1865 = pneg %p950
        %s1866 = ssub.s32 %s110, 1
        %p1867 = scmp.gt.s32.totalorder %s1866, 0
        %s1868 = scalar_select %p1867, %s1866, 0
        %p1869 = scmp.lt.s32.totalorder %s1868, 1
        %s1870 = scalar_select %p1869, %s1868, 1
        %p1871 = scmp.lt.s32.totalorder %s1870, 1
        %s1872 = scalar_select %p1871, %s1870, 1
        %s1873 = scalar_lea.vmem %s73, %s1872
        %p1874 = pneg %p989
        %p1875 = pneg %p986
        %s1876 = ssub.s32 %s110, 1
        %p1877 = scmp.gt.s32.totalorder %s1876, 0
        %s1878 = scalar_select %p1877, %s1876, 0
        %p1879 = scmp.lt.s32.totalorder %s1878, 1
        %s1880 = scalar_select %p1879, %s1878, 1
        %p1881 = scmp.lt.s32.totalorder %s1880, 1
        %s1882 = scalar_select %p1881, %s1880, 1
        %s1883 = scalar_lea.vmem %s75, %s1882
        %p1884 = pneg %p1025
        %p1885 = pneg %p1022
        %s1886 = ssub.s32 %s110, 1
        %p1887 = scmp.gt.s32.totalorder %s1886, 0
        %s1888 = scalar_select %p1887, %s1886, 0
        %p1889 = scmp.lt.s32.totalorder %s1888, 1
        %s1890 = scalar_select %p1889, %s1888, 1
        %p1891 = scmp.lt.s32.totalorder %s1890, 1
        %s1892 = scalar_select %p1891, %s1890, 1
        %s1893 = scalar_lea.vmem %s77, %s1892
        %p1894 = pneg %p1061
        %p1895 = pneg %p1058
        %s1896 = sand.u32 %s105, 1
        %s1897 = scalar_lea.sflag [#allocation4], %s1896
        %s1898 = sand.u32 %s1084, 1
        %s1899 = smul.addr %s1898, 32
        %s1900 = scalar_lea.vmem [#allocation16], %s1899
        %p1901 = pneg %p1097
        %p1902 = pneg %p1094
        %s1903 = ssub.s32 %s110, 1
        %p1904 = scmp.gt.s32.totalorder %s1903, 0
        %s1905 = scalar_select %p1904, %s1903, 0
        %p1906 = scmp.lt.s32.totalorder %s1905, 1
        %s1907 = scalar_select %p1906, %s1905, 1
        %p1908 = scmp.lt.s32.totalorder %s1907, 1
        %s1909 = scalar_select %p1908, %s1907, 1
        %s1910 = smul.addr %s1909, 16
        %s1911 = smul.addr %s1910, 4
        %s1912 = scalar_lea.vmem %s81, %s1911
        %p1913 = pneg %p1133
        %p1914 = pneg %p1130
        %s1915 = sand.u32 %s105, 1
        %s1916 = scalar_lea.sflag [#allocation4], %s1915
        %s1917 = sand.u32 %s1156, 1
        %s1918 = smul.addr %s1917, 32
        %s1919 = scalar_lea.vmem [#allocation17], %s1918
        %p1920 = pneg %p1169
        %p1921 = pneg %p1166
        %s1922 = sand.u32 %s105, 1
        %s1923 = scalar_lea.sflag [#allocation4], %s1922
        %s1924 = sand.u32 %s1192, 1
        %s1925 = smul.addr %s1924, 32
        %s1926 = scalar_lea.vmem [#allocation18], %s1925
        %p1927 = pneg %p1205
        %p1928 = pneg %p1202
        %p1929 = pneg %p1231
        %p1930 = pneg %p1228
        %p1931 = scmp.lt.s32.totalorder %s109, 1
        %s1932 = scalar_select %p1931, %s109, 1
        %s1933 = smul.addr %s1932, 8
        %s1934 = scalar_lea.vmem %s87, %s1933
        %p1935 = scmp.lt.s32.totalorder %s109, 1
        %s1936 = scalar_select %p1935, %s109, 1
        %s1937 = smul.addr %s1936, 4
        %s1938 = scalar_lea.vmem %s1, %s1937
        %s1939 = ssub.s32 %s110, 1
        %p1940 = scmp.gt.s32.totalorder %s1939, 0
        %s1941 = scalar_select %p1940, %s1939, 0
        %p1942 = scmp.lt.s32.totalorder %s1941, 1
        %s1943 = scalar_select %p1942, %s1941, 1
        %p1944 = scmp.lt.s32.totalorder %s1943, 1
        %s1945 = scalar_select %p1944, %s1943, 1
        %s1946 = scalar_lea.vmem %s63, %s1945
        %s1947 = ssub.s32 %s110, 1
        %p1948 = scmp.gt.s32.totalorder %s1947, 0
        %s1949 = scalar_select %p1948, %s1947, 0
        %p1950 = scmp.lt.s32.totalorder %s1949, 1
        %s1951 = scalar_select %p1950, %s1949, 1
        %s1952 = ssub.s32 %s110, 1
        %p1953 = scmp.gt.s32.totalorder %s1952, 0
        %s1954 = scalar_select %p1953, %s1952, 0
        %p1955 = scmp.lt.s32.totalorder %s1954, 1
        %s1956 = scalar_select %p1955, %s1954, 1
        %p1957 = scmp.lt.s32.totalorder %s1956, 1
        %s1958 = scalar_select %p1957, %s1956, 1
        %s1959 = scalar_lea.vmem %s65, %s1958
        %s1960 = ssub.s32 %s110, 1
        %p1961 = scmp.gt.s32.totalorder %s1960, 0
        %s1962 = scalar_select %p1961, %s1960, 0
        %p1963 = scmp.lt.s32.totalorder %s1962, 1
        %s1964 = scalar_select %p1963, %s1962, 1
        %s1965 = ssub.s32 %s110, 1
        %p1966 = scmp.gt.s32.totalorder %s1965, 0
        %s1967 = scalar_select %p1966, %s1965, 0
        %p1968 = scmp.lt.s32.totalorder %s1967, 1
        %s1969 = scalar_select %p1968, %s1967, 1
        %p1970 = scmp.lt.s32.totalorder %s1969, 1
        %s1971 = scalar_select %p1970, %s1969, 1
        %s1972 = scalar_lea.vmem %s67, %s1971
        %s1973 = ssub.s32 %s110, 1
        %p1974 = scmp.gt.s32.totalorder %s1973, 0
        %s1975 = scalar_select %p1974, %s1973, 0
        %p1976 = scmp.lt.s32.totalorder %s1975, 1
        %s1977 = scalar_select %p1976, %s1975, 1
        %s1978 = ssub.s32 %s110, 1
        %p1979 = scmp.gt.s32.totalorder %s1978, 0
        %s1980 = scalar_select %p1979, %s1978, 0
        %p1981 = scmp.lt.s32.totalorder %s1980, 1
        %s1982 = scalar_select %p1981, %s1980, 1
        %p1983 = scmp.lt.s32.totalorder %s1982, 1
        %s1984 = scalar_select %p1983, %s1982, 1
        %s1985 = scalar_lea.vmem %s69, %s1984
        %s1986 = ssub.s32 %s110, 1
        %p1987 = scmp.gt.s32.totalorder %s1986, 0
        %s1988 = scalar_select %p1987, %s1986, 0
        %p1989 = scmp.lt.s32.totalorder %s1988, 1
        %s1990 = scalar_select %p1989, %s1988, 1
        %s1991 = ssub.s32 %s110, 1
        %p1992 = scmp.gt.s32.totalorder %s1991, 0
        %s1993 = scalar_select %p1992, %s1991, 0
        %p1994 = scmp.lt.s32.totalorder %s1993, 1
        %s1995 = scalar_select %p1994, %s1993, 1
        %p1996 = scmp.lt.s32.totalorder %s1995, 1
        %s1997 = scalar_select %p1996, %s1995, 1
        %s1998 = scalar_lea.vmem %s71, %s1997
        %s1999 = ssub.s32 %s110, 1
        %p2000 = scmp.gt.s32.totalorder %s1999, 0
        %s2001 = scalar_select %p2000, %s1999, 0
        %p2002 = scmp.lt.s32.totalorder %s2001, 1
        %s2003 = scalar_select %p2002, %s2001, 1
        %s2004 = ssub.s32 %s110, 1
        %p2005 = scmp.gt.s32.totalorder %s2004, 0
        %s2006 = scalar_select %p2005, %s2004, 0
        %p2007 = scmp.lt.s32.totalorder %s2006, 1
        %s2008 = scalar_select %p2007, %s2006, 1
        %p2009 = scmp.lt.s32.totalorder %s2008, 1
        %s2010 = scalar_select %p2009, %s2008, 1
        %s2011 = scalar_lea.vmem %s73, %s2010
        %s2012 = ssub.s32 %s110, 1
        %p2013 = scmp.gt.s32.totalorder %s2012, 0
        %s2014 = scalar_select %p2013, %s2012, 0
        %p2015 = scmp.lt.s32.totalorder %s2014, 1
        %s2016 = scalar_select %p2015, %s2014, 1
        %s2017 = ssub.s32 %s110, 1
        %p2018 = scmp.gt.s32.totalorder %s2017, 0
        %s2019 = scalar_select %p2018, %s2017, 0
        %p2020 = scmp.lt.s32.totalorder %s2019, 1
        %s2021 = scalar_select %p2020, %s2019, 1
        %p2022 = scmp.lt.s32.totalorder %s2021, 1
        %s2023 = scalar_select %p2022, %s2021, 1
        %s2024 = scalar_lea.vmem %s75, %s2023
        %s2025 = ssub.s32 %s110, 1
        %p2026 = scmp.gt.s32.totalorder %s2025, 0
        %s2027 = scalar_select %p2026, %s2025, 0
        %p2028 = scmp.lt.s32.totalorder %s2027, 1
        %s2029 = scalar_select %p2028, %s2027, 1
        %s2030 = ssub.s32 %s110, 1
        %p2031 = scmp.gt.s32.totalorder %s2030, 0
        %s2032 = scalar_select %p2031, %s2030, 0
        %p2033 = scmp.lt.s32.totalorder %s2032, 1
        %s2034 = scalar_select %p2033, %s2032, 1
        %p2035 = scmp.lt.s32.totalorder %s2034, 1
        %s2036 = scalar_select %p2035, %s2034, 1
        %s2037 = scalar_lea.vmem %s77, %s2036
        %s2038 = ssub.s32 %s110, 1
        %p2039 = scmp.gt.s32.totalorder %s2038, 0
        %s2040 = scalar_select %p2039, %s2038, 0
        %p2041 = scmp.lt.s32.totalorder %s2040, 1
        %s2042 = scalar_select %p2041, %s2040, 1
        %s2043 = ssub.s32 %s110, 1
        %p2044 = scmp.gt.s32.totalorder %s2043, 0
        %s2045 = scalar_select %p2044, %s2043, 0
        %p2046 = scmp.lt.s32.totalorder %s2045, 1
        %s2047 = scalar_select %p2046, %s2045, 1
        %s2048 = ssub.s32 %s110, 1
        %p2049 = scmp.gt.s32.totalorder %s2048, 0
        %s2050 = scalar_select %p2049, %s2048, 0
        %p2051 = scmp.lt.s32.totalorder %s2050, 1
        %s2052 = scalar_select %p2051, %s2050, 1
        %p2053 = scmp.lt.s32.totalorder %s2052, 1
        %s2054 = scalar_select %p2053, %s2052, 1
        %s2055 = smul.addr %s2054, 16
        %s2056 = smul.addr %s2055, 4
        %s2057 = scalar_lea.vmem %s81, %s2056
        %s2058 = ssub.s32 %s110, 1
        %p2059 = scmp.gt.s32.totalorder %s2058, 0
        %s2060 = scalar_select %p2059, %s2058, 0
        %p2061 = scmp.lt.s32.totalorder %s2060, 1
        %s2062 = scalar_select %p2061, %s2060, 1
        %s2063 = ssub.s32 %s110, 1
        %p2064 = scmp.gt.s32.totalorder %s2063, 0
        %s2065 = scalar_select %p2064, %s2063, 0
        %p2066 = scmp.lt.s32.totalorder %s2065, 1
        %s2067 = scalar_select %p2066, %s2065, 1
        %s2068 = ssub.s32 %s110, 1
        %p2069 = scmp.gt.s32.totalorder %s2068, 0
        %s2070 = scalar_select %p2069, %s2068, 0
        %p2071 = scmp.lt.s32.totalorder %s2070, 1
        %s2072 = scalar_select %p2071, %s2070, 1
        %p2073 = scmp.lt.s32.totalorder %s109, 1
        %s2074 = scalar_select %p2073, %s109, 1
        %s2075 = smul.addr %s2074, 8
        %s2076 = scalar_lea.vmem %s87, %s2075
        %p2078 = scmp.eq.s32.totalorder %s110, 0
        // Predicated region
        $region237: #{net_forward.1} parent=191 // pred_check
          %p2079 = pneg %p2078
        $region238: #{net_forward.1} parent=191 // pred_check_branch
          %2081 = sbr.rel (%p2079) target = $region240
        $region239: #{net_forward.1} parent=191 // pred_region
          %v2082 = vld [vmem:[%s5] sm:$0x1]
          %v2083 = vld [vmem:[%s7] sm:$0x1]
          %v2084 = vld [vmem:[%s9] sm:$0x1]
          %v2085 = vld [vmem:[%s11] sm:$0x1]
          %v2086 = vld [vmem:[%s13] sm:$0x1]
          %v2087 = vld [vmem:[%s15] sm:$0x1]
          %v2088 = vld [vmem:[%s17] sm:$0x1]
          %v2089 = vld [vmem:[%s19] sm:$0x1]
          %v2090 = vld [vmem:[%s21] sm:$0x1]
          %v2091 = vld [vmem:[%s23] sm:$0x1]
          %v2092 = vld [vmem:[%s25] sm:$0x1]
          %v2093 = vld [vmem:[%s27] sm:$0xf]
          %v2094 = vld [vmem:[%s27 + $0x4] sm:$0xf]
          %v2095 = vld [vmem:[%s27 + $0x8] sm:$0xf]
          %v2096 = vld [vmem:[%s27 + $0xc] sm:$0xf]
          %v2097 = vld [vmem:[%s27 + $0x10] sm:$0xf]
          %v2098 = vld [vmem:[%s27 + $0x14] sm:$0xf]
          %v2099 = vld [vmem:[%s27 + $0x18] sm:$0xf]
          %v2100 = vld [vmem:[%s27 + $0x1c] sm:$0xf]
          %v2101 = vld [vmem:[%s29] sm:$0xf]
          %v2102 = vld [vmem:[%s29 + $0x4] sm:$0xf]
          %v2103 = vld [vmem:[%s29 + $0x8] sm:$0xf]
          %v2104 = vld [vmem:[%s29 + $0xc] sm:$0xf]
          %v2105 = vld [vmem:[%s29 + $0x10] sm:$0xf]
          %v2106 = vld [vmem:[%s29 + $0x14] sm:$0xf]
          %v2107 = vld [vmem:[%s29 + $0x18] sm:$0xf]
          %v2108 = vld [vmem:[%s29 + $0x1c] sm:$0xf]
          %v2109 = vld [vmem:[%s29 + $0x20] sm:$0xf]
          %v2110 = vld [vmem:[%s29 + $0x24] sm:$0xf]
          %v2111 = vld [vmem:[%s29 + $0x28] sm:$0xf]
          %v2112 = vld [vmem:[%s29 + $0x2c] sm:$0xf]
          %v2113 = vld [vmem:[%s29 + $0x30] sm:$0xf]
          %v2114 = vld [vmem:[%s29 + $0x34] sm:$0xf]
          %v2115 = vld [vmem:[%s29 + $0x38] sm:$0xf]
          %v2116 = vld [vmem:[%s29 + $0x3c] sm:$0xf]
          %v2117 = vld [vmem:[#allocation5] sm:$0xf]
          %v2118 = vld [vmem:[#allocation5 + $0x4] sm:$0xf]
          %v2119 = vld [vmem:[#allocation5 + $0x8] sm:$0xf]
          %v2120 = vld [vmem:[#allocation5 + $0xc] sm:$0xf]
          %v2121 = vld [vmem:[#allocation7] sm:$0xf]
          %v2122 = vld [vmem:[#allocation7 + $0x4] sm:$0xf]
          %v2123 = vld [vmem:[#allocation7 + $0x8] sm:$0xf]
          %v2124 = vld [vmem:[#allocation7 + $0xc] sm:$0xf]
          %v2125 = vld [vmem:[#allocation7 + $0x10] sm:$0xf]
          %v2126 = vld [vmem:[#allocation7 + $0x14] sm:$0xf]
          %v2127 = vld [vmem:[#allocation7 + $0x18] sm:$0xf]
          %v2128 = vld [vmem:[#allocation7 + $0x1c] sm:$0xf]
          %v2129 = vld [vmem:[#allocation8] sm:$0xf]
          %v2130 = vld [vmem:[#allocation8 + $0x4] sm:$0xf]
          %v2131 = vld [vmem:[#allocation8 + $0x8] sm:$0xf]
          %v2132 = vld [vmem:[#allocation8 + $0xc] sm:$0xf]
          %v2133 = vld [vmem:[#allocation8 + $0x10] sm:$0xf]
          %v2134 = vld [vmem:[#allocation8 + $0x14] sm:$0xf]
          %v2135 = vld [vmem:[#allocation8 + $0x18] sm:$0xf]
          %v2136 = vld [vmem:[#allocation8 + $0x1c] sm:$0xf]
          %v2137 = vld [vmem:[%s1938] sm:$0xf]
          %v2138 = vunpack.c.l.bf16 %v2137
          %v2139 = vld [vmem:[%s1675] sm:$0x1]
          %vm2140 = vcmp.gt.f32.partialorder %v2139, 0.0
          %v2141 = vld [vmem:[%s61] sm:$0xff]
          %vm2142 = vcmask 523264
          %v2143 = vsel %vm2142, %v2141, 0.0
          %2144 = vadd.xlane.f32.xlu0 %v2143
          %v2145 = vpop.xlane.xlu0 %2144
          %v2146 = vrcp.pop 64.0
          %v2147 = vmul.f32 64.0, %v2146
          %v2148 = vsub.f32 1.0, %v2147
          %v2149 = vmul.f32 %v2146, %v2148
          %v2150 = vadd.f32 %v2146, %v2149
          %vm2151 = vweird.f32 %v2146
          %v2152 = vsel %vm2151, %v2146, %v2150
          %v2153 = vmul.f32 %v2145, %v2152
          %v2154 = vsub.f32 %v2141, %v2153
          %v2155 = vmul.f32 %v2154, %v2154
          %v2156 = vsel %vm2142, %v2155, 0.0
          %2157 = vadd.xlane.f32.xlu0 %v2156
          %v2158 = vpop.xlane.xlu0 %2157
          %v2159 = vmul.f32 %v2158, %v2152
          %v2160 = vadd.f32 %v2159, 1e-05
          %v2161 = vrsqrt.pop %v2160
          %v2162 = vmul.f32 %v2161, %v2160
          %v2163 = vmul.f32 %v2162, %v2161
          %v2164 = vmul.f32 0.5, %v2163
          %v2165 = vsub.f32 1.5, %v2164
          %v2166 = vmul.f32 %v2161, %v2165
          %vm2167 = vweird.f32 %v2160
          %vm2168 = vweird.f32 %v2161
          %vm2169 = vmor %vm2167, %vm2168
          %v2170 = vsel %vm2169, %v2161, %v2166
          %v2171 = vmul.f32 %v2154, %v2170
          %v2173 = vperm.slane %v2092, 0
          %v2175 = vmul.f32 %v2171, %v2173
          %v2177 = vperm.slane %v2091, 0
          %v2179 = vadd.f32 %v2175, %v2177
          %vm2180 = vcmask 261120
          %v2181 = vsel %vm2180, %v2138, 0.0
          %2182 = vadd.xlane.f32.xlu0 %v2181
          %v2183 = vpop.xlane.xlu0 %2182
          %v2184 = vrcp.pop 32.0
          %v2185 = vmul.f32 32.0, %v2184
          %v2186 = vsub.f32 1.0, %v2185
          %v2187 = vmul.f32 %v2184, %v2186
          %v2188 = vadd.f32 %v2184, %v2187
          %vm2189 = vweird.f32 %v2184
          %v2190 = vsel %vm2189, %v2184, %v2188
          %v2191 = vmul.f32 %v2183, %v2190
          %v2192 = vsub.f32 %v2138, %v2191
          %v2193 = vmul.f32 %v2192, %v2192
          %v2194 = vsel %vm2180, %v2193, 0.0
          %2195 = vadd.xlane.f32.xlu0 %v2194
          %v2196 = vpop.xlane.xlu0 %2195
          %v2197 = vmul.f32 %v2196, %v2190
          %v2198 = vadd.f32 %v2197, 1e-05
          %v2199 = vrsqrt.pop %v2198
          %v2200 = vmul.f32 %v2199, %v2198
          %v2201 = vmul.f32 %v2200, %v2199
          %v2202 = vmul.f32 0.5, %v2201
          %v2203 = vsub.f32 1.5, %v2202
          %v2204 = vmul.f32 %v2199, %v2203
          %vm2205 = vweird.f32 %v2198
          %vm2206 = vweird.f32 %v2199
          %vm2207 = vmor %vm2205, %vm2206
          %v2208 = vsel %vm2207, %v2199, %v2204
          %v2209 = vmul.f32 %v2192, %v2208
          %v2211 = vperm.slane %v2088, 0
          %v2213 = vmul.f32 %v2209, %v2211
          %v2215 = vperm.slane %v2087, 0
          %v2217 = vadd.f32 %v2213, %v2215
          %v2218 = vpack.c.bf16 %v2179, %v2179
          %v2220 = vperm.slane %v2086, 0
          %v2230 = vunpack.c.l.b16 %v2129
          %v2231 = vunpack.c.l.b16 %v2130
          %v2232 = vunpack.c.l.b16 %v2131
          %v2233 = vunpack.c.l.b16 %v2132
          %v2234 = vunpack.c.l.b16 %v2133
          %v2235 = vunpack.c.l.b16 %v2134
          %v2236 = vunpack.c.l.b16 %v2135
          %v2237 = vunpack.c.l.b16 %v2136
          %v2238 = vpack.c.b16 %v2231, %v2230
          %v2239 = vpack.c.b16 %v2233, %v2232
          %v2240 = vpack.c.b16 %v2235, %v2234
          %v2241 = vpack.c.b16 %v2237, %v2236
          %v2247 = vsel %vm2142, %v2218, 0
          %2249 = vmatpush.bf16.msra.mxu0 0
          %2250 = vmatpush.bf16.msra.mxu0 0
          %2251 = vmatpush.bf16.msra.mxu0 0
          %2252 = vmatpush.bf16.msra.mxu0 0
          %2253 = vmatpush.bf16.msra.mxu0 %v2241
          %2254 = vmatpush.bf16.msra.mxu0 %v2240
          %2255 = vmatpush.bf16.msra.mxu0 %v2239
          %2256 = vmatpush.bf16.msra.mxu0 %v2238
          %2257 = vmatmul.bf16.gmra.mxu0 %v2247
          %v2258 = vpop.f32.mrf.mxu0
          %v2259 = vadd.f32 %v2220, %v2258
          %v2260 = vpop.f32.mrf.mxu0
          %2261 = vdwg.mxu0
          %v2262 = vmul.f32 %v2259, 0.25
          %v2263 = vpack.c.bf16 %v2217, %v2217
          %v2265 = vperm.slane %v2084, 0
          %v2271 = vunpack.c.l.b16 %v2117
          %v2272 = vunpack.c.l.b16 %v2118
          %v2273 = vunpack.c.l.b16 %v2119
          %v2274 = vunpack.c.l.b16 %v2120
          %v2275 = vpack.c.b16 %v2272, %v2271
          %v2276 = vpack.c.b16 %v2274, %v2273
          %v2280 = vsel %vm2180, %v2263, 0
          %2282 = vmatpush.bf16.msra.mxu0 0
          %2283 = vmatpush.bf16.msra.mxu0 0
          %2284 = vmatpush.bf16.msra.mxu0 0
          %2285 = vmatpush.bf16.msra.mxu0 0
          %2286 = vmatpush.bf16.msra.mxu0 0
          %2287 = vmatpush.bf16.msra.mxu0 0
          %2288 = vmatpush.bf16.msra.mxu0 %v2276
          %2289 = vmatpush.bf16.msra.mxu0 %v2275
          %2290 = vmatmul.bf16.gmra.mxu0 %v2280
          %v2291 = vpop.f32.mrf.mxu0
          %v2292 = vadd.f32 %v2265, %v2291
          %v2293 = vpop.f32.mrf.mxu0
          %2294 = vdwg.mxu0
          %v2295 = vpack.c.bf16 %v2262, %v2262
          %v2296 = vpack.c.bf16 %v2292, %v2292
          %vm2297 = vcmask 130048
          %v2299 = vsel %vm2297, %v2295, 0
          %v2302 = vsel %vm2297, %v2296, 0
          %2304 = vmatpush.bf16.xpose.msra.mxu0 0
          %2305 = vmatpush.bf16.xpose.msra.mxu0 0
          %2306 = vmatpush.bf16.xpose.msra.mxu0 0
          %2307 = vmatpush.bf16.xpose.msra.mxu0 0
          %2308 = vmatpush.bf16.xpose.msra.mxu0 0
          %2309 = vmatpush.bf16.xpose.msra.mxu0 0
          %2310 = vmatpush.bf16.xpose.msra.mxu0 0
          %2311 = vmatpush.bf16.xpose.msra.mxu0 %v2302
          %2312 = vmatmul.bf16.gmra.mxu0 %v2299
          %v2313 = vpop.f32.mrf.mxu0
          %v2314 = vadd.f32 0.0, %v2313
          %v2315 = vpop.f32.mrf.mxu0
          %2316 = vdwg.mxu0
          %v2317 = vsel %vm2140, 1, 0
          %v2318 = vperm.slane %v2317, 0
          %vm2319 = vcmp.eq.s32.totalorder %v2318, 1
          %v2320 = vsel %vm2319, %v2314, -1e+30
          %vm2321 = vcmask 64512
          %v2322 = vsel %vm2321, %v2320, -inf
          %2323 = vmax.xlane.f32.xlu0 %v2322
          %v2324 = vpop.xlane.xlu0 %2323
          %v2325 = vsub.f32 %v2320, %v2324
          %v2326 = vmul.f32 %v2325, 1.442695
          %v2327 = vpow.pop %v2326
          %v2328 = vsel %vm2321, %v2327, 0.0
          %2329 = vadd.xlane.f32.xlu0 %v2328
          %v2330 = vpop.xlane.xlu0 %2329
          %v2331 = vrcp.pop %v2330
          %v2332 = vmul.f32 %v2327, %v2331
          %v2333 = vpack.c.bf16 %v2332, %v2332
          %v2335 = vunpack.c.l.b16 %v2296
          %v2336 = vpack.c.b16 %v2335, %v2335
          %2337 = vrot.lane.b32.xlu0 %v2336, 112
          %v2338 = vpop.permute.xlu0 %2337
          %v2340 = vsel %vm2321, %v2333, 0
          %vm2342 = vcmask 1043456
          %v2344 = vsel %vm2342, %v2338, 0
          %2346 = vmatpush.bf16.msra.mxu0 0
          %2347 = vmatpush.bf16.msra.mxu0 0
          %2348 = vmatpush.bf16.msra.mxu0 0
          %2349 = vmatpush.bf16.msra.mxu0 0
          %2350 = vmatpush.bf16.msra.mxu0 0
          %2351 = vmatpush.bf16.msra.mxu0 0
          %2352 = vmatpush.bf16.msra.mxu0 0
          %2353 = vmatpush.bf16.msra.mxu0 %v2344
          %2354 = vmatmul.bf16.gmra.mxu0 %v2340
          %v2355 = vpop.f32.mrf.mxu0
          %v2356 = vadd.f32 0.0, %v2355
          %v2357 = vpop.f32.mrf.mxu0
          %2358 = vdwg.mxu0
          %v2359 = vpack.c.bf16 %v2356, %v2356
          %v2361 = vperm.slane %v2085, 0
          %v2371 = vunpack.c.l.b16 %v2121
          %v2372 = vunpack.c.l.b16 %v2122
          %v2373 = vunpack.c.l.b16 %v2123
          %v2374 = vunpack.c.l.b16 %v2124
          %v2375 = vunpack.c.l.b16 %v2125
          %v2376 = vunpack.c.l.b16 %v2126
          %v2377 = vunpack.c.l.b16 %v2127
          %v2378 = vunpack.c.l.b16 %v2128
          %v2379 = vpack.c.b16 %v2372, %v2371
          %v2380 = vpack.c.b16 %v2374, %v2373
          %v2381 = vpack.c.b16 %v2376, %v2375
          %v2382 = vpack.c.b16 %v2378, %v2377
          %v2388 = vsel %vm2142, %v2359, 0
          %2390 = vmatpush.bf16.msra.mxu0 0
          %2391 = vmatpush.bf16.msra.mxu0 0
          %2392 = vmatpush.bf16.msra.mxu0 0
          %2393 = vmatpush.bf16.msra.mxu0 0
          %2394 = vmatpush.bf16.msra.mxu0 %v2382
          %2395 = vmatpush.bf16.msra.mxu0 %v2381
          %2396 = vmatpush.bf16.msra.mxu0 %v2380
          %2397 = vmatpush.bf16.msra.mxu0 %v2379
          %2398 = vmatmul.bf16.gmra.mxu0 %v2388
          %v2399 = vpop.f32.mrf.mxu0
          %v2400 = vadd.f32 %v2361, %v2399
          %v2401 = vpop.f32.mrf.mxu0
          %2402 = vdwg.mxu0
          %v2403 = vadd.f32 %v2141, %v2400
          %v2404 = vsel %vm2142, %v2403, 0.0
          %2405 = vadd.xlane.f32.xlu0 %v2404
          %v2406 = vpop.xlane.xlu0 %2405
          %v2407 = vmul.f32 %v2406, %v2152
          %v2408 = vsub.f32 %v2403, %v2407
          %v2409 = vmul.f32 %v2408, %v2408
          %v2410 = vsel %vm2142, %v2409, 0.0
          %2411 = vadd.xlane.f32.xlu0 %v2410
          %v2412 = vpop.xlane.xlu0 %2411
          %v2413 = vmul.f32 %v2412, %v2152
          %v2414 = vadd.f32 %v2413, 1e-05
          %v2415 = vrsqrt.pop %v2414
          %v2416 = vmul.f32 %v2415, %v2414
          %v2417 = vmul.f32 %v2416, %v2415
          %v2418 = vmul.f32 0.5, %v2417
          %v2419 = vsub.f32 1.5, %v2418
          %v2420 = vmul.f32 %v2415, %v2419
          %vm2421 = vweird.f32 %v2414
          %vm2422 = vweird.f32 %v2415
          %vm2423 = vmor %vm2421, %vm2422
          %v2424 = vsel %vm2423, %v2415, %v2420
          %v2425 = vmul.f32 %v2408, %v2424
          %v2427 = vperm.slane %v2090, 0
          %v2429 = vmul.f32 %v2425, %v2427
          %v2431 = vperm.slane %v2089, 0
          %v2433 = vadd.f32 %v2429, %v2431
          %v2434 = vpack.c.bf16 %v2433, %v2433
          %v2436 = vperm.slane %v2082, 0
          %v2446 = vunpack.c.l.b16 %v2093
          %v2447 = vunpack.c.l.b16 %v2094
          %v2448 = vunpack.c.l.b16 %v2095
          %v2449 = vunpack.c.l.b16 %v2096
          %v2450 = vunpack.c.l.b16 %v2097
          %v2451 = vunpack.c.l.b16 %v2098
          %v2452 = vunpack.c.l.b16 %v2099
          %v2453 = vunpack.c.l.b16 %v2100
          %v2454 = vpack.c.b16 %v2447, %v2446
          %v2455 = vpack.c.b16 %v2449, %v2448
          %v2456 = vpack.c.b16 %v2451, %v2450
          %v2457 = vpack.c.b16 %v2453, %v2452
          %v2463 = vsel %vm2142, %v2434, 0
          %2465 = vmatpush.bf16.msra.mxu0 0
          %2466 = vmatpush.bf16.msra.mxu0 0
          %2467 = vmatpush.bf16.msra.mxu0 0
          %2468 = vmatpush.bf16.msra.mxu0 0
          %2469 = vmatpush.bf16.msra.mxu0 %v2457
          %2470 = vmatpush.bf16.msra.mxu0 %v2456
          %2471 = vmatpush.bf16.msra.mxu0 %v2455
          %2472 = vmatpush.bf16.msra.mxu0 %v2454
          %2473 = vmatmul.bf16.gmra.mxu0 %v2463
          %v2474 = vpop.f32.mrf.mxu0
          %v2475 = vadd.f32 %v2436, %v2474
          %v2476 = vpop.f32.mrf.mxu0
          %2477 = vdwg.mxu0
          %v2478 = vmul.f32 %v2475, %v2475
          %v2479 = vmul.f32 %v2475, %v2478
          %v2480 = vmul.f32 %v2479, 0.044715
          %v2481 = vadd.f32 %v2475, %v2480
          %v2482 = vmul.f32 %v2481, 0.7978846
          %v2483 = vtanh.pop %v2482
          %v2484 = vadd.f32 %v2483, 1.0
          %v2485 = vmul.f32 %v2484, 0.5
          %v2486 = vmul.f32 %v2475, %v2485
          %v2487 = vpack.c.bf16 %v2486, %v2486
          %v2489 = vperm.slane %v2083, 0
          %v2507 = vunpack.c.l.b16 %v2101
          %v2508 = vunpack.c.l.b16 %v2102
          %v2509 = vunpack.c.l.b16 %v2103
          %v2510 = vunpack.c.l.b16 %v2104
          %v2511 = vunpack.c.l.b16 %v2105
          %v2512 = vunpack.c.l.b16 %v2106
          %v2513 = vunpack.c.l.b16 %v2107
          %v2514 = vunpack.c.l.b16 %v2108
          %v2515 = vunpack.c.l.b16 %v2109
          %v2516 = vunpack.c.l.b16 %v2110
          %v2517 = vunpack.c.l.b16 %v2111
          %v2518 = vunpack.c.l.b16 %v2112
          %v2519 = vunpack.c.l.b16 %v2113
          %v2520 = vunpack.c.l.b16 %v2114
          %v2521 = vunpack.c.l.b16 %v2115
          %v2522 = vunpack.c.l.b16 %v2116
          %v2523 = vpack.c.b16 %v2508, %v2507
          %v2524 = vpack.c.b16 %v2510, %v2509
          %v2525 = vpack.c.b16 %v2512, %v2511
          %v2526 = vpack.c.b16 %v2514, %v2513
          %v2527 = vpack.c.b16 %v2516, %v2515
          %v2528 = vpack.c.b16 %v2518, %v2517
          %v2529 = vpack.c.b16 %v2520, %v2519
          %v2530 = vpack.c.b16 %v2522, %v2521
          %2539 = vmatpush.bf16.msra.mxu0 %v2530
          %2540 = vmatpush.bf16.msra.mxu0 %v2529
          %2541 = vmatpush.bf16.msra.mxu0 %v2528
          %2542 = vmatpush.bf16.msra.mxu0 %v2527
          %2543 = vmatpush.bf16.msra.mxu0 %v2526
          %2544 = vmatpush.bf16.msra.mxu0 %v2525
          %2545 = vmatpush.bf16.msra.mxu0 %v2524
          %2546 = vmatpush.bf16.msra.mxu0 %v2523
          %2547 = vmatmul.bf16.gmra.mxu0 %v2487
          %v2548 = vpop.f32.mrf.mxu0
          %v2549 = vadd.f32 %v2489, %v2548
          %v2550 = vpop.f32.mrf.mxu0
          %2551 = vdwg.mxu0
          %v2552 = vadd.f32 %v2403, %v2549
          %2553 = vst.msk [vmem:[#allocation2] sm:$0xff] %vm2142, %v2552
        $region240: #{net_forward.1} parent=191 // pred_fallthru
          _
        %p2554 = scmp.gt.s32.totalorder %s110, 0
        %p2555 = scmp.lt.s32.totalorder %s110, 3
        %p2556 = pnand %p2554, %p2555
        %p2557 = pneg %p2556
        // Predicated region
        $region241: #{net_forward.1} parent=191 // pred_check
          _
        $region242: #{net_forward.1} parent=191 // pred_check_branch
          %2559 = sbr.rel (%p2556) target = $region244
        $region243: #{net_forward.1} parent=191 // pred_region
          %v2560 = vld [vmem:[%s1946] sm:$0x1]
          %v2561 = vld [vmem:[%s1959] sm:$0x1]
          %v2562 = vld [vmem:[%s1972] sm:$0x1]
          %v2563 = vld [vmem:[%s1985] sm:$0x1]
          %v2564 = vld [vmem:[%s1998] sm:$0x1]
          %v2565 = vld [vmem:[%s2011] sm:$0x1]
          %v2566 = vld [vmem:[%s2024] sm:$0x1]
          %v2567 = vld [vmem:[%s2037] sm:$0x1]
          %v2568 = vld [vmem:[%s1720] sm:$0xf]
          %v2569 = vld [vmem:[%s1720 + $0x4] sm:$0xf]
          %v2570 = vld [vmem:[%s1720 + $0x8] sm:$0xf]
          %v2571 = vld [vmem:[%s1720 + $0xc] sm:$0xf]
          %v2572 = vld [vmem:[%s1720 + $0x10] sm:$0xf]
          %v2573 = vld [vmem:[%s1720 + $0x14] sm:$0xf]
          %v2574 = vld [vmem:[%s1720 + $0x18] sm:$0xf]
          %v2575 = vld [vmem:[%s1720 + $0x1c] sm:$0xf]
          %v2576 = vld [vmem:[%s2057] sm:$0xf]
          %v2577 = vld [vmem:[%s2057 + $0x4] sm:$0xf]
          %v2578 = vld [vmem:[%s2057 + $0x8] sm:$0xf]
          %v2579 = vld [vmem:[%s2057 + $0xc] sm:$0xf]
          %v2580 = vld [vmem:[%s2057 + $0x10] sm:$0xf]
          %v2581 = vld [vmem:[%s2057 + $0x14] sm:$0xf]
          %v2582 = vld [vmem:[%s2057 + $0x18] sm:$0xf]
          %v2583 = vld [vmem:[%s2057 + $0x1c] sm:$0xf]
          %v2584 = vld [vmem:[%s2057 + $0x20] sm:$0xf]
          %v2585 = vld [vmem:[%s2057 + $0x24] sm:$0xf]
          %v2586 = vld [vmem:[%s2057 + $0x28] sm:$0xf]
          %v2587 = vld [vmem:[%s2057 + $0x2c] sm:$0xf]
          %v2588 = vld [vmem:[%s2057 + $0x30] sm:$0xf]
          %v2589 = vld [vmem:[%s2057 + $0x34] sm:$0xf]
          %v2590 = vld [vmem:[%s2057 + $0x38] sm:$0xf]
          %v2591 = vld [vmem:[%s2057 + $0x3c] sm:$0xf]
          %v2592 = vld [vmem:[%s1730] sm:$0xf]
          %v2593 = vld [vmem:[%s1730 + $0x4] sm:$0xf]
          %v2594 = vld [vmem:[%s1730 + $0x8] sm:$0xf]
          %v2595 = vld [vmem:[%s1730 + $0xc] sm:$0xf]
          %v2596 = vld [vmem:[%s1730 + $0x10] sm:$0xf]
          %v2597 = vld [vmem:[%s1730 + $0x14] sm:$0xf]
          %v2598 = vld [vmem:[%s1730 + $0x18] sm:$0xf]
          %v2599 = vld [vmem:[%s1730 + $0x1c] sm:$0xf]
          %v2600 = vld [vmem:[%s1740] sm:$0xf]
          %v2601 = vld [vmem:[%s1740 + $0x4] sm:$0xf]
          %v2602 = vld [vmem:[%s1740 + $0x8] sm:$0xf]
          %v2603 = vld [vmem:[%s1740 + $0xc] sm:$0xf]
          %v2604 = vld [vmem:[%s1740 + $0x10] sm:$0xf]
          %v2605 = vld [vmem:[%s1740 + $0x14] sm:$0xf]
          %v2606 = vld [vmem:[%s1740 + $0x18] sm:$0xf]
          %v2607 = vld [vmem:[%s1740 + $0x1c] sm:$0xf]
          %v2608 = vld [vmem:[#allocation2] sm:$0xff]
          %vm2609 = vcmask 523264
          %v2610 = vsel %vm2609, %v2608, 0.0
          %2611 = vadd.xlane.f32.xlu0 %v2610
          %v2612 = vpop.xlane.xlu0 %2611
          %v2613 = vrcp.pop 64.0
          %v2614 = vmul.f32 64.0, %v2613
          %v2615 = vsub.f32 1.0, %v2614
          %v2616 = vmul.f32 %v2613, %v2615
          %v2617 = vadd.f32 %v2613, %v2616
          %vm2618 = vweird.f32 %v2613
          %v2619 = vsel %vm2618, %v2613, %v2617
          %v2620 = vmul.f32 %v2612, %v2619
          %v2621 = vsub.f32 %v2608, %v2620
          %v2622 = vmul.f32 %v2621, %v2621
          %v2623 = vsel %vm2609, %v2622, 0.0
          %2624 = vadd.xlane.f32.xlu0 %v2623
          %v2625 = vpop.xlane.xlu0 %2624
          %v2626 = vmul.f32 %v2625, %v2619
          %v2627 = vadd.f32 %v2626, 1e-05
          %v2628 = vrsqrt.pop %v2627
          %v2629 = vmul.f32 %v2628, %v2627
          %v2630 = vmul.f32 %v2629, %v2628
          %v2631 = vmul.f32 0.5, %v2630
          %v2632 = vsub.f32 1.5, %v2631
          %v2633 = vmul.f32 %v2628, %v2632
          %vm2634 = vweird.f32 %v2627
          %vm2635 = vweird.f32 %v2628
          %vm2636 = vmor %vm2634, %vm2635
          %v2637 = vsel %vm2636, %v2628, %v2633
          %v2638 = vmul.f32 %v2621, %v2637
          %v2640 = vperm.slane %v2565, 0
          %v2642 = vmul.f32 %v2638, %v2640
          %v2644 = vperm.slane %v2564, 0
          %v2646 = vadd.f32 %v2642, %v2644
          %v2647 = vpack.c.bf16 %v2646, %v2646
          %v2649 = vperm.slane %v2563, 0
          %v2659 = vunpack.c.l.b16 %v2600
          %v2660 = vunpack.c.l.b16 %v2601
          %v2661 = vunpack.c.l.b16 %v2602
          %v2662 = vunpack.c.l.b16 %v2603
          %v2663 = vunpack.c.l.b16 %v2604
          %v2664 = vunpack.c.l.b16 %v2605
          %v2665 = vunpack.c.l.b16 %v2606
          %v2666 = vunpack.c.l.b16 %v2607
          %v2667 = vpack.c.b16 %v2660, %v2659
          %v2668 = vpack.c.b16 %v2662, %v2661
          %v2669 = vpack.c.b16 %v2664, %v2663
          %v2670 = vpack.c.b16 %v2666, %v2665
          %v2676 = vsel %vm2609, %v2647, 0
          %2678 = vmatpush.bf16.msra.mxu0 0
          %2679 = vmatpush.bf16.msra.mxu0 0
          %2680 = vmatpush.bf16.msra.mxu0 0
          %2681 = vmatpush.bf16.msra.mxu0 0
          %2682 = vmatpush.bf16.msra.mxu0 %v2670
          %2683 = vmatpush.bf16.msra.mxu0 %v2669
          %2684 = vmatpush.bf16.msra.mxu0 %v2668
          %2685 = vmatpush.bf16.msra.mxu0 %v2667
          %2686 = vmatmul.bf16.gmra.mxu0 %v2676
          %v2687 = vpop.f32.mrf.mxu0
          %v2688 = vadd.f32 %v2649, %v2687
          %v2689 = vpop.f32.mrf.mxu0
          %2690 = vdwg.mxu0
          %v2691 = vmul.f32 %v2688, 0.25
          %v2692 = vpack.c.bf16 %v2691, %v2691
          %v2693 = vpack.c.bf16 %v2688, %v2688
          %v2695 = vunpack.c.l.b16 %v2693
          %v2696 = vpack.c.b16 %v2695, %v2695
          %2697 = vrot.lane.b32.xlu0 %v2696, 112
          %v2698 = vpop.permute.xlu0 %2697
          %vm2699 = vcmask 130048
          %v2701 = vsel %vm2699, %v2692, 0
          %v2704 = vsel %vm2699, %v2698, 0
          %2706 = vmatpush.bf16.xpose.msra.mxu0 0
          %2707 = vmatpush.bf16.xpose.msra.mxu0 0
          %2708 = vmatpush.bf16.xpose.msra.mxu0 0
          %2709 = vmatpush.bf16.xpose.msra.mxu0 0
          %2710 = vmatpush.bf16.xpose.msra.mxu0 0
          %2711 = vmatpush.bf16.xpose.msra.mxu0 0
          %2712 = vmatpush.bf16.xpose.msra.mxu0 0
          %2713 = vmatpush.bf16.xpose.msra.mxu0 %v2704
          %2714 = vmatmul.bf16.gmra.mxu0 %v2701
          %v2715 = vpop.f32.mrf.mxu0
          %v2716 = vadd.f32 0.0, %v2715
          %v2717 = vpop.f32.mrf.mxu0
          %2718 = vdwg.mxu0
          %vm2719 = vcmask 64512
          %v2720 = vsel %vm2719, %v2716, -inf
          %2721 = vmax.xlane.f32.xlu0 %v2720
          %v2722 = vpop.xlane.xlu0 %2721
          %v2723 = vsub.f32 %v2716, %v2722
          %v2724 = vmul.f32 %v2723, 1.442695
          %v2725 = vpow.pop %v2724
          %v2726 = vsel %vm2719, %v2725, 0.0
          %2727 = vadd.xlane.f32.xlu0 %v2726
          %v2728 = vpop.xlane.xlu0 %2727
          %v2729 = vrcp.pop %v2728
          %v2730 = vmul.f32 %v2725, %v2729
          %v2731 = vpack.c.bf16 %v2730, %v2730
          %2732 = vrot.lane.b32.xlu0 %v2696, 96
          %v2733 = vpop.permute.xlu0 %2732
          %v2735 = vsel %vm2719, %v2731, 0
          %vm2737 = vcmask 1043456
          %v2739 = vsel %vm2737, %v2733, 0
          %2741 = vmatpush.bf16.msra.mxu0 0
          %2742 = vmatpush.bf16.msra.mxu0 0
          %2743 = vmatpush.bf16.msra.mxu0 0
          %2744 = vmatpush.bf16.msra.mxu0 0
          %2745 = vmatpush.bf16.msra.mxu0 0
          %2746 = vmatpush.bf16.msra.mxu0 0
          %2747 = vmatpush.bf16.msra.mxu0 0
          %2748 = vmatpush.bf16.msra.mxu0 %v2739
          %2749 = vmatmul.bf16.gmra.mxu0 %v2735
          %v2750 = vpop.f32.mrf.mxu0
          %v2751 = vadd.f32 0.0, %v2750
          %v2752 = vpop.f32.mrf.mxu0
          %2753 = vdwg.mxu0
          %v2754 = vpack.c.bf16 %v2751, %v2751
          %v2756 = vperm.slane %v2562, 0
          %v2766 = vunpack.c.l.b16 %v2592
          %v2767 = vunpack.c.l.b16 %v2593
          %v2768 = vunpack.c.l.b16 %v2594
          %v2769 = vunpack.c.l.b16 %v2595
          %v2770 = vunpack.c.l.b16 %v2596
          %v2771 = vunpack.c.l.b16 %v2597
          %v2772 = vunpack.c.l.b16 %v2598
          %v2773 = vunpack.c.l.b16 %v2599
          %v2774 = vpack.c.b16 %v2767, %v2766
          %v2775 = vpack.c.b16 %v2769, %v2768
          %v2776 = vpack.c.b16 %v2771, %v2770
          %v2777 = vpack.c.b16 %v2773, %v2772
          %v2783 = vsel %vm2609, %v2754, 0
          %2785 = vmatpush.bf16.msra.mxu0 0
          %2786 = vmatpush.bf16.msra.mxu0 0
          %2787 = vmatpush.bf16.msra.mxu0 0
          %2788 = vmatpush.bf16.msra.mxu0 0
          %2789 = vmatpush.bf16.msra.mxu0 %v2777
          %2790 = vmatpush.bf16.msra.mxu0 %v2776
          %2791 = vmatpush.bf16.msra.mxu0 %v2775
          %2792 = vmatpush.bf16.msra.mxu0 %v2774
          %2793 = vmatmul.bf16.gmra.mxu0 %v2783
          %v2794 = vpop.f32.mrf.mxu0
          %v2795 = vadd.f32 %v2756, %v2794
          %v2796 = vpop.f32.mrf.mxu0
          %2797 = vdwg.mxu0
          %v2798 = vadd.f32 %v2608, %v2795
          %v2799 = vsel %vm2609, %v2798, 0.0
          %2800 = vadd.xlane.f32.xlu0 %v2799
          %v2801 = vpop.xlane.xlu0 %2800
          %v2802 = vmul.f32 %v2801, %v2619
          %v2803 = vsub.f32 %v2798, %v2802
          %v2804 = vmul.f32 %v2803, %v2803
          %v2805 = vsel %vm2609, %v2804, 0.0
          %2806 = vadd.xlane.f32.xlu0 %v2805
          %v2807 = vpop.xlane.xlu0 %2806
          %v2808 = vmul.f32 %v2807, %v2619
          %v2809 = vadd.f32 %v2808, 1e-05
          %v2810 = vrsqrt.pop %v2809
          %v2811 = vmul.f32 %v2810, %v2809
          %v2812 = vmul.f32 %v2811, %v2810
          %v2813 = vmul.f32 0.5, %v2812
          %v2814 = vsub.f32 1.5, %v2813
          %v2815 = vmul.f32 %v2810, %v2814
          %vm2816 = vweird.f32 %v2809
          %vm2817 = vweird.f32 %v2810
          %vm2818 = vmor %vm2816, %vm2817
          %v2819 = vsel %vm2818, %v2810, %v2815
          %v2820 = vmul.f32 %v2803, %v2819
          %v2822 = vperm.slane %v2567, 0
          %v2824 = vmul.f32 %v2820, %v2822
          %v2826 = vperm.slane %v2566, 0
          %v2828 = vadd.f32 %v2824, %v2826
          %v2829 = vpack.c.bf16 %v2828, %v2828
          %v2831 = vperm.slane %v2560, 0
          %v2841 = vunpack.c.l.b16 %v2568
          %v2842 = vunpack.c.l.b16 %v2569
          %v2843 = vunpack.c.l.b16 %v2570
          %v2844 = vunpack.c.l.b16 %v2571
          %v2845 = vunpack.c.l.b16 %v2572
          %v2846 = vunpack.c.l.b16 %v2573
          %v2847 = vunpack.c.l.b16 %v2574
          %v2848 = vunpack.c.l.b16 %v2575
          %v2849 = vpack.c.b16 %v2842, %v2841
          %v2850 = vpack.c.b16 %v2844, %v2843
          %v2851 = vpack.c.b16 %v2846, %v2845
          %v2852 = vpack.c.b16 %v2848, %v2847
          %v2858 = vsel %vm2609, %v2829, 0
          %2860 = vmatpush.bf16.msra.mxu0 0
          %2861 = vmatpush.bf16.msra.mxu0 0
          %2862 = vmatpush.bf16.msra.mxu0 0
          %2863 = vmatpush.bf16.msra.mxu0 0
          %2864 = vmatpush.bf16.msra.mxu0 %v2852
          %2865 = vmatpush.bf16.msra.mxu0 %v2851
          %2866 = vmatpush.bf16.msra.mxu0 %v2850
          %2867 = vmatpush.bf16.msra.mxu0 %v2849
          %2868 = vmatmul.bf16.gmra.mxu0 %v2858
          %v2869 = vpop.f32.mrf.mxu0
          %v2870 = vadd.f32 %v2831, %v2869
          %v2871 = vpop.f32.mrf.mxu0
          %2872 = vdwg.mxu0
          %v2873 = vmul.f32 %v2870, %v2870
          %v2874 = vmul.f32 %v2870, %v2873
          %v2875 = vmul.f32 %v2874, 0.044715
          %v2876 = vadd.f32 %v2870, %v2875
          %v2877 = vmul.f32 %v2876, 0.7978846
          %v2878 = vtanh.pop %v2877
          %v2879 = vadd.f32 %v2878, 1.0
          %v2880 = vmul.f32 %v2879, 0.5
          %v2881 = vmul.f32 %v2870, %v2880
          %v2882 = vpack.c.bf16 %v2881, %v2881
          %v2884 = vperm.slane %v2561, 0
          %v2902 = vunpack.c.l.b16 %v2576
          %v2903 = vunpack.c.l.b16 %v2577
          %v2904 = vunpack.c.l.b16 %v2578
          %v2905 = vunpack.c.l.b16 %v2579
          %v2906 = vunpack.c.l.b16 %v2580
          %v2907 = vunpack.c.l.b16 %v2581
          %v2908 = vunpack.c.l.b16 %v2582
          %v2909 = vunpack.c.l.b16 %v2583
          %v2910 = vunpack.c.l.b16 %v2584
          %v2911 = vunpack.c.l.b16 %v2585
          %v2912 = vunpack.c.l.b16 %v2586
          %v2913 = vunpack.c.l.b16 %v2587
          %v2914 = vunpack.c.l.b16 %v2588
          %v2915 = vunpack.c.l.b16 %v2589
          %v2916 = vunpack.c.l.b16 %v2590
          %v2917 = vunpack.c.l.b16 %v2591
          %v2918 = vpack.c.b16 %v2903, %v2902
          %v2919 = vpack.c.b16 %v2905, %v2904
          %v2920 = vpack.c.b16 %v2907, %v2906
          %v2921 = vpack.c.b16 %v2909, %v2908
          %v2922 = vpack.c.b16 %v2911, %v2910
          %v2923 = vpack.c.b16 %v2913, %v2912
          %v2924 = vpack.c.b16 %v2915, %v2914
          %v2925 = vpack.c.b16 %v2917, %v2916
          %2934 = vmatpush.bf16.msra.mxu0 %v2925
          %2935 = vmatpush.bf16.msra.mxu0 %v2924
          %2936 = vmatpush.bf16.msra.mxu0 %v2923
          %2937 = vmatpush.bf16.msra.mxu0 %v2922
          %2938 = vmatpush.bf16.msra.mxu0 %v2921
          %2939 = vmatpush.bf16.msra.mxu0 %v2920
          %2940 = vmatpush.bf16.msra.mxu0 %v2919
          %2941 = vmatpush.bf16.msra.mxu0 %v2918
          %2942 = vmatmul.bf16.gmra.mxu0 %v2882
          %v2943 = vpop.f32.mrf.mxu0
          %v2944 = vadd.f32 %v2884, %v2943
          %v2945 = vpop.f32.mrf.mxu0
          %2946 = vdwg.mxu0
          %v2947 = vadd.f32 %v2798, %v2944
          %2948 = vst.msk [vmem:[#allocation2] sm:$0xff] %vm2609, %v2947
        $region244: #{net_forward.1} parent=191 // pred_fallthru
          _
        %p2949 = scmp.eq.s32.totalorder %s110, 3
        // Predicated region
        $region245: #{net_forward.1} parent=191 // pred_check
          %p2950 = pneg %p2949
        $region246: #{net_forward.1} parent=191 // pred_check_branch
          %2952 = sbr.rel (%p2950) target = $region248
        $region247: #{net_forward.1} parent=191 // pred_region
          %v2953 = vld [vmem:[%s37] sm:$0x1]
          %v2954 = vld [vmem:[%s39] sm:$0x1]
          %v2955 = vld [vmem:[%s41] sm:$0x1]
          %v2956 = vld [vmem:[%s43] sm:$0x1]
          %v2957 = vld [vmem:[%s45] sm:$0x1]
          %v2958 = vld [vmem:[%s47] sm:$0x1]
          %v2959 = vld [vmem:[%s49] sm:$0x1]
          %v2960 = vld [vmem:[#allocation10] sm:$0xf]
          %v2961 = vld [vmem:[#allocation10 + $0x4] sm:$0xf]
          %v2962 = vld [vmem:[#allocation10 + $0x8] sm:$0xf]
          %v2963 = vld [vmem:[#allocation10 + $0xc] sm:$0xf]
          %v2964 = vld [vmem:[#allocation10 + $0x10] sm:$0xf]
          %v2965 = vld [vmem:[#allocation10 + $0x14] sm:$0xf]
          %v2966 = vld [vmem:[#allocation10 + $0x18] sm:$0xf]
          %v2967 = vld [vmem:[#allocation10 + $0x1c] sm:$0xf]
          %v2968 = vld [vmem:[#allocation11] sm:$0xf]
          %v2969 = vld [vmem:[#allocation11 + $0x4] sm:$0xf]
          %v2970 = vld [vmem:[#allocation11 + $0x8] sm:$0xf]
          %v2971 = vld [vmem:[#allocation11 + $0xc] sm:$0xf]
          %v2972 = vld [vmem:[#allocation13] sm:$0xf]
          %v2973 = vld [vmem:[#allocation13 + $0x4] sm:$0xf]
          %v2974 = vld [vmem:[#allocation13 + $0x8] sm:$0xf]
          %v2975 = vld [vmem:[#allocation13 + $0xc] sm:$0xf]
          %v2976 = vld [vmem:[%s1938] sm:$0xf]
          %v2977 = vunpack.c.l.bf16 %v2976
          %v2978 = vld [vmem:[#allocation2] sm:$0xff]
          %vm2979 = vcmask 261120
          %v2980 = vsel %vm2979, %v2977, 0.0
          %2981 = vadd.xlane.f32.xlu0 %v2980
          %v2982 = vpop.xlane.xlu0 %2981
          %v2983 = vrcp.pop 32.0
          %v2984 = vmul.f32 32.0, %v2983
          %v2985 = vsub.f32 1.0, %v2984
          %v2986 = vmul.f32 %v2983, %v2985
          %v2987 = vadd.f32 %v2983, %v2986
          %vm2988 = vweird.f32 %v2983
          %v2989 = vsel %vm2988, %v2983, %v2987
          %v2990 = vmul.f32 %v2982, %v2989
          %v2991 = vsub.f32 %v2977, %v2990
          %v2992 = vmul.f32 %v2991, %v2991
          %v2993 = vsel %vm2979, %v2992, 0.0
          %2994 = vadd.xlane.f32.xlu0 %v2993
          %v2995 = vpop.xlane.xlu0 %2994
          %v2996 = vmul.f32 %v2995, %v2989
          %v2997 = vadd.f32 %v2996, 1e-05
          %v2998 = vrsqrt.pop %v2997
          %v2999 = vmul.f32 %v2998, %v2997
          %v3000 = vmul.f32 %v2999, %v2998
          %v3001 = vmul.f32 0.5, %v3000
          %v3002 = vsub.f32 1.5, %v3001
          %v3003 = vmul.f32 %v2998, %v3002
          %vm3004 = vweird.f32 %v2997
          %vm3005 = vweird.f32 %v2998
          %vm3006 = vmor %vm3004, %vm3005
          %v3007 = vsel %vm3006, %v2998, %v3003
          %v3008 = vmul.f32 %v2991, %v3007
          %v3010 = vperm.slane %v2959, 0
          %v3012 = vmul.f32 %v3008, %v3010
          %v3014 = vperm.slane %v2958, 0
          %v3016 = vadd.f32 %v3012, %v3014
          %vm3017 = vcmask 523264
          %v3018 = vsel %vm3017, %v2978, 0.0
          %3019 = vadd.xlane.f32.xlu0 %v3018
          %v3020 = vpop.xlane.xlu0 %3019
          %v3021 = vrcp.pop 64.0
          %v3022 = vmul.f32 64.0, %v3021
          %v3023 = vsub.f32 1.0, %v3022
          %v3024 = vmul.f32 %v3021, %v3023
          %v3025 = vadd.f32 %v3021, %v3024
          %vm3026 = vweird.f32 %v3021
          %v3027 = vsel %vm3026, %v3021, %v3025
          %v3028 = vmul.f32 %v3020, %v3027
          %v3029 = vsub.f32 %v2978, %v3028
          %v3030 = vmul.f32 %v3029, %v3029
          %v3031 = vsel %vm3017, %v3030, 0.0
          %3032 = vadd.xlane.f32.xlu0 %v3031
          %v3033 = vpop.xlane.xlu0 %3032
          %v3034 = vmul.f32 %v3033, %v3027
          %v3035 = vadd.f32 %v3034, 1e-05
          %v3036 = vrsqrt.pop %v3035
          %v3037 = vmul.f32 %v3036, %v3035
          %v3038 = vmul.f32 %v3037, %v3036
          %v3039 = vmul.f32 0.5, %v3038
          %v3040 = vsub.f32 1.5, %v3039
          %v3041 = vmul.f32 %v3036, %v3040
          %vm3042 = vweird.f32 %v3035
          %vm3043 = vweird.f32 %v3036
          %vm3044 = vmor %vm3042, %vm3043
          %v3045 = vsel %vm3044, %v3036, %v3041
          %v3046 = vmul.f32 %v3029, %v3045
          %v3048 = vperm.slane %v2957, 0
          %v3050 = vmul.f32 %v3046, %v3048
          %v3052 = vperm.slane %v2956, 0
          %v3054 = vadd.f32 %v3050, %v3052
          %v3055 = vpack.c.bf16 %v3016, %v3016
          %v3057 = vperm.slane %v2955, 0
          %v3063 = vunpack.c.l.b16 %v2972
          %v3064 = vunpack.c.l.b16 %v2973
          %v3065 = vunpack.c.l.b16 %v2974
          %v3066 = vunpack.c.l.b16 %v2975
          %v3067 = vpack.c.b16 %v3064, %v3063
          %v3068 = vpack.c.b16 %v3066, %v3065
          %v3072 = vsel %vm2979, %v3055, 0
          %3074 = vmatpush.bf16.msra.mxu0 0
          %3075 = vmatpush.bf16.msra.mxu0 0
          %3076 = vmatpush.bf16.msra.mxu0 0
          %3077 = vmatpush.bf16.msra.mxu0 0
          %3078 = vmatpush.bf16.msra.mxu0 0
          %3079 = vmatpush.bf16.msra.mxu0 0
          %3080 = vmatpush.bf16.msra.mxu0 %v3068
          %3081 = vmatpush.bf16.msra.mxu0 %v3067
          %3082 = vmatmul.bf16.gmra.mxu0 %v3072
          %v3083 = vpop.f32.mrf.mxu0
          %v3084 = vadd.f32 %v3057, %v3083
          %v3085 = vpop.f32.mrf.mxu0
          %3086 = vdwg.mxu0
          %v3087 = vmul.f32 %v3084, 0.25
          %v3088 = vpack.c.bf16 %v3054, %v3054
          %v3090 = vperm.slane %v2953, 0
          %v3100 = vunpack.c.l.b16 %v2960
          %v3101 = vunpack.c.l.b16 %v2961
          %v3102 = vunpack.c.l.b16 %v2962
          %v3103 = vunpack.c.l.b16 %v2963
          %v3104 = vunpack.c.l.b16 %v2964
          %v3105 = vunpack.c.l.b16 %v2965
          %v3106 = vunpack.c.l.b16 %v2966
          %v3107 = vunpack.c.l.b16 %v2967
          %v3108 = vpack.c.b16 %v3101, %v3100
          %v3109 = vpack.c.b16 %v3103, %v3102
          %v3110 = vpack.c.b16 %v3105, %v3104
          %v3111 = vpack.c.b16 %v3107, %v3106
          %v3117 = vsel %vm3017, %v3088, 0
          %3119 = vmatpush.bf16.msra.mxu0 0
          %3120 = vmatpush.bf16.msra.mxu0 0
          %3121 = vmatpush.bf16.msra.mxu0 0
          %3122 = vmatpush.bf16.msra.mxu0 0
          %3123 = vmatpush.bf16.msra.mxu0 %v3111
          %3124 = vmatpush.bf16.msra.mxu0 %v3110
          %3125 = vmatpush.bf16.msra.mxu0 %v3109
          %3126 = vmatpush.bf16.msra.mxu0 %v3108
          %3127 = vmatmul.bf16.gmra.mxu0 %v3117
          %v3128 = vpop.f32.mrf.mxu0
          %v3129 = vadd.f32 %v3090, %v3128
          %v3130 = vpop.f32.mrf.mxu0
          %3131 = vdwg.mxu0
          %v3132 = vpack.c.bf16 %v3087, %v3087
          %v3133 = vpack.c.bf16 %v3129, %v3129
          %vm3134 = vcmask 130048
          %v3136 = vsel %vm3134, %v3132, 0
          %v3139 = vsel %vm3134, %v3133, 0
          %3141 = vmatpush.bf16.xpose.msra.mxu0 0
          %3142 = vmatpush.bf16.xpose.msra.mxu0 0
          %3143 = vmatpush.bf16.xpose.msra.mxu0 0
          %3144 = vmatpush.bf16.xpose.msra.mxu0 0
          %3145 = vmatpush.bf16.xpose.msra.mxu0 0
          %3146 = vmatpush.bf16.xpose.msra.mxu0 0
          %3147 = vmatpush.bf16.xpose.msra.mxu0 0
          %3148 = vmatpush.bf16.xpose.msra.mxu0 %v3139
          %3149 = vmatmul.bf16.gmra.mxu0 %v3136
          %v3150 = vpop.f32.mrf.mxu0
          %v3151 = vadd.f32 0.0, %v3150
          %v3152 = vpop.f32.mrf.mxu0
          %3153 = vdwg.mxu0
          %vm3154 = vcmask 64512
          %v3155 = vsel %vm3154, %v3151, -inf
          %3156 = vmax.xlane.f32.xlu0 %v3155
          %v3157 = vpop.xlane.xlu0 %3156
          %v3158 = vsub.f32 %v3151, %v3157
          %v3159 = vmul.f32 %v3158, 1.442695
          %v3160 = vpow.pop %v3159
          %v3161 = vsel %vm3154, %v3160, 0.0
          %3162 = vadd.xlane.f32.xlu0 %v3161
          %v3163 = vpop.xlane.xlu0 %3162
          %v3164 = vrcp.pop %v3163
          %v3165 = vmul.f32 %v3160, %v3164
          %v3166 = vpack.c.bf16 %v3165, %v3165
          %v3168 = vunpack.c.l.b16 %v3133
          %v3169 = vpack.c.b16 %v3168, %v3168
          %3170 = vrot.lane.b32.xlu0 %v3169, 112
          %v3171 = vpop.permute.xlu0 %3170
          %v3173 = vsel %vm3154, %v3166, 0
          %vm3175 = vcmask 1043456
          %v3177 = vsel %vm3175, %v3171, 0
          %3179 = vmatpush.bf16.msra.mxu0 0
          %3180 = vmatpush.bf16.msra.mxu0 0
          %3181 = vmatpush.bf16.msra.mxu0 0
          %3182 = vmatpush.bf16.msra.mxu0 0
          %3183 = vmatpush.bf16.msra.mxu0 0
          %3184 = vmatpush.bf16.msra.mxu0 0
          %3185 = vmatpush.bf16.msra.mxu0 0
          %3186 = vmatpush.bf16.msra.mxu0 %v3177
          %3187 = vmatmul.bf16.gmra.mxu0 %v3173
          %v3188 = vpop.f32.mrf.mxu0
          %v3189 = vadd.f32 0.0, %v3188
          %v3190 = vpop.f32.mrf.mxu0
          %3191 = vdwg.mxu0
          %v3192 = vpack.c.bf16 %v3189, %v3189
          %v3194 = vperm.slane %v2954, 0
          %v3200 = vunpack.c.l.b16 %v2968
          %v3201 = vunpack.c.l.b16 %v2969
          %v3202 = vunpack.c.l.b16 %v2970
          %v3203 = vunpack.c.l.b16 %v2971
          %v3204 = vpack.c.b16 %v3201, %v3200
          %v3205 = vpack.c.b16 %v3203, %v3202
          %v3209 = vsel %vm2979, %v3192, 0
          %3211 = vmatpush.bf16.msra.mxu0 0
          %3212 = vmatpush.bf16.msra.mxu0 0
          %3213 = vmatpush.bf16.msra.mxu0 0
          %3214 = vmatpush.bf16.msra.mxu0 0
          %3215 = vmatpush.bf16.msra.mxu0 0
          %3216 = vmatpush.bf16.msra.mxu0 0
          %3217 = vmatpush.bf16.msra.mxu0 %v3205
          %3218 = vmatpush.bf16.msra.mxu0 %v3204
          %3219 = vmatmul.bf16.gmra.mxu0 %v3209
          %v3220 = vpop.f32.mrf.mxu0
          %v3221 = vadd.f32 %v3194, %v3220
          %v3222 = vpop.f32.mrf.mxu0
          %3223 = vdwg.mxu0
          %v3224 = vld [vmem:[%s1675] sm:$0x1]
          %vm3225 = vcmask 57344
          %v3226 = vsel %vm3225, %v3224, 0.0
          %3227 = vadd.xlane.f32.xlu0 %v3226
          %v3228 = vpop.xlane.xlu0 %3227
          %v3229 = vmax.f32 %v3228, 1.0
          %v3230 = vperm.slane %v3224, 0
          %v3231 = vlaneseq
          %v3232 = vshrl.u32 %v3231, 7
          %3234 = vset.pattern.permute.xlu0 %v3232
          %3235 = vperm.xlu0 %3234, %v3230
          %v3236 = vpop.permute.xlu0 %3235
          %v3237 = vmul.f32 %v3221, %v3236
          %v3238 = vsel %vm2979, %v3237, 0.0
          %v3239 = vrot.slane %v3238, 4
          %v3240 = vadd.f32 %v3238, %v3239
          %v3241 = vrot.slane %v3240, 2
          %v3242 = vadd.f32 %v3240, %v3241
          %v3243 = vrot.slane %v3242, 1
          %v3244 = vadd.f32 %v3242, %v3243
          %v3245 = vrcp.pop %v3229
          %v3246 = vmul.f32 %v3229, %v3245
          %v3247 = vsub.f32 1.0, %v3246
          %v3248 = vmul.f32 %v3245, %v3247
          %v3249 = vadd.f32 %v3245, %v3248
          %vm3250 = vweird.f32 %v3229
          %vm3251 = vweird.f32 %v3245
          %vm3252 = vmor %vm3250, %vm3251
          %v3253 = vsel %vm3252, %v3245, %v3249
          %v3254 = vand.u32 2147483647, %v3229
          %vm3255 = vcmp.eq.f32.partialorder %v3254, 8.507059e+37
          %v3256 = vand.u32 %v3229, 2147483648
          %v3257 = vor.u32 1.1754944e-38, %v3256
          %v3258 = vsel %vm3255, %v3257, %v3253
          %v3259 = vmul.f32 %v3244, %v3258
          %v3260 = vpack.c.bf16 %v3259, %v3259
          %v3261 = vld [vmem:[#allocation14] sm:$0xf]
          %v3262 = vld [vmem:[#allocation14 + $0x4] sm:$0xf]
          %v3263 = vld [vmem:[#allocation14 + $0x8] sm:$0xf]
          %v3264 = vld [vmem:[#allocation14 + $0xc] sm:$0xf]
          %v3265 = vld [vmem:[%s57] sm:$0x1]
          %v3270 = vunpack.c.l.b16 %v3261
          %v3271 = vunpack.c.l.b16 %v3262
          %v3272 = vunpack.c.l.b16 %v3263
          %v3273 = vunpack.c.l.b16 %v3264
          %v3274 = vpack.c.b16 %v3271, %v3270
          %v3275 = vpack.c.b16 %v3273, %v3272
          %v3279 = vsel %vm2979, %v3260, 0
          %3281 = vmatpush.bf16.msra.mxu0 0
          %3282 = vmatpush.bf16.msra.mxu0 0
          %3283 = vmatpush.bf16.msra.mxu0 0
          %3284 = vmatpush.bf16.msra.mxu0 0
          %3285 = vmatpush.bf16.msra.mxu0 0
          %3286 = vmatpush.bf16.msra.mxu0 0
          %3287 = vmatpush.bf16.msra.mxu0 %v3275
          %3288 = vmatpush.bf16.msra.mxu0 %v3274
          %3289 = vmatmul.bf16.gmra.mxu0 %v3279
          %v3290 = vpop.f32.mrf.mxu0
          %v3291 = vadd.f32 %v3265, %v3290
          %v3292 = vpop.f32.mrf.mxu0
          %3293 = vdwg.mxu0
          %v3294 = vperm.slane %v3291, 0
          %3295 = vst [vmem:[%s2076] sm:$0xff] %v3294
        $region248: #{net_forward.1} parent=191 // pred_fallthru
          _
        %p3296 = scmp.lt.s32.totalorder %s109, 1
        %s3297 = scalar_select %p3296, %s109, 1
        %s3298 = smul.addr %s3297, 8
        %s3299 = scalar_lea.vmem %s87, %s3298
        // Predicated region
        $region249: #{net_forward.1} parent=191 // pred_check
          %p3300 = pneg %p1228
        $region250: #{net_forward.1} parent=191 // pred_check_branch
          %3302 = sbr.rel (%p3300) target = $region252
        $region251: #{net_forward.1} parent=191 // pred_region
          _
        $region252: #{net_forward.1} parent=191 // pred_fallthru
          _
      $region192: #{net_forward.1} parent=5 // pred_fallthru
        _
      %p3303 = scmp.le.s32.totalorder 2, %s100
      // Predicated region
      $region253: #{net_forward.1} parent=5 // pred_check
        %p3304 = pneg %p3303
      $region254: #{net_forward.1} parent=5 // pred_check_branch
        %3306 = sbr.rel (%p3304) target = $region256
      $region255: #{net_forward.1} parent=5 // pred_region
        %s3307 = ssub.s32 %s100, 2
        // Predicated region
        $region257: #{net_forward.1} parent=255 // pred_check
          %p3308 = pneg %p1234
        $region258: #{net_forward.1} parent=255 // pred_check_branch
          %3310 = sbr.rel (%p3308) target = $region260
        $region259: #{net_forward.1} parent=255 // pred_region
          %p3311 = scmp.lt.s32.totalorder %s111, 1
          %s3312 = scalar_select %p3311, %s111, 1
          %s3313 = smul.addr %s3312, 8
          %s3314 = scalar_lea.vmem %s87, %s3313
        $region260: #{net_forward.1} parent=255 // pred_fallthru
          _
      $region256: #{net_forward.1} parent=5 // pred_fallthru
        _
    $region6: #{net_forward.1} parent=1 // loop_footer
      %s104 = sadd.s32 1, %s100
    $region7: #{net_forward.1} parent=1 // loop_footer_branch
      %99 = sbr.rel target = $region3
    $region8: #{net_forward.1} parent=1 // loop_exit
      _
    %3315 = vsyncpa [#allocation4], 1
    %s3316 = scalar_lea.sflag [#allocation4], 1
    %3317 = vsyncpa %s3316, 1
    %3318 = vsyncpa [#allocation6], 1
    %3319 = vsyncpa [#allocation9], 1
    %3320 = vsyncpa [#allocation12], 1
    %3321 = vsyncpa [#allocation15], 1

</llo_original>
